<compile_context>
chip_gen: v6e
topology: v6e:2x2x1
jax: 0.10.0
libtpu: 0.0.40
codegen_flags: <defaults>
</compile_context>

<pallas_src>
import math
import jax
import jax.numpy as jnp
from jax.experimental import pallas as pl
from jax.experimental.pallas import tpu as pltpu

HIDDEN = 256                           # hidden_size (PyTorch default)
NUM_FREQS_XYZ = 8
NUM_FREQS_DIR = 6
DIM_XYZ = 3 + 2 * 3 * NUM_FREQS_XYZ    # 51
DIM_DIR = 3 + 2 * 3 * NUM_FREQS_DIR    # 39
PACK_W = 128                           # packed input lane width
DIR_OFF = 64                           # dir encoding starts at this packed column


# ---------------------------------------------------------------------------
# Pallas kernel: the full NeRF MLP for one tile of TM points.
#   packed = [xyz_enc | 0 | dir_enc | 0]  (TM, 128) bf16
#   layer1 uses w1 zero-padded to 128 rows; layer4's dir contribution uses
#   w4b zero-padded to 128 rows (only rows 64:103 nonzero), so the single
#   packed input feeds both without contamination.
# ---------------------------------------------------------------------------
def nerf_mlp_kernel(packed_ref,
                    w1, b1, w2, b2, w3, b3, wa_row, ba,
                    w4a, w4b, b4, w5, b5, wr, br,
                    out_ref):
    relu = lambda v: jnp.maximum(v, 0.0)
    f32 = jnp.float32
    bf16 = jnp.bfloat16

    packed = packed_ref[...]                                       # (TM, 128) bf16

    x32 = relu(jnp.dot(packed, w1[...], preferred_element_type=f32) + b1[...])
    x32 = relu(jnp.dot(x32.astype(bf16), w2[...], preferred_element_type=f32) + b2[...])
    x = x32.astype(bf16)

    feat = (jnp.dot(x, w3[...], preferred_element_type=f32) + b3[...]).astype(bf16)

    # alpha head (256 -> 1) off the MXU: VPU broadcast-multiply + lane reduction.
    alpha = relu(jnp.sum(x32 * wa_row[...], axis=-1, keepdims=True) + ba[...])

    y32 = relu(jnp.dot(feat, w4a[...], preferred_element_type=f32)
               + jnp.dot(packed, w4b[...], preferred_element_type=f32)
               + b4[...])
    y = relu(jnp.dot(y32.astype(bf16), w5[...], preferred_element_type=f32)
             + b5[...]).astype(bf16)

    rgb = jax.nn.sigmoid(jnp.dot(y, wr[...], preferred_element_type=f32) + br[...])

    out_ref[...] = jnp.concatenate([rgb, alpha], axis=-1).astype(out_ref.dtype)


# ---------------------------------------------------------------------------
# Plain-JAX glue
# ---------------------------------------------------------------------------
def positional_encoding(t, num_freqs):
    """Matches ReplicateNeRFModel.positional_encoding (x, then sin/cos per freq)."""
    parts = [t]
    for i in range(num_freqs):
        freq = jnp.asarray(2.0 ** i, dtype=t.dtype)
        parts.append(jnp.sin(t * freq))
        parts.append(jnp.cos(t * freq))
    return jnp.concatenate(parts, axis=-1)


def init_linear(key, fan_in, fan_out, dtype=jnp.float32):
    """PyTorch nn.Linear default init: U(-1/sqrt(fan_in), 1/sqrt(fan_in)). Stored (in, out)."""
    k = 1.0 / math.sqrt(fan_in)
    kw, kb = jax.random.split(key)
    w = jax.random.uniform(kw, (fan_in, fan_out), dtype, minval=-k, maxval=k)
    b = jax.random.uniform(kb, (1, fan_out), dtype, minval=-k, maxval=k)
    return w, b


def init_params(key):
    keys = jax.random.split(key, 7)
    p = {}
    p['w1'], p['b1'] = init_linear(keys[0], DIM_XYZ, HIDDEN)
    p['w2'], p['b2'] = init_linear(keys[1], HIDDEN, HIDDEN)
    p['w3'], p['b3'] = init_linear(keys[2], HIDDEN, HIDDEN)
    p['wa'], p['ba'] = init_linear(keys[3], HIDDEN, 1)
    w4, p['b4'] = init_linear(keys[4], HIDDEN + DIM_DIR, HIDDEN // 2)
    p['w4a'], p['w4b'] = w4[:HIDDEN], w4[HIDDEN:]          # split of cat(feat, dir) input
    p['w5'], p['b5'] = init_linear(keys[5], HIDDEN // 2, HIDDEN // 2)
    p['wr'], p['br'] = init_linear(keys[6], HIDDEN // 2, 3)
    return p


def nerf_forward(position, viewdir, params, tm=512):
    """tm is a tunable point tile: 256-512 on v5e, 512-2048 on v6e/v7x (keep grid >= 2)."""
    position = position.reshape(-1, 3)
    viewdir = viewdir.reshape(-1, 3)
    n = position.shape[0]

    xyz = positional_encoding(position, NUM_FREQS_XYZ)    # (N, 51) f32
    dirs = positional_encoding(viewdir, NUM_FREQS_DIR)    # (N, 39) f32

    # Pack both encodings into one zero-padded, lane-dense bf16 array.
    n_pad = pl.cdiv(n, tm) * tm
    packed = jnp.zeros((n_pad, PACK_W), jnp.bfloat16)
    packed = packed.at[:n, :DIM_XYZ].set(xyz.astype(jnp.bfloat16))
    packed = packed.at[:n, DIR_OFF:DIR_OFF + DIM_DIR].set(dirs.astype(jnp.bfloat16))

    # Zero-padded / bf16 weight views (padded rows are exact zeros -> no contribution).
    w1p = (jnp.zeros((PACK_W, HIDDEN), jnp.float32)
           .at[:DIM_XYZ].set(params['w1'])).astype(jnp.bfloat16)
    w4bp = (jnp.zeros((PACK_W, HIDDEN // 2), jnp.float32)
            .at[DIR_OFF:DIR_OFF + DIM_DIR].set(params['w4b'])).astype(jnp.bfloat16)
    bf = lambda name: params[name].astype(jnp.bfloat16)

    weight_args = [
        w1p, params['b1'],
        bf('w2'), params['b2'],
        bf('w3'), params['b3'],
        params['wa'].T, params['ba'],          # wa as a (1, 256) f32 row for the VPU head
        bf('w4a'), w4bp, params['b4'],
        bf('w5'), params['b5'],
        bf('wr'), params['br'],
    ]

    grid = (n_pad // tm,)
    in_specs = [pl.BlockSpec((tm, PACK_W), lambda i: (i, 0))]
    for w in weight_args:
        # Constant index_map -> weights stay resident in VMEM across grid steps.
        in_specs.append(pl.BlockSpec(w.shape, lambda i: (0, 0)))

    out_shape = jax.ShapeDtypeStruct((n_pad, 4), jnp.float32)   # [rgb | alpha]
    out_specs = pl.BlockSpec((tm, 4), lambda i: (i, 0))

    cp = dict(dimension_semantics=("parallel",))
    if tm >= 1024:
        # Stay comfortably within v7x's 64 MiB/TC while allowing big tiles elsewhere.
        cp["vmem_limit_bytes"] = 48 * 1024 * 1024

    out = pl.pallas_call(
        nerf_mlp_kernel,
        out_shape=out_shape,
        grid_spec=pltpu.PrefetchScalarGridSpec(
            num_scalar_prefetch=0,
            grid=grid,
            in_specs=in_specs,
            out_specs=out_specs,
        ),
        compiler_params=pltpu.CompilerParams(**cp),
    )(packed, *weight_args)

    rgb = out[:n, 0:3].astype(position.dtype)
    alpha = out[:n, 3:4].astype(position.dtype)
    # Matches: (rgb.reshape(position.shape), alpha.reshape(position.shape[:-1]).unsqueeze(-1))
    return rgb.reshape(position.shape), alpha.reshape(position.shape[:-1] + (1,))


def nerf_forward_ref(position, viewdir, p):
    """Pure-JAX f32 reference (mirrors the PyTorch forward) for correctness checking."""
    relu = lambda v: jnp.maximum(v, 0.0)
    xyz = positional_encoding(position.reshape(-1, 3), NUM_FREQS_XYZ)
    d = positional_encoding(viewdir.reshape(-1, 3), NUM_FREQS_DIR)
    x = relu(xyz @ p['w1'] + p['b1'])
    x = relu(x @ p['w2'] + p['b2'])
    feat = x @ p['w3'] + p['b3']
    alpha = relu(x @ p['wa'] + p['ba'])
    w4 = jnp.concatenate([p['w4a'], p['w4b']], axis=0)
    y = relu(jnp.concatenate([feat, d], axis=-1) @ w4 + p['b4'])
    y = relu(y @ p['w5'] + p['b5'])
    rgb = jax.nn.sigmoid(y @ p['wr'] + p['br'])
    return rgb, alpha


if __name__ == "__main__":
    key = jax.random.PRNGKey(0)
    k_param, k_pos, k_dir = jax.random.split(key, 3)

    params = init_params(k_param)

    N = 1024   # 2 tiles of 512 (keeps the parallel grid axis >= 2 for v7x's 2 TCs)
    position = jax.random.normal(k_pos, (N, 3), dtype=jnp.float32)
    viewdir = jax.random.normal(k_dir, (N, 3), dtype=jnp.float32)
    viewdir = viewdir / jnp.linalg.norm(viewdir, axis=-1, keepdims=True)

    rgb, alpha = nerf_forward(position, viewdir, params, tm=512)
    jax.block_until_ready((rgb, alpha))

    rgb_ref, alpha_ref = nerf_forward_ref(position, viewdir, params)
    assert rgb.shape == (N, 3) and alpha.shape == (N, 1)
    # bf16 matmul path -> relaxed tolerance vs. the f32 reference.
    assert jnp.allclose(rgb, rgb_ref, rtol=3e-2, atol=3e-2), \
        float(jnp.max(jnp.abs(rgb - rgb_ref)))
    assert jnp.allclose(alpha, alpha_ref, rtol=3e-2, atol=3e-2), \
        float(jnp.max(jnp.abs(alpha - alpha_ref)))

    print("KERNEL_OK")
</pallas_src>

<mosaic_0001>
module attributes {stable_mosaic.version = 11 : i64} {
  func.func @nerf_mlp_kernel(%arg0: i32, %arg1: memref<512x128xbf16, #tpu.memory_space<vmem>>, %arg2: memref<128x256xbf16, #tpu.memory_space<vmem>>, %arg3: memref<1x256xf32, #tpu.memory_space<vmem>>, %arg4: memref<256x256xbf16, #tpu.memory_space<vmem>>, %arg5: memref<1x256xf32, #tpu.memory_space<vmem>>, %arg6: memref<256x256xbf16, #tpu.memory_space<vmem>>, %arg7: memref<1x256xf32, #tpu.memory_space<vmem>>, %arg8: memref<1x256xf32, #tpu.memory_space<vmem>>, %arg9: memref<1x1xf32, #tpu.memory_space<vmem>>, %arg10: memref<256x128xbf16, #tpu.memory_space<vmem>>, %arg11: memref<128x128xbf16, #tpu.memory_space<vmem>>, %arg12: memref<1x128xf32, #tpu.memory_space<vmem>>, %arg13: memref<128x128xbf16, #tpu.memory_space<vmem>>, %arg14: memref<1x128xf32, #tpu.memory_space<vmem>>, %arg15: memref<128x3xbf16, #tpu.memory_space<vmem>>, %arg16: memref<1x3xf32, #tpu.memory_space<vmem>>, %arg17: memref<512x4xf32, #tpu.memory_space<vmem>>) attributes {dimension_semantics = [#tpu.dimension_semantics<parallel>], iteration_bounds = array<i64: 2>, scalar_prefetch = 0 : i64, scratch_operands = 0 : i64, tpu.core_type = #tpu.core_type<tc>, window_params = [{transform_indices = @transform_0, window_bounds = array<i64: 512, 128>}, {pipeline_mode = #tpu.pipeline_mode<synchronous>, transform_indices = @transform_1, window_bounds = array<i64: 128, 256>}, {pipeline_mode = #tpu.pipeline_mode<synchronous>, transform_indices = @transform_2, window_bounds = array<i64: 1, 256>}, {pipeline_mode = #tpu.pipeline_mode<synchronous>, transform_indices = @transform_3, window_bounds = array<i64: 256, 256>}, {pipeline_mode = #tpu.pipeline_mode<synchronous>, transform_indices = @transform_4, window_bounds = array<i64: 1, 256>}, {pipeline_mode = #tpu.pipeline_mode<synchronous>, transform_indices = @transform_5, window_bounds = array<i64: 256, 256>}, {pipeline_mode = #tpu.pipeline_mode<synchronous>, transform_indices = @transform_6, window_bounds = array<i64: 1, 256>}, {pipeline_mode = #tpu.pipeline_mode<synchronous>, transform_indices = @transform_7, window_bounds = array<i64: 1, 256>}, {pipeline_mode = #tpu.pipeline_mode<synchronous>, transform_indices = @transform_8, window_bounds = array<i64: 1, 1>}, {pipeline_mode = #tpu.pipeline_mode<synchronous>, transform_indices = @transform_9, window_bounds = array<i64: 256, 128>}, {pipeline_mode = #tpu.pipeline_mode<synchronous>, transform_indices = @transform_10, window_bounds = array<i64: 128, 128>}, {pipeline_mode = #tpu.pipeline_mode<synchronous>, transform_indices = @transform_11, window_bounds = array<i64: 1, 128>}, {pipeline_mode = #tpu.pipeline_mode<synchronous>, transform_indices = @transform_12, window_bounds = array<i64: 128, 128>}, {pipeline_mode = #tpu.pipeline_mode<synchronous>, transform_indices = @transform_13, window_bounds = array<i64: 1, 128>}, {pipeline_mode = #tpu.pipeline_mode<synchronous>, transform_indices = @transform_14, window_bounds = array<i64: 128, 3>}, {pipeline_mode = #tpu.pipeline_mode<synchronous>, transform_indices = @transform_15, window_bounds = array<i64: 1, 3>}, {transform_indices = @transform_16, window_bounds = array<i64: 512, 4>}]} {
    %c0 = arith.constant 0 : index
    %c0_0 = arith.constant 0 : index
    %0 = vector.load %arg1[%c0, %c0_0] : memref<512x128xbf16, #tpu.memory_space<vmem>>, vector<512x128xbf16>
    %c0_1 = arith.constant 0 : index
    %c0_2 = arith.constant 0 : index
    %1 = vector.load %arg2[%c0_1, %c0_2] : memref<128x256xbf16, #tpu.memory_space<vmem>>, vector<128x256xbf16>
    %cst = arith.constant dense<0.000000e+00> : vector<512x256xf32>
    %2 = tpu.matmul %0, %1, %cst {dimension_numbers = #tpu.dot_dimension_numbers<[1], [0], [0], [1], [0, 0, 1, 1], [], []>} : vector<512x128xbf16>, vector<128x256xbf16>, vector<512x256xf32> -> vector<512x256xf32>
    %c0_3 = arith.constant 0 : index
    %c0_4 = arith.constant 0 : index
    %3 = vector.load %arg3[%c0_3, %c0_4] : memref<1x256xf32, #tpu.memory_space<vmem>>, vector<1x256xf32>
    %4 = vector.broadcast %3 : vector<1x256xf32> to vector<512x256xf32>
    %5 = arith.addf %2, %4 : vector<512x256xf32>
    %cst_5 = arith.constant 0.000000e+00 : f32
    %6 = vector.broadcast %cst_5 : f32 to vector<512x256xf32>
    %7 = arith.maximumf %5, %6 : vector<512x256xf32>
    %8 = arith.truncf %7 : vector<512x256xf32> to vector<512x256xbf16>
    %c0_6 = arith.constant 0 : index
    %c0_7 = arith.constant 0 : index
    %9 = vector.load %arg4[%c0_6, %c0_7] : memref<256x256xbf16, #tpu.memory_space<vmem>>, vector<256x256xbf16>
    %cst_8 = arith.constant dense<0.000000e+00> : vector<512x256xf32>
    %10 = tpu.matmul %8, %9, %cst_8 {dimension_numbers = #tpu.dot_dimension_numbers<[1], [0], [0], [1], [0, 0, 1, 1], [], []>} : vector<512x256xbf16>, vector<256x256xbf16>, vector<512x256xf32> -> vector<512x256xf32>
    %c0_9 = arith.constant 0 : index
    %c0_10 = arith.constant 0 : index
    %11 = vector.load %arg5[%c0_9, %c0_10] : memref<1x256xf32, #tpu.memory_space<vmem>>, vector<1x256xf32>
    %12 = vector.broadcast %11 : vector<1x256xf32> to vector<512x256xf32>
    %13 = arith.addf %10, %12 : vector<512x256xf32>
    %cst_11 = arith.constant 0.000000e+00 : f32
    %14 = vector.broadcast %cst_11 : f32 to vector<512x256xf32>
    %15 = arith.maximumf %13, %14 : vector<512x256xf32>
    %16 = arith.truncf %15 : vector<512x256xf32> to vector<512x256xbf16>
    %c0_12 = arith.constant 0 : index
    %c0_13 = arith.constant 0 : index
    %17 = vector.load %arg6[%c0_12, %c0_13] : memref<256x256xbf16, #tpu.memory_space<vmem>>, vector<256x256xbf16>
    %cst_14 = arith.constant dense<0.000000e+00> : vector<512x256xf32>
    %18 = tpu.matmul %16, %17, %cst_14 {dimension_numbers = #tpu.dot_dimension_numbers<[1], [0], [0], [1], [0, 0, 1, 1], [], []>} : vector<512x256xbf16>, vector<256x256xbf16>, vector<512x256xf32> -> vector<512x256xf32>
    %c0_15 = arith.constant 0 : index
    %c0_16 = arith.constant 0 : index
    %19 = vector.load %arg7[%c0_15, %c0_16] : memref<1x256xf32, #tpu.memory_space<vmem>>, vector<1x256xf32>
    %20 = vector.broadcast %19 : vector<1x256xf32> to vector<512x256xf32>
    %21 = arith.addf %18, %20 : vector<512x256xf32>
    %22 = arith.truncf %21 : vector<512x256xf32> to vector<512x256xbf16>
    %c0_17 = arith.constant 0 : index
    %c0_18 = arith.constant 0 : index
    %23 = vector.load %arg8[%c0_17, %c0_18] : memref<1x256xf32, #tpu.memory_space<vmem>>, vector<1x256xf32>
    %24 = vector.broadcast %23 : vector<1x256xf32> to vector<512x256xf32>
    %25 = arith.mulf %15, %24 : vector<512x256xf32>
    %cst_19 = arith.constant dense<0.000000e+00> : vector<512xf32>
    %26 = vector.multi_reduction <add>, %25, %cst_19 [1] : vector<512x256xf32> to vector<512xf32>
    %27 = vector.shape_cast %26 : vector<512xf32> to vector<512x1xf32>
    %c0_20 = arith.constant 0 : index
    %c0_21 = arith.constant 0 : index
    %28 = vector.load %arg9[%c0_20, %c0_21] : memref<1x1xf32, #tpu.memory_space<vmem>>, vector<1x1xf32>
    %29 = vector.broadcast %28 : vector<1x1xf32> to vector<512x1xf32>
    %30 = arith.addf %27, %29 : vector<512x1xf32>
    %cst_22 = arith.constant 0.000000e+00 : f32
    %31 = vector.broadcast %cst_22 : f32 to vector<512x1xf32>
    %32 = arith.maximumf %30, %31 : vector<512x1xf32>
    %c0_23 = arith.constant 0 : index
    %c0_24 = arith.constant 0 : index
    %33 = vector.load %arg10[%c0_23, %c0_24] : memref<256x128xbf16, #tpu.memory_space<vmem>>, vector<256x128xbf16>
    %cst_25 = arith.constant dense<0.000000e+00> : vector<512x128xf32>
    %34 = tpu.matmul %22, %33, %cst_25 {dimension_numbers = #tpu.dot_dimension_numbers<[1], [0], [0], [1], [0, 0, 1, 1], [], []>} : vector<512x256xbf16>, vector<256x128xbf16>, vector<512x128xf32> -> vector<512x128xf32>
    %c0_26 = arith.constant 0 : index
    %c0_27 = arith.constant 0 : index
    %35 = vector.load %arg11[%c0_26, %c0_27] : memref<128x128xbf16, #tpu.memory_space<vmem>>, vector<128x128xbf16>
    %cst_28 = arith.constant dense<0.000000e+00> : vector<512x128xf32>
    %36 = tpu.matmul %0, %35, %cst_28 {dimension_numbers = #tpu.dot_dimension_numbers<[1], [0], [0], [1], [0, 0, 1, 1], [], []>} : vector<512x128xbf16>, vector<128x128xbf16>, vector<512x128xf32> -> vector<512x128xf32>
    %37 = arith.addf %34, %36 : vector<512x128xf32>
    %c0_29 = arith.constant 0 : index
    %c0_30 = arith.constant 0 : index
    %38 = vector.load %arg12[%c0_29, %c0_30] : memref<1x128xf32, #tpu.memory_space<vmem>>, vector<1x128xf32>
    %39 = vector.broadcast %38 : vector<1x128xf32> to vector<512x128xf32>
    %40 = arith.addf %37, %39 : vector<512x128xf32>
    %cst_31 = arith.constant 0.000000e+00 : f32
    %41 = vector.broadcast %cst_31 : f32 to vector<512x128xf32>
    %42 = arith.maximumf %40, %41 : vector<512x128xf32>
    %43 = arith.truncf %42 : vector<512x128xf32> to vector<512x128xbf16>
    %c0_32 = arith.constant 0 : index
    %c0_33 = arith.constant 0 : index
    %44 = vector.load %arg13[%c0_32, %c0_33] : memref<128x128xbf16, #tpu.memory_space<vmem>>, vector<128x128xbf16>
    %cst_34 = arith.constant dense<0.000000e+00> : vector<512x128xf32>
    %45 = tpu.matmul %43, %44, %cst_34 {dimension_numbers = #tpu.dot_dimension_numbers<[1], [0], [0], [1], [0, 0, 1, 1], [], []>} : vector<512x128xbf16>, vector<128x128xbf16>, vector<512x128xf32> -> vector<512x128xf32>
    %c0_35 = arith.constant 0 : index
    %c0_36 = arith.constant 0 : index
    %46 = vector.load %arg14[%c0_35, %c0_36] : memref<1x128xf32, #tpu.memory_space<vmem>>, vector<1x128xf32>
    %47 = vector.broadcast %46 : vector<1x128xf32> to vector<512x128xf32>
    %48 = arith.addf %45, %47 : vector<512x128xf32>
    %cst_37 = arith.constant 0.000000e+00 : f32
    %49 = vector.broadcast %cst_37 : f32 to vector<512x128xf32>
    %50 = arith.maximumf %48, %49 : vector<512x128xf32>
    %51 = arith.truncf %50 : vector<512x128xf32> to vector<512x128xbf16>
    %c0_38 = arith.constant 0 : index
    %c0_39 = arith.constant 0 : index
    %52 = vector.load %arg15[%c0_38, %c0_39] : memref<128x3xbf16, #tpu.memory_space<vmem>>, vector<128x3xbf16>
    %cst_40 = arith.constant dense<0.000000e+00> : vector<512x3xf32>
    %53 = tpu.matmul %51, %52, %cst_40 {dimension_numbers = #tpu.dot_dimension_numbers<[1], [0], [0], [1], [0, 0, 1, 1], [], []>} : vector<512x128xbf16>, vector<128x3xbf16>, vector<512x3xf32> -> vector<512x3xf32>
    %c0_41 = arith.constant 0 : index
    %c0_42 = arith.constant 0 : index
    %54 = vector.load %arg16[%c0_41, %c0_42] : memref<1x3xf32, #tpu.memory_space<vmem>>, vector<1x3xf32>
    %55 = vector.broadcast %54 : vector<1x3xf32> to vector<512x3xf32>
    %56 = arith.addf %53, %55 : vector<512x3xf32>
    %57 = arith.negf %56 : vector<512x3xf32>
    %58 = math.exp %57 : vector<512x3xf32>
    %cst_43 = arith.constant 1.000000e+00 : f32
    %59 = vector.broadcast %cst_43 : f32 to vector<512x3xf32>
    %60 = arith.addf %59, %58 : vector<512x3xf32>
    %61 = arith.divf %59, %60 : vector<512x3xf32>
    %62 = tpu.concatenate %61, %32 in 1 : vector<512x3xf32>, vector<512x1xf32> -> vector<512x4xf32>
    %c0_44 = arith.constant 0 : index
    %c0_45 = arith.constant 0 : index
    %63 = vector.load %arg17[%c0_44, %c0_45] : memref<512x4xf32, #tpu.memory_space<vmem>>, vector<512x4xf32>
    tpu.vector_store %arg17[%c0_44, %c0_45], %62 {strides = array<i32>} : memref<512x4xf32, #tpu.memory_space<vmem>>, vector<512x4xf32>,
    return
  }
  func.func @transform_0(%arg0: i32) -> (i32, i32) {
    %c0_i32 = arith.constant 0 : i32
    %c0_i32_0 = arith.constant 0 : i32
    return %arg0, %c0_i32 : i32, i32
  }
  func.func @transform_1(%arg0: i32) -> (i32, i32) {
    %c0_i32 = arith.constant 0 : i32
    %c0_i32_0 = arith.constant 0 : i32
    %c0_i32_1 = arith.constant 0 : i32
    return %c0_i32, %c0_i32_0 : i32, i32
  }
  func.func @transform_2(%arg0: i32) -> (i32, i32) {
    %c0_i32 = arith.constant 0 : i32
    %c0_i32_0 = arith.constant 0 : i32
    %c0_i32_1 = arith.constant 0 : i32
    return %c0_i32, %c0_i32_0 : i32, i32
  }
  func.func @transform_3(%arg0: i32) -> (i32, i32) {
    %c0_i32 = arith.constant 0 : i32
    %c0_i32_0 = arith.constant 0 : i32
    %c0_i32_1 = arith.constant 0 : i32
    return %c0_i32, %c0_i32_0 : i32, i32
  }
  func.func @transform_4(%arg0: i32) -> (i32, i32) {
    %c0_i32 = arith.constant 0 : i32
    %c0_i32_0 = arith.constant 0 : i32
    %c0_i32_1 = arith.constant 0 : i32
    return %c0_i32, %c0_i32_0 : i32, i32
  }
  func.func @transform_5(%arg0: i32) -> (i32, i32) {
    %c0_i32 = arith.constant 0 : i32
    %c0_i32_0 = arith.constant 0 : i32
    %c0_i32_1 = arith.constant 0 : i32
    return %c0_i32, %c0_i32_0 : i32, i32
  }
  func.func @transform_6(%arg0: i32) -> (i32, i32) {
    %c0_i32 = arith.constant 0 : i32
    %c0_i32_0 = arith.constant 0 : i32
    %c0_i32_1 = arith.constant 0 : i32
    return %c0_i32, %c0_i32_0 : i32, i32
  }
  func.func @transform_7(%arg0: i32) -> (i32, i32) {
    %c0_i32 = arith.constant 0 : i32
    %c0_i32_0 = arith.constant 0 : i32
    %c0_i32_1 = arith.constant 0 : i32
    return %c0_i32, %c0_i32_0 : i32, i32
  }
  func.func @transform_8(%arg0: i32) -> (i32, i32) {
    %c0_i32 = arith.constant 0 : i32
    %c0_i32_0 = arith.constant 0 : i32
    %c0_i32_1 = arith.constant 0 : i32
    return %c0_i32, %c0_i32_0 : i32, i32
  }
  func.func @transform_9(%arg0: i32) -> (i32, i32) {
    %c0_i32 = arith.constant 0 : i32
    %c0_i32_0 = arith.constant 0 : i32
    %c0_i32_1 = arith.constant 0 : i32
    return %c0_i32, %c0_i32_0 : i32, i32
  }
  func.func @transform_10(%arg0: i32) -> (i32, i32) {
    %c0_i32 = arith.constant 0 : i32
    %c0_i32_0 = arith.constant 0 : i32
    %c0_i32_1 = arith.constant 0 : i32
    return %c0_i32, %c0_i32_0 : i32, i32
  }
  func.func @transform_11(%arg0: i32) -> (i32, i32) {
    %c0_i32 = arith.constant 0 : i32
    %c0_i32_0 = arith.constant 0 : i32
    %c0_i32_1 = arith.constant 0 : i32
    return %c0_i32, %c0_i32_0 : i32, i32
  }
  func.func @transform_12(%arg0: i32) -> (i32, i32) {
    %c0_i32 = arith.constant 0 : i32
    %c0_i32_0 = arith.constant 0 : i32
    %c0_i32_1 = arith.constant 0 : i32
    return %c0_i32, %c0_i32_0 : i32, i32
  }
  func.func @transform_13(%arg0: i32) -> (i32, i32) {
    %c0_i32 = arith.constant 0 : i32
    %c0_i32_0 = arith.constant 0 : i32
    %c0_i32_1 = arith.constant 0 : i32
    return %c0_i32, %c0_i32_0 : i32, i32
  }
  func.func @transform_14(%arg0: i32) -> (i32, i32) {
    %c0_i32 = arith.constant 0 : i32
    %c0_i32_0 = arith.constant 0 : i32
    %c0_i32_1 = arith.constant 0 : i32
    return %c0_i32, %c0_i32_0 : i32, i32
  }
  func.func @transform_15(%arg0: i32) -> (i32, i32) {
    %c0_i32 = arith.constant 0 : i32
    %c0_i32_0 = arith.constant 0 : i32
    %c0_i32_1 = arith.constant 0 : i32
    return %c0_i32, %c0_i32_0 : i32, i32
  }
  func.func @transform_16(%arg0: i32) -> (i32, i32) {
    %c0_i32 = arith.constant 0 : i32
    %c0_i32_0 = arith.constant 0 : i32
    return %arg0, %c0_i32 : i32, i32
  }
}

</mosaic_0001>

<llo_original>
// kernel: tpu_custom_call.1
$region0: #{tpu_custom_call.1}
  #allocation0 [shape = 'u32[]', space=smem, size = 0x4, offset = 0x4, fixed_abs, tag = 'smem constant byte address 0x4 - core index']
  #allocation1 [shape = 'u32[144,128]{1,0:T(1,128)}', space=vmem, size = 0x12000, scoped, tag = 'internal scratch']
  #allocation2 [shape = 'f32[1,1]{1,0:T(1,128)S(1)}', space=vmem, size = 0x200, scoped, tag = 'scoped memory for tpu_custom_call.1']
  %s0 = inlined_call_operand.hbm [shape: bf16[1024,128], index: 0, kind: input, shape index: {}]
  %s1 = inlined_call_operand.hbm [shape: bf16[128,256], index: 1, kind: input, shape index: {}]
  %s2 = inlined_call_operand.vmem [shape: f32[1,256], index: 2, kind: input, shape index: {}]
  %s3 = inlined_call_operand.hbm [shape: bf16[256,256], index: 3, kind: input, shape index: {}]
  %s4 = inlined_call_operand.vmem [shape: f32[1,256], index: 4, kind: input, shape index: {}]
  %s5 = inlined_call_operand.hbm [shape: bf16[256,256], index: 5, kind: input, shape index: {}]
  %s6 = inlined_call_operand.vmem [shape: f32[1,256], index: 6, kind: input, shape index: {}]
  %s7 = inlined_call_operand.vmem [shape: f32[1,256], index: 7, kind: input, shape index: {}]
  %s8 = inlined_call_operand.<no memory space> [shape: f32[1,1], index: 8, kind: input, shape index: {}]
  %s9 = inlined_call_operand.hbm [shape: bf16[256,128], index: 9, kind: input, shape index: {}]
  %s10 = inlined_call_operand.vmem [shape: bf16[128,128], index: 10, kind: input, shape index: {}]
  %s11 = inlined_call_operand.vmem [shape: f32[1,128], index: 11, kind: input, shape index: {}]
  %s12 = inlined_call_operand.hbm [shape: bf16[128,128], index: 12, kind: input, shape index: {}]
  %s13 = inlined_call_operand.vmem [shape: f32[1,128], index: 13, kind: input, shape index: {}]
  %s14 = inlined_call_operand.vmem [shape: bf16[128,3], index: 14, kind: input, shape index: {}]
  %s15 = inlined_call_operand.vmem [shape: f32[1,3], index: 15, kind: input, shape index: {}]
  %s16 = inlined_call_operand.vmem [shape: f32[1024,4], index: 16, kind: output, shape index: {}]
  %s17 = sld [smem:[#allocation0]]
  $region121: #{tpu_custom_call.1} parent=0
    _
  %s19 = ssub.s32 1, %s17
  %s20 = scalar_select 0, %s19, %s17
  %v21 = vstv %s8
  %22 = vst [vmem:[#allocation2] sm:$0x1] %v21
  $region1: #{tpu_custom_call.1} parent=0
    #allocation3 [shape = 'u8[262144]{0}', space=vmem, size = 0x40000, scoped, tag = 'input window, operand 0']
    #allocation4 [shape = 's32[2]{0}', space=sflag, size = 0x8, scoped, tag = 'scoped memory for tpu_custom_call.1']
    #allocation5 [shape = 'u8[65536]{0}', space=vmem, size = 0x10000, scoped, tag = 'input window, operand 1, single buffered']
    #allocation6 [shape = 's32[1]{0}', space=sflag, size = 0x4, scoped, tag = 'scoped memory for tpu_custom_call.1']
    #allocation7 [shape = 'u8[131072]{0}', space=vmem, size = 0x20000, scoped, tag = 'input window, operand 3, single buffered']
    #allocation8 [shape = 'u8[131072]{0}', space=vmem, size = 0x20000, scoped, tag = 'input window, operand 5, single buffered']
    #allocation9 [shape = 's32[1]{0}', space=sflag, size = 0x4, scoped, tag = 'scoped memory for tpu_custom_call.1']
    #allocation10 [shape = 'u8[65536]{0}', space=vmem, size = 0x10000, scoped, tag = 'input window, operand 9, single buffered']
    #allocation11 [shape = 'u8[32768]{0}', space=vmem, size = 0x8000, scoped, tag = 'input window, operand 12, single buffered']
    #allocation12 [shape = 's32[1]{0}', space=sflag, size = 0x4, scoped, tag = 'scoped memory for tpu_custom_call.1']
    %23 = vsyncpa [#allocation4], 0
    %s24 = scalar_lea.sflag [#allocation4], 1
    %25 = vsyncpa %s24, 0
    %26 = vsyncpa [#allocation6], 0
    %27 = vsyncpa [#allocation9], 0
    %28 = vsyncpa [#allocation12], 0
    loop: start=0, step=1, limit=4
    $region2: #{tpu_custom_call.1} parent=1 // loop_pre_header
      _
    $region3: #{tpu_custom_call.1} parent=1 // loop_header
      %s30 = sphi 0, %s34
      %p31 = scmp.ge.s32.totalorder %s30, 4
      %s40 = sphi 0, %s42
      %s43 = sphi 0, %s40
      %s44 = sphi 0, %s43
      %s60 = sphi 0, %s44
      %s64 = sphi 0, %s64
      %s66 = sphi 0, %s64
      %s67 = sphi 0, %s66
      %s81 = sphi 0, %s67
      %s85 = sphi 0, %s85
      %s87 = sphi 0, %s85
      %s88 = sphi 0, %s87
      %s102 = sphi 0, %s88
      %s106 = sphi 0, %s106
      %s108 = sphi 0, %s106
      %s109 = sphi 0, %s108
      %s123 = sphi 0, %s109
      %s127 = sphi 0, %s127
      %s129 = sphi 0, %s127
      %s130 = sphi 0, %s129
      %s144 = sphi 0, %s130
      %s148 = sphi 0, %s148
      %s150 = sphi 0, %s148
      %s151 = sphi 0, %s150
      %s165 = sphi 0, %s151
      %s169 = sphi 0, %s169
      %s171 = sphi 0, %s169
      %s172 = sphi 0, %s171
      %s186 = sphi 0, %s172
      %s190 = sphi 0, %s190
      %s192 = sphi 0, %s190
      %s193 = sphi 0, %s192
      %s207 = sphi 0, %s193
      %s211 = sphi 0, %s211
      %s213 = sphi 0, %s211
      %s214 = sphi 0, %s213
      %s228 = sphi 0, %s214
      %s232 = sphi 0, %s232
      %s234 = sphi 0, %s232
      %s235 = sphi 0, %s234
      %s249 = sphi 0, %s235
      %s253 = sphi 0, %s253
      %s255 = sphi 0, %s253
      %s256 = sphi 0, %s255
      %s270 = sphi 0, %s256
      %s274 = sphi 0, %s274
      %s276 = sphi 0, %s274
      %s277 = sphi 0, %s276
      %s291 = sphi 0, %s277
      %s295 = sphi 0, %s295
      %s297 = sphi 0, %s295
      %s298 = sphi 0, %s297
      %s312 = sphi 0, %s298
      %s316 = sphi 0, %s316
      %s318 = sphi 0, %s316
      %s319 = sphi 0, %s318
      %s333 = sphi 0, %s319
      %s337 = sphi 0, %s337
      %s339 = sphi 0, %s337
      %s340 = sphi 0, %s339
      %s354 = sphi 0, %s340
      %s358 = sphi 0, %s358
      %s360 = sphi 0, %s358
      %s361 = sphi 0, %s360
      %s375 = sphi 0, %s361
      %s381 = sphi 0, %s383
      %s384 = sphi 0, %s381
      %s385 = sphi 0, %s384
      %s401 = sphi 0, %s385
    $region4: #{tpu_custom_call.1} parent=1 // loop_header_branch
      %33 = sbr.rel (%p31) target = $region8
    $region5: #{tpu_custom_call.1} parent=1 // loop_body
      %s35 = ssub.s32 %s30, 1
      %s36 = ssub.s32 %s30, 2
      %s37 = sadd.s32 %s30, 1
      %s38 = ssub.s32 %s30, %s37
      %p39 = scmp.eq.s32.totalorder %s38, 0
      %s41 = sadd.s32 %s40, 1
      %s42 = scalar_select %p39, %s40, %s41
      %p45 = pneg %p39
      %p46 = scmp.eq.s32.totalorder %s30, 1
      %p47 = por %p45, %p46
      %p48 = scmp.ne.s32.totalorder %s40, %s43
      %p49 = scmp.eq.s32.totalorder %s30, 0
      %p50 = por %p48, %p49
      %p51 = scmp.ne.s32.totalorder %s40, %s43
      %p52 = scmp.eq.s32.totalorder %s35, 1
      %p53 = por %p51, %p52
      %p54 = scmp.ne.s32.totalorder %s43, %s44
      %p55 = scmp.eq.s32.totalorder %s35, 0
      %p56 = por %p54, %p55
      %p57 = scmp.ne.s32.totalorder %s43, %s44
      %p58 = scmp.eq.s32.totalorder %s36, 1
      %p59 = por %p57, %p58
      %p61 = scmp.ne.s32.totalorder %s44, %s60
      %p62 = scmp.eq.s32.totalorder %s36, 0
      %p63 = por %p61, %p62
      %s65 = sadd.s32 %s64, 1
      %p68 = scmp.eq.s32.totalorder %s30, 1
      %p69 = scmp.ne.s32.totalorder %s64, %s66
      %p70 = scmp.eq.s32.totalorder %s30, 0
      %p71 = por %p69, %p70
      %p72 = scmp.ne.s32.totalorder %s64, %s66
      %p73 = scmp.eq.s32.totalorder %s35, 1
      %p74 = por %p72, %p73
      %p75 = scmp.ne.s32.totalorder %s66, %s67
      %p76 = scmp.eq.s32.totalorder %s35, 0
      %p77 = por %p75, %p76
      %p78 = scmp.ne.s32.totalorder %s66, %s67
      %p79 = scmp.eq.s32.totalorder %s36, 1
      %p80 = por %p78, %p79
      %p82 = scmp.ne.s32.totalorder %s67, %s81
      %p83 = scmp.eq.s32.totalorder %s36, 0
      %p84 = por %p82, %p83
      %s86 = sadd.s32 %s85, 1
      %p89 = scmp.eq.s32.totalorder %s30, 1
      %p90 = scmp.ne.s32.totalorder %s85, %s87
      %p91 = scmp.eq.s32.totalorder %s30, 0
      %p92 = por %p90, %p91
      %p93 = scmp.ne.s32.totalorder %s85, %s87
      %p94 = scmp.eq.s32.totalorder %s35, 1
      %p95 = por %p93, %p94
      %p96 = scmp.ne.s32.totalorder %s87, %s88
      %p97 = scmp.eq.s32.totalorder %s35, 0
      %p98 = por %p96, %p97
      %p99 = scmp.ne.s32.totalorder %s87, %s88
      %p100 = scmp.eq.s32.totalorder %s36, 1
      %p101 = por %p99, %p100
      %p103 = scmp.ne.s32.totalorder %s88, %s102
      %p104 = scmp.eq.s32.totalorder %s36, 0
      %p105 = por %p103, %p104
      %s107 = sadd.s32 %s106, 1
      %p110 = scmp.eq.s32.totalorder %s30, 1
      %p111 = scmp.ne.s32.totalorder %s106, %s108
      %p112 = scmp.eq.s32.totalorder %s30, 0
      %p113 = por %p111, %p112
      %p114 = scmp.ne.s32.totalorder %s106, %s108
      %p115 = scmp.eq.s32.totalorder %s35, 1
      %p116 = por %p114, %p115
      %p117 = scmp.ne.s32.totalorder %s108, %s109
      %p118 = scmp.eq.s32.totalorder %s35, 0
      %p119 = por %p117, %p118
      %p120 = scmp.ne.s32.totalorder %s108, %s109
      %p121 = scmp.eq.s32.totalorder %s36, 1
      %p122 = por %p120, %p121
      %p124 = scmp.ne.s32.totalorder %s109, %s123
      %p125 = scmp.eq.s32.totalorder %s36, 0
      %p126 = por %p124, %p125
      %s128 = sadd.s32 %s127, 1
      %p131 = scmp.eq.s32.totalorder %s30, 1
      %p132 = scmp.ne.s32.totalorder %s127, %s129
      %p133 = scmp.eq.s32.totalorder %s30, 0
      %p134 = por %p132, %p133
      %p135 = scmp.ne.s32.totalorder %s127, %s129
      %p136 = scmp.eq.s32.totalorder %s35, 1
      %p137 = por %p135, %p136
      %p138 = scmp.ne.s32.totalorder %s129, %s130
      %p139 = scmp.eq.s32.totalorder %s35, 0
      %p140 = por %p138, %p139
      %p141 = scmp.ne.s32.totalorder %s129, %s130
      %p142 = scmp.eq.s32.totalorder %s36, 1
      %p143 = por %p141, %p142
      %p145 = scmp.ne.s32.totalorder %s130, %s144
      %p146 = scmp.eq.s32.totalorder %s36, 0
      %p147 = por %p145, %p146
      %s149 = sadd.s32 %s148, 1
      %p152 = scmp.eq.s32.totalorder %s30, 1
      %p153 = scmp.ne.s32.totalorder %s148, %s150
      %p154 = scmp.eq.s32.totalorder %s30, 0
      %p155 = por %p153, %p154
      %p156 = scmp.ne.s32.totalorder %s148, %s150
      %p157 = scmp.eq.s32.totalorder %s35, 1
      %p158 = por %p156, %p157
      %p159 = scmp.ne.s32.totalorder %s150, %s151
      %p160 = scmp.eq.s32.totalorder %s35, 0
      %p161 = por %p159, %p160
      %p162 = scmp.ne.s32.totalorder %s150, %s151
      %p163 = scmp.eq.s32.totalorder %s36, 1
      %p164 = por %p162, %p163
      %p166 = scmp.ne.s32.totalorder %s151, %s165
      %p167 = scmp.eq.s32.totalorder %s36, 0
      %p168 = por %p166, %p167
      %s170 = sadd.s32 %s169, 1
      %p173 = scmp.eq.s32.totalorder %s30, 1
      %p174 = scmp.ne.s32.totalorder %s169, %s171
      %p175 = scmp.eq.s32.totalorder %s30, 0
      %p176 = por %p174, %p175
      %p177 = scmp.ne.s32.totalorder %s169, %s171
      %p178 = scmp.eq.s32.totalorder %s35, 1
      %p179 = por %p177, %p178
      %p180 = scmp.ne.s32.totalorder %s171, %s172
      %p181 = scmp.eq.s32.totalorder %s35, 0
      %p182 = por %p180, %p181
      %p183 = scmp.ne.s32.totalorder %s171, %s172
      %p184 = scmp.eq.s32.totalorder %s36, 1
      %p185 = por %p183, %p184
      %p187 = scmp.ne.s32.totalorder %s172, %s186
      %p188 = scmp.eq.s32.totalorder %s36, 0
      %p189 = por %p187, %p188
      %s191 = sadd.s32 %s190, 1
      %p194 = scmp.eq.s32.totalorder %s30, 1
      %p195 = scmp.ne.s32.totalorder %s190, %s192
      %p196 = scmp.eq.s32.totalorder %s30, 0
      %p197 = por %p195, %p196
      %p198 = scmp.ne.s32.totalorder %s190, %s192
      %p199 = scmp.eq.s32.totalorder %s35, 1
      %p200 = por %p198, %p199
      %p201 = scmp.ne.s32.totalorder %s192, %s193
      %p202 = scmp.eq.s32.totalorder %s35, 0
      %p203 = por %p201, %p202
      %p204 = scmp.ne.s32.totalorder %s192, %s193
      %p205 = scmp.eq.s32.totalorder %s36, 1
      %p206 = por %p204, %p205
      %p208 = scmp.ne.s32.totalorder %s193, %s207
      %p209 = scmp.eq.s32.totalorder %s36, 0
      %p210 = por %p208, %p209
      %s212 = sadd.s32 %s211, 1
      %p215 = scmp.eq.s32.totalorder %s30, 1
      %p216 = scmp.ne.s32.totalorder %s211, %s213
      %p217 = scmp.eq.s32.totalorder %s30, 0
      %p218 = por %p216, %p217
      %p219 = scmp.ne.s32.totalorder %s211, %s213
      %p220 = scmp.eq.s32.totalorder %s35, 1
      %p221 = por %p219, %p220
      %p222 = scmp.ne.s32.totalorder %s213, %s214
      %p223 = scmp.eq.s32.totalorder %s35, 0
      %p224 = por %p222, %p223
      %p225 = scmp.ne.s32.totalorder %s213, %s214
      %p226 = scmp.eq.s32.totalorder %s36, 1
      %p227 = por %p225, %p226
      %p229 = scmp.ne.s32.totalorder %s214, %s228
      %p230 = scmp.eq.s32.totalorder %s36, 0
      %p231 = por %p229, %p230
      %s233 = sadd.s32 %s232, 1
      %p236 = scmp.eq.s32.totalorder %s30, 1
      %p237 = scmp.ne.s32.totalorder %s232, %s234
      %p238 = scmp.eq.s32.totalorder %s30, 0
      %p239 = por %p237, %p238
      %p240 = scmp.ne.s32.totalorder %s232, %s234
      %p241 = scmp.eq.s32.totalorder %s35, 1
      %p242 = por %p240, %p241
      %p243 = scmp.ne.s32.totalorder %s234, %s235
      %p244 = scmp.eq.s32.totalorder %s35, 0
      %p245 = por %p243, %p244
      %p246 = scmp.ne.s32.totalorder %s234, %s235
      %p247 = scmp.eq.s32.totalorder %s36, 1
      %p248 = por %p246, %p247
      %p250 = scmp.ne.s32.totalorder %s235, %s249
      %p251 = scmp.eq.s32.totalorder %s36, 0
      %p252 = por %p250, %p251
      %s254 = sadd.s32 %s253, 1
      %p257 = scmp.eq.s32.totalorder %s30, 1
      %p258 = scmp.ne.s32.totalorder %s253, %s255
      %p259 = scmp.eq.s32.totalorder %s30, 0
      %p260 = por %p258, %p259
      %p261 = scmp.ne.s32.totalorder %s253, %s255
      %p262 = scmp.eq.s32.totalorder %s35, 1
      %p263 = por %p261, %p262
      %p264 = scmp.ne.s32.totalorder %s255, %s256
      %p265 = scmp.eq.s32.totalorder %s35, 0
      %p266 = por %p264, %p265
      %p267 = scmp.ne.s32.totalorder %s255, %s256
      %p268 = scmp.eq.s32.totalorder %s36, 1
      %p269 = por %p267, %p268
      %p271 = scmp.ne.s32.totalorder %s256, %s270
      %p272 = scmp.eq.s32.totalorder %s36, 0
      %p273 = por %p271, %p272
      %s275 = sadd.s32 %s274, 1
      %p278 = scmp.eq.s32.totalorder %s30, 1
      %p279 = scmp.ne.s32.totalorder %s274, %s276
      %p280 = scmp.eq.s32.totalorder %s30, 0
      %p281 = por %p279, %p280
      %p282 = scmp.ne.s32.totalorder %s274, %s276
      %p283 = scmp.eq.s32.totalorder %s35, 1
      %p284 = por %p282, %p283
      %p285 = scmp.ne.s32.totalorder %s276, %s277
      %p286 = scmp.eq.s32.totalorder %s35, 0
      %p287 = por %p285, %p286
      %p288 = scmp.ne.s32.totalorder %s276, %s277
      %p289 = scmp.eq.s32.totalorder %s36, 1
      %p290 = por %p288, %p289
      %p292 = scmp.ne.s32.totalorder %s277, %s291
      %p293 = scmp.eq.s32.totalorder %s36, 0
      %p294 = por %p292, %p293
      %s296 = sadd.s32 %s295, 1
      %p299 = scmp.eq.s32.totalorder %s30, 1
      %p300 = scmp.ne.s32.totalorder %s295, %s297
      %p301 = scmp.eq.s32.totalorder %s30, 0
      %p302 = por %p300, %p301
      %p303 = scmp.ne.s32.totalorder %s295, %s297
      %p304 = scmp.eq.s32.totalorder %s35, 1
      %p305 = por %p303, %p304
      %p306 = scmp.ne.s32.totalorder %s297, %s298
      %p307 = scmp.eq.s32.totalorder %s35, 0
      %p308 = por %p306, %p307
      %p309 = scmp.ne.s32.totalorder %s297, %s298
      %p310 = scmp.eq.s32.totalorder %s36, 1
      %p311 = por %p309, %p310
      %p313 = scmp.ne.s32.totalorder %s298, %s312
      %p314 = scmp.eq.s32.totalorder %s36, 0
      %p315 = por %p313, %p314
      %s317 = sadd.s32 %s316, 1
      %p320 = scmp.eq.s32.totalorder %s30, 1
      %p321 = scmp.ne.s32.totalorder %s316, %s318
      %p322 = scmp.eq.s32.totalorder %s30, 0
      %p323 = por %p321, %p322
      %p324 = scmp.ne.s32.totalorder %s316, %s318
      %p325 = scmp.eq.s32.totalorder %s35, 1
      %p326 = por %p324, %p325
      %p327 = scmp.ne.s32.totalorder %s318, %s319
      %p328 = scmp.eq.s32.totalorder %s35, 0
      %p329 = por %p327, %p328
      %p330 = scmp.ne.s32.totalorder %s318, %s319
      %p331 = scmp.eq.s32.totalorder %s36, 1
      %p332 = por %p330, %p331
      %p334 = scmp.ne.s32.totalorder %s319, %s333
      %p335 = scmp.eq.s32.totalorder %s36, 0
      %p336 = por %p334, %p335
      %s338 = sadd.s32 %s337, 1
      %p341 = scmp.eq.s32.totalorder %s30, 1
      %p342 = scmp.ne.s32.totalorder %s337, %s339
      %p343 = scmp.eq.s32.totalorder %s30, 0
      %p344 = por %p342, %p343
      %p345 = scmp.ne.s32.totalorder %s337, %s339
      %p346 = scmp.eq.s32.totalorder %s35, 1
      %p347 = por %p345, %p346
      %p348 = scmp.ne.s32.totalorder %s339, %s340
      %p349 = scmp.eq.s32.totalorder %s35, 0
      %p350 = por %p348, %p349
      %p351 = scmp.ne.s32.totalorder %s339, %s340
      %p352 = scmp.eq.s32.totalorder %s36, 1
      %p353 = por %p351, %p352
      %p355 = scmp.ne.s32.totalorder %s340, %s354
      %p356 = scmp.eq.s32.totalorder %s36, 0
      %p357 = por %p355, %p356
      %s359 = sadd.s32 %s358, 1
      %p362 = scmp.eq.s32.totalorder %s30, 1
      %p363 = scmp.ne.s32.totalorder %s358, %s360
      %p364 = scmp.eq.s32.totalorder %s30, 0
      %p365 = por %p363, %p364
      %p366 = scmp.ne.s32.totalorder %s358, %s360
      %p367 = scmp.eq.s32.totalorder %s35, 1
      %p368 = por %p366, %p367
      %p369 = scmp.ne.s32.totalorder %s360, %s361
      %p370 = scmp.eq.s32.totalorder %s35, 0
      %p371 = por %p369, %p370
      %p372 = scmp.ne.s32.totalorder %s360, %s361
      %p373 = scmp.eq.s32.totalorder %s36, 1
      %p374 = por %p372, %p373
      %p376 = scmp.ne.s32.totalorder %s361, %s375
      %p377 = scmp.eq.s32.totalorder %s36, 0
      %p378 = por %p376, %p377
      %s379 = ssub.s32 %s30, %s37
      %p380 = scmp.eq.s32.totalorder %s379, 0
      %s382 = sadd.s32 %s381, 1
      %s383 = scalar_select %p380, %s381, %s382
      %p386 = pneg %p380
      %p387 = scmp.eq.s32.totalorder %s30, 1
      %p388 = por %p386, %p387
      %p389 = scmp.ne.s32.totalorder %s381, %s384
      %p390 = scmp.eq.s32.totalorder %s30, 0
      %p391 = por %p389, %p390
      %p392 = scmp.ne.s32.totalorder %s381, %s384
      %p393 = scmp.eq.s32.totalorder %s35, 1
      %p394 = por %p392, %p393
      %p395 = scmp.ne.s32.totalorder %s384, %s385
      %p396 = scmp.eq.s32.totalorder %s35, 0
      %p397 = por %p395, %p396
      %p398 = scmp.ne.s32.totalorder %s384, %s385
      %p399 = scmp.eq.s32.totalorder %s36, 1
      %p400 = por %p398, %p399
      %p402 = scmp.ne.s32.totalorder %s385, %s401
      %p403 = scmp.eq.s32.totalorder %s36, 0
      %p404 = por %p402, %p403
      %p405 = scmp.le.s32.totalorder 1, %s30
      %p406 = scmp.lt.s32.totalorder %s30, 3
      %p407 = pnand %p405, %p406
      %p408 = pneg %p407
      // Predicated region
      $region9: #{tpu_custom_call.1} parent=5 // pred_check
        _
      $region10: #{tpu_custom_call.1} parent=5 // pred_check_branch
        %410 = sbr.rel (%p407) target = $region12
      $region11: #{tpu_custom_call.1} parent=5 // pred_region
        %s411 = ssub.s32 %s30, 1
        // Predicated region
        $region13: #{tpu_custom_call.1} parent=11 // pred_check
          %p412 = pneg %p77
        $region14: #{tpu_custom_call.1} parent=11 // pred_check_branch
          %414 = sbr.rel (%p412) target = $region16
        $region15: #{tpu_custom_call.1} parent=11 // pred_region
          %s416 = ssub.s32 2048, 2048
          %417 = vsyncadd [#allocation6], %s416
          %s418 = sshll.u32 [#allocation5], 4
          %s419 = int_to_ptr.vmem [resolvable:$true] %s418
          %424 = dma.hbm_to_vmem [thread:$0]  %s1, 2048, %s419, [#allocation6], 128, 128, 8
        $region16: #{tpu_custom_call.1} parent=11 // pred_fallthru
          _
        // Predicated region
        $region17: #{tpu_custom_call.1} parent=11 // pred_check
          %p425 = pneg %p98
        $region18: #{tpu_custom_call.1} parent=11 // pred_check_branch
          %427 = sbr.rel (%p425) target = $region20
        $region19: #{tpu_custom_call.1} parent=11 // pred_region
          _
        $region20: #{tpu_custom_call.1} parent=11 // pred_fallthru
          _
        // Predicated region
        $region21: #{tpu_custom_call.1} parent=11 // pred_check
          %p428 = pneg %p119
        $region22: #{tpu_custom_call.1} parent=11 // pred_check_branch
          %430 = sbr.rel (%p428) target = $region24
        $region23: #{tpu_custom_call.1} parent=11 // pred_region
          %s432 = ssub.s32 4096, 4096
          %433 = vsyncadd [#allocation6], %s432
          %s434 = sshll.u32 [#allocation7], 4
          %s435 = int_to_ptr.vmem [resolvable:$true] %s434
          %440 = dma.hbm_to_vmem [thread:$0]  %s3, 4096, %s435, [#allocation6], 128, 128, 8
        $region24: #{tpu_custom_call.1} parent=11 // pred_fallthru
          _
        // Predicated region
        $region25: #{tpu_custom_call.1} parent=11 // pred_check
          %p441 = pneg %p140
        $region26: #{tpu_custom_call.1} parent=11 // pred_check_branch
          %443 = sbr.rel (%p441) target = $region28
        $region27: #{tpu_custom_call.1} parent=11 // pred_region
          _
        $region28: #{tpu_custom_call.1} parent=11 // pred_fallthru
          _
        // Predicated region
        $region29: #{tpu_custom_call.1} parent=11 // pred_check
          %p444 = pneg %p161
        $region30: #{tpu_custom_call.1} parent=11 // pred_check_branch
          %446 = sbr.rel (%p444) target = $region32
        $region31: #{tpu_custom_call.1} parent=11 // pred_region
          %s448 = ssub.s32 4096, 4096
          %449 = vsyncadd [#allocation9], %s448
          %s450 = sshll.u32 [#allocation8], 4
          %s451 = int_to_ptr.vmem [resolvable:$true] %s450
          %456 = dma.hbm_to_vmem [thread:$0]  %s5, 4096, %s451, [#allocation9], 128, 128, 8
        $region32: #{tpu_custom_call.1} parent=11 // pred_fallthru
          _
        // Predicated region
        $region33: #{tpu_custom_call.1} parent=11 // pred_check
          %p457 = pneg %p182
        $region34: #{tpu_custom_call.1} parent=11 // pred_check_branch
          %459 = sbr.rel (%p457) target = $region36
        $region35: #{tpu_custom_call.1} parent=11 // pred_region
          _
        $region36: #{tpu_custom_call.1} parent=11 // pred_fallthru
          _
        // Predicated region
        $region37: #{tpu_custom_call.1} parent=11 // pred_check
          %p460 = pneg %p203
        $region38: #{tpu_custom_call.1} parent=11 // pred_check_branch
          %462 = sbr.rel (%p460) target = $region40
        $region39: #{tpu_custom_call.1} parent=11 // pred_region
          _
        $region40: #{tpu_custom_call.1} parent=11 // pred_fallthru
          _
        // Predicated region
        $region41: #{tpu_custom_call.1} parent=11 // pred_check
          %p463 = pneg %p224
        $region42: #{tpu_custom_call.1} parent=11 // pred_check_branch
          %465 = sbr.rel (%p463) target = $region44
        $region43: #{tpu_custom_call.1} parent=11 // pred_region
          _
        $region44: #{tpu_custom_call.1} parent=11 // pred_fallthru
          _
        // Predicated region
        $region45: #{tpu_custom_call.1} parent=11 // pred_check
          %p466 = pneg %p245
        $region46: #{tpu_custom_call.1} parent=11 // pred_check_branch
          %468 = sbr.rel (%p466) target = $region48
        $region47: #{tpu_custom_call.1} parent=11 // pred_region
          %s470 = ssub.s32 2048, 2048
          %471 = vsyncadd [#allocation9], %s470
          %s472 = sshll.u32 [#allocation10], 4
          %s473 = int_to_ptr.vmem [resolvable:$true] %s472
          %478 = dma.hbm_to_vmem [thread:$0]  %s9, 2048, %s473, [#allocation9], 64, 64, 4
        $region48: #{tpu_custom_call.1} parent=11 // pred_fallthru
          _
        // Predicated region
        $region49: #{tpu_custom_call.1} parent=11 // pred_check
          %p479 = pneg %p266
        $region50: #{tpu_custom_call.1} parent=11 // pred_check_branch
          %481 = sbr.rel (%p479) target = $region52
        $region51: #{tpu_custom_call.1} parent=11 // pred_region
          _
        $region52: #{tpu_custom_call.1} parent=11 // pred_fallthru
          _
        // Predicated region
        $region53: #{tpu_custom_call.1} parent=11 // pred_check
          %p482 = pneg %p287
        $region54: #{tpu_custom_call.1} parent=11 // pred_check_branch
          %484 = sbr.rel (%p482) target = $region56
        $region55: #{tpu_custom_call.1} parent=11 // pred_region
          _
        $region56: #{tpu_custom_call.1} parent=11 // pred_fallthru
          _
        // Predicated region
        $region57: #{tpu_custom_call.1} parent=11 // pred_check
          %p485 = pneg %p308
        $region58: #{tpu_custom_call.1} parent=11 // pred_check_branch
          %487 = sbr.rel (%p485) target = $region60
        $region59: #{tpu_custom_call.1} parent=11 // pred_region
          %s489 = ssub.s32 1024, 1024
          %490 = vsyncadd [#allocation12], %s489
          %s491 = sshll.u32 [#allocation11], 4
          %s492 = int_to_ptr.vmem [resolvable:$true] %s491
          %497 = dma.hbm_to_vmem [thread:$0]  %s12, 1024, %s492, [#allocation12], 64, 64, 4
        $region60: #{tpu_custom_call.1} parent=11 // pred_fallthru
          _
        // Predicated region
        $region61: #{tpu_custom_call.1} parent=11 // pred_check
          %p498 = pneg %p329
        $region62: #{tpu_custom_call.1} parent=11 // pred_check_branch
          %500 = sbr.rel (%p498) target = $region64
        $region63: #{tpu_custom_call.1} parent=11 // pred_region
          _
        $region64: #{tpu_custom_call.1} parent=11 // pred_fallthru
          _
        // Predicated region
        $region65: #{tpu_custom_call.1} parent=11 // pred_check
          %p501 = pneg %p350
        $region66: #{tpu_custom_call.1} parent=11 // pred_check_branch
          %503 = sbr.rel (%p501) target = $region68
        $region67: #{tpu_custom_call.1} parent=11 // pred_region
          _
        $region68: #{tpu_custom_call.1} parent=11 // pred_fallthru
          _
        // Predicated region
        $region69: #{tpu_custom_call.1} parent=11 // pred_check
          %p504 = pneg %p371
        $region70: #{tpu_custom_call.1} parent=11 // pred_check_branch
          %506 = sbr.rel (%p504) target = $region72
        $region71: #{tpu_custom_call.1} parent=11 // pred_region
          _
        $region72: #{tpu_custom_call.1} parent=11 // pred_fallthru
          _
      $region12: #{tpu_custom_call.1} parent=5 // pred_fallthru
        _
      %p507 = scmp.lt.s32.totalorder %s30, 2
      // Predicated region
      $region73: #{tpu_custom_call.1} parent=5 // pred_check
        %p508 = pneg %p507
      $region74: #{tpu_custom_call.1} parent=5 // pred_check_branch
        %510 = sbr.rel (%p508) target = $region76
      $region75: #{tpu_custom_call.1} parent=5 // pred_region
        // Predicated region
        $region77: #{tpu_custom_call.1} parent=75 // pred_check
          %p511 = pneg %p50
        $region78: #{tpu_custom_call.1} parent=75 // pred_check_branch
          %513 = sbr.rel (%p511) target = $region80
        $region79: #{tpu_custom_call.1} parent=75 // pred_region
          %s514 = sand.u32 %s40, 1
          %s515 = scalar_lea.sflag [#allocation4], %s514
          %s516 = sand.u32 %s40, 1
          %s517 = smul.addr %s516, 256
          %s518 = scalar_lea.vmem [#allocation3], %s517
          %s519 = smul.u32 64, %s30
          %s521 = ssub.s32 4096, 4096
          %522 = vsyncadd %s515, %s521
          %s523 = smul.addr %s519, 64
          %s524 = scalar_lea.hbm %s0, %s523
          %s525 = sshll.u32 %s518, 4
          %s526 = int_to_ptr.vmem [resolvable:$true] %s525
          %531 = dma.hbm_to_vmem [thread:$0]  %s524, 4096, %s526, %s515, 64, 64, 4
        $region80: #{tpu_custom_call.1} parent=75 // pred_fallthru
          _
      $region76: #{tpu_custom_call.1} parent=5 // pred_fallthru
        _
      %p532 = scmp.le.s32.totalorder 1, %s30
      %p533 = scmp.lt.s32.totalorder %s30, 3
      %p534 = pnand %p532, %p533
      %p535 = pneg %p534
      // Predicated region
      $region81: #{tpu_custom_call.1} parent=5 // pred_check
        _
      $region82: #{tpu_custom_call.1} parent=5 // pred_check_branch
        %537 = sbr.rel (%p534) target = $region84
      $region83: #{tpu_custom_call.1} parent=5 // pred_region
        %s538 = ssub.s32 %s30, 1
        %s539 = sand.u32 %s43, 1
        %s540 = scalar_lea.sflag [#allocation4], %s539
        %s541 = sand.u32 %s43, 1
        %s542 = smul.addr %s541, 256
        %s543 = scalar_lea.vmem [#allocation3], %s542
        // Predicated region
        $region85: #{tpu_custom_call.1} parent=83 // pred_check
          %p544 = pneg %p56
        $region86: #{tpu_custom_call.1} parent=83 // pred_check_branch
          %546 = sbr.rel (%p544) target = $region88
        $region87: #{tpu_custom_call.1} parent=83 // pred_region
          %547 = dma.done %s540, 4096
        $region88: #{tpu_custom_call.1} parent=83 // pred_fallthru
          _
        // Predicated region
        $region89: #{tpu_custom_call.1} parent=83 // pred_check
          %p548 = pneg %p77
        $region90: #{tpu_custom_call.1} parent=83 // pred_check_branch
          %550 = sbr.rel (%p548) target = $region92
        $region91: #{tpu_custom_call.1} parent=83 // pred_region
          %551 = dma.done [#allocation6], 2048
        $region92: #{tpu_custom_call.1} parent=83 // pred_fallthru
          _
        // Predicated region
        $region93: #{tpu_custom_call.1} parent=83 // pred_check
          %p552 = pneg %p119
        $region94: #{tpu_custom_call.1} parent=83 // pred_check_branch
          %554 = sbr.rel (%p552) target = $region96
        $region95: #{tpu_custom_call.1} parent=83 // pred_region
          %555 = dma.done [#allocation6], 4096
        $region96: #{tpu_custom_call.1} parent=83 // pred_fallthru
          _
        // Predicated region
        $region97: #{tpu_custom_call.1} parent=83 // pred_check
          %p556 = pneg %p161
        $region98: #{tpu_custom_call.1} parent=83 // pred_check_branch
          %558 = sbr.rel (%p556) target = $region100
        $region99: #{tpu_custom_call.1} parent=83 // pred_region
          %559 = dma.done [#allocation9], 4096
        $region100: #{tpu_custom_call.1} parent=83 // pred_fallthru
          _
        // Predicated region
        $region101: #{tpu_custom_call.1} parent=83 // pred_check
          %p560 = pneg %p245
        $region102: #{tpu_custom_call.1} parent=83 // pred_check_branch
          %562 = sbr.rel (%p560) target = $region104
        $region103: #{tpu_custom_call.1} parent=83 // pred_region
          %563 = dma.done [#allocation9], 2048
        $region104: #{tpu_custom_call.1} parent=83 // pred_fallthru
          _
        // Predicated region
        $region105: #{tpu_custom_call.1} parent=83 // pred_check
          %p564 = pneg %p308
        $region106: #{tpu_custom_call.1} parent=83 // pred_check_branch
          %566 = sbr.rel (%p564) target = $region108
        $region107: #{tpu_custom_call.1} parent=83 // pred_region
          %567 = dma.done [#allocation12], 1024
        $region108: #{tpu_custom_call.1} parent=83 // pred_fallthru
          _
        %s568 = sand.u32 %s43, 1
        %s569 = scalar_lea.sflag [#allocation4], %s568
        %s570 = sand.u32 %s43, 1
        %s571 = smul.addr %s570, 256
        %s572 = scalar_lea.vmem [#allocation3], %s571
        %p573 = pneg %p56
        %p574 = pneg %p53
        %p575 = pneg %p77
        %p576 = pneg %p74
        %p577 = pneg %p98
        %p578 = pneg %p95
        %p579 = pneg %p119
        %p580 = pneg %p116
        %p581 = pneg %p140
        %p582 = pneg %p137
        %p583 = pneg %p161
        %p584 = pneg %p158
        %p585 = pneg %p182
        %p586 = pneg %p179
        %p587 = pneg %p203
        %p588 = pneg %p200
        %p589 = pneg %p224
        %p590 = pneg %p221
        %p591 = pneg %p245
        %p592 = pneg %p242
        %p593 = pneg %p266
        %p594 = pneg %p263
        %p595 = pneg %p287
        %p596 = pneg %p284
        %p597 = pneg %p308
        %p598 = pneg %p305
        %p599 = pneg %p329
        %p600 = pneg %p326
        %p601 = pneg %p350
        %p602 = pneg %p347
        %p603 = pneg %p371
        %p604 = pneg %p368
        %p605 = pneg %p397
        %p606 = pneg %p394
        %s607 = smul.u32 64, %s35
        %p608 = scmp.lt.s32.totalorder %s607, 127
        %s609 = scalar_select %p608, %s607, 127
        %s610 = smul.addr %s609, 8
        %s611 = scalar_lea.vmem %s16, %s610
        %s612 = smul.u32 64, %s35
        %s613 = smul.u32 64, %s35
        %p614 = scmp.lt.s32.totalorder %s613, 127
        %s615 = scalar_select %p614, %s613, 127
        %s616 = smul.addr %s615, 8
        %s617 = scalar_lea.vmem %s16, %s616
        %s618 = smul.u32 64, %s35
        %v620 = vld [vmem:[%s543] sm:$0xf]
        %v621 = vld [vmem:[%s543 + $0x4] sm:$0xf]
        %v622 = vld [vmem:[%s543 + $0x8] sm:$0xf]
        %v623 = vld [vmem:[%s543 + $0xc] sm:$0xf]
        %v624 = vld [vmem:[%s543 + $0x10] sm:$0xf]
        %v625 = vld [vmem:[%s543 + $0x14] sm:$0xf]
        %v626 = vld [vmem:[%s543 + $0x18] sm:$0xf]
        %v627 = vld [vmem:[%s543 + $0x1c] sm:$0xf]
        %v628 = vld [vmem:[%s543 + $0x20] sm:$0xf]
        %v629 = vld [vmem:[%s543 + $0x24] sm:$0xf]
        %v630 = vld [vmem:[%s543 + $0x28] sm:$0xf]
        %v631 = vld [vmem:[%s543 + $0x2c] sm:$0xf]
        %v632 = vld [vmem:[%s543 + $0x30] sm:$0xf]
        %v633 = vld [vmem:[%s543 + $0x34] sm:$0xf]
        %v634 = vld [vmem:[%s543 + $0x38] sm:$0xf]
        %v635 = vld [vmem:[%s543 + $0x3c] sm:$0xf]
        %v636 = vld [vmem:[%s543 + $0x40] sm:$0xf]
        %v637 = vld [vmem:[%s543 + $0x44] sm:$0xf]
        %v638 = vld [vmem:[%s543 + $0x48] sm:$0xf]
        %v639 = vld [vmem:[%s543 + $0x4c] sm:$0xf]
        %v640 = vld [vmem:[%s543 + $0x50] sm:$0xf]
        %v641 = vld [vmem:[%s543 + $0x54] sm:$0xf]
        %v642 = vld [vmem:[%s543 + $0x58] sm:$0xf]
        %v643 = vld [vmem:[%s543 + $0x5c] sm:$0xf]
        %v644 = vld [vmem:[%s543 + $0x60] sm:$0xf]
        %v645 = vld [vmem:[%s543 + $0x64] sm:$0xf]
        %v646 = vld [vmem:[%s543 + $0x68] sm:$0xf]
        %v647 = vld [vmem:[%s543 + $0x6c] sm:$0xf]
        %v648 = vld [vmem:[%s543 + $0x70] sm:$0xf]
        %v649 = vld [vmem:[%s543 + $0x74] sm:$0xf]
        %v650 = vld [vmem:[%s543 + $0x78] sm:$0xf]
        %v651 = vld [vmem:[%s543 + $0x7c] sm:$0xf]
        %v652 = vld [vmem:[%s543 + $0x80] sm:$0xf]
        %v653 = vld [vmem:[%s543 + $0x84] sm:$0xf]
        %v654 = vld [vmem:[%s543 + $0x88] sm:$0xf]
        %v655 = vld [vmem:[%s543 + $0x8c] sm:$0xf]
        %v656 = vld [vmem:[%s543 + $0x90] sm:$0xf]
        %v657 = vld [vmem:[%s543 + $0x94] sm:$0xf]
        %v658 = vld [vmem:[%s543 + $0x98] sm:$0xf]
        %v659 = vld [vmem:[%s543 + $0x9c] sm:$0xf]
        %v660 = vld [vmem:[%s543 + $0xa0] sm:$0xf]
        %v661 = vld [vmem:[%s543 + $0xa4] sm:$0xf]
        %v662 = vld [vmem:[%s543 + $0xa8] sm:$0xf]
        %v663 = vld [vmem:[%s543 + $0xac] sm:$0xf]
        %v664 = vld [vmem:[%s543 + $0xb0] sm:$0xf]
        %v665 = vld [vmem:[%s543 + $0xb4] sm:$0xf]
        %v666 = vld [vmem:[%s543 + $0xb8] sm:$0xf]
        %v667 = vld [vmem:[%s543 + $0xbc] sm:$0xf]
        %v668 = vld [vmem:[%s543 + $0xc0] sm:$0xf]
        %v669 = vld [vmem:[%s543 + $0xc4] sm:$0xf]
        %v670 = vld [vmem:[%s543 + $0xc8] sm:$0xf]
        %v671 = vld [vmem:[%s543 + $0xcc] sm:$0xf]
        %v672 = vld [vmem:[%s543 + $0xd0] sm:$0xf]
        %v673 = vld [vmem:[%s543 + $0xd4] sm:$0xf]
        %v674 = vld [vmem:[%s543 + $0xd8] sm:$0xf]
        %v675 = vld [vmem:[%s543 + $0xdc] sm:$0xf]
        %v676 = vld [vmem:[%s543 + $0xe0] sm:$0xf]
        %v677 = vld [vmem:[%s543 + $0xe4] sm:$0xf]
        %v678 = vld [vmem:[%s543 + $0xe8] sm:$0xf]
        %v679 = vld [vmem:[%s543 + $0xec] sm:$0xf]
        %v680 = vld [vmem:[%s543 + $0xf0] sm:$0xf]
        %v681 = vld [vmem:[%s543 + $0xf4] sm:$0xf]
        %v682 = vld [vmem:[%s543 + $0xf8] sm:$0xf]
        %v683 = vld [vmem:[%s543 + $0xfc] sm:$0xf]
        %v684 = vld [vmem:[#allocation5] sm:$0xff]
        %v685 = vld [vmem:[#allocation5 + $0x8] sm:$0xff]
        %v686 = vld [vmem:[#allocation5 + $0x10] sm:$0xff]
        %v687 = vld [vmem:[#allocation5 + $0x18] sm:$0xff]
        %v688 = vld [vmem:[#allocation5 + $0x20] sm:$0xff]
        %v689 = vld [vmem:[#allocation5 + $0x28] sm:$0xff]
        %v690 = vld [vmem:[#allocation5 + $0x30] sm:$0xff]
        %v691 = vld [vmem:[#allocation5 + $0x38] sm:$0xff]
        %v692 = vld [vmem:[#allocation5 + $0x40] sm:$0xff]
        %v693 = vld [vmem:[#allocation5 + $0x48] sm:$0xff]
        %v694 = vld [vmem:[#allocation5 + $0x50] sm:$0xff]
        %v695 = vld [vmem:[#allocation5 + $0x58] sm:$0xff]
        %v696 = vld [vmem:[#allocation5 + $0x60] sm:$0xff]
        %v697 = vld [vmem:[#allocation5 + $0x68] sm:$0xff]
        %v698 = vld [vmem:[#allocation5 + $0x70] sm:$0xff]
        %v699 = vld [vmem:[#allocation5 + $0x78] sm:$0xff]
        %v700 = vld [vmem:[%s2] sm:$0x3]
        %v702 = vlaneseq
        %v703 = vshrl.u32 %v702, 7
        %v704 = vsub.s32 0, %v703
        %v705 = vrot.slane %v700, %v704
        %v706 = vlaneseq
        %v707 = vshrl.u32 %v706, 7
        %v708 = vsub.s32 1, %v707
        %v709 = vrot.slane %v700, %v708
        %v776 = vunpack.c.l.b16 %v620
        %v777 = vunpack.c.l.b16 %v621
        %v778 = vunpack.c.l.b16 %v622
        %v779 = vunpack.c.l.b16 %v623
        %v780 = vunpack.c.l.b16 %v624
        %v781 = vunpack.c.l.b16 %v625
        %v782 = vunpack.c.l.b16 %v626
        %v783 = vunpack.c.l.b16 %v627
        %v784 = vunpack.c.l.b16 %v628
        %v785 = vunpack.c.l.b16 %v629
        %v786 = vunpack.c.l.b16 %v630
        %v787 = vunpack.c.l.b16 %v631
        %v788 = vunpack.c.l.b16 %v632
        %v789 = vunpack.c.l.b16 %v633
        %v790 = vunpack.c.l.b16 %v634
        %v791 = vunpack.c.l.b16 %v635
        %v792 = vunpack.c.l.b16 %v636
        %v793 = vunpack.c.l.b16 %v637
        %v794 = vunpack.c.l.b16 %v638
        %v795 = vunpack.c.l.b16 %v639
        %v796 = vunpack.c.l.b16 %v640
        %v797 = vunpack.c.l.b16 %v641
        %v798 = vunpack.c.l.b16 %v642
        %v799 = vunpack.c.l.b16 %v643
        %v800 = vunpack.c.l.b16 %v644
        %v801 = vunpack.c.l.b16 %v645
        %v802 = vunpack.c.l.b16 %v646
        %v803 = vunpack.c.l.b16 %v647
        %v804 = vunpack.c.l.b16 %v648
        %v805 = vunpack.c.l.b16 %v649
        %v806 = vunpack.c.l.b16 %v650
        %v807 = vunpack.c.l.b16 %v651
        %v808 = vunpack.c.l.b16 %v652
        %v809 = vunpack.c.l.b16 %v653
        %v810 = vunpack.c.l.b16 %v654
        %v811 = vunpack.c.l.b16 %v655
        %v812 = vunpack.c.l.b16 %v656
        %v813 = vunpack.c.l.b16 %v657
        %v814 = vunpack.c.l.b16 %v658
        %v815 = vunpack.c.l.b16 %v659
        %v816 = vunpack.c.l.b16 %v660
        %v817 = vunpack.c.l.b16 %v661
        %v818 = vunpack.c.l.b16 %v662
        %v819 = vunpack.c.l.b16 %v663
        %v820 = vunpack.c.l.b16 %v664
        %v821 = vunpack.c.l.b16 %v665
        %v822 = vunpack.c.l.b16 %v666
        %v823 = vunpack.c.l.b16 %v667
        %v824 = vunpack.c.l.b16 %v668
        %v825 = vunpack.c.l.b16 %v669
        %v826 = vunpack.c.l.b16 %v670
        %v827 = vunpack.c.l.b16 %v671
        %v828 = vunpack.c.l.b16 %v672
        %v829 = vunpack.c.l.b16 %v673
        %v830 = vunpack.c.l.b16 %v674
        %v831 = vunpack.c.l.b16 %v675
        %v832 = vunpack.c.l.b16 %v676
        %v833 = vunpack.c.l.b16 %v677
        %v834 = vunpack.c.l.b16 %v678
        %v835 = vunpack.c.l.b16 %v679
        %v836 = vunpack.c.l.b16 %v680
        %v837 = vunpack.c.l.b16 %v681
        %v838 = vunpack.c.l.b16 %v682
        %v839 = vunpack.c.l.b16 %v683
        %v840 = vpack.c.b16 %v777, %v776
        %v841 = vpack.c.b16 %v779, %v778
        %v842 = vpack.c.b16 %v781, %v780
        %v843 = vpack.c.b16 %v783, %v782
        %v844 = vpack.c.b16 %v785, %v784
        %v845 = vpack.c.b16 %v787, %v786
        %v846 = vpack.c.b16 %v789, %v788
        %v847 = vpack.c.b16 %v791, %v790
        %v848 = vpack.c.b16 %v793, %v792
        %v849 = vpack.c.b16 %v795, %v794
        %v850 = vpack.c.b16 %v797, %v796
        %v851 = vpack.c.b16 %v799, %v798
        %v852 = vpack.c.b16 %v801, %v800
        %v853 = vpack.c.b16 %v803, %v802
        %v854 = vpack.c.b16 %v805, %v804
        %v855 = vpack.c.b16 %v807, %v806
        %v856 = vpack.c.b16 %v809, %v808
        %v857 = vpack.c.b16 %v811, %v810
        %v858 = vpack.c.b16 %v813, %v812
        %v859 = vpack.c.b16 %v815, %v814
        %v860 = vpack.c.b16 %v817, %v816
        %v861 = vpack.c.b16 %v819, %v818
        %v862 = vpack.c.b16 %v821, %v820
        %v863 = vpack.c.b16 %v823, %v822
        %v864 = vpack.c.b16 %v825, %v824
        %v865 = vpack.c.b16 %v827, %v826
        %v866 = vpack.c.b16 %v829, %v828
        %v867 = vpack.c.b16 %v831, %v830
        %v868 = vpack.c.b16 %v833, %v832
        %v869 = vpack.c.b16 %v835, %v834
        %v870 = vpack.c.b16 %v837, %v836
        %v871 = vpack.c.b16 %v839, %v838
        %v920 = vunpack.c.l.b16 %v684
        %v921 = vunpack.c.h.b16 %v684
        %v922 = vunpack.c.l.b16 %v685
        %v923 = vunpack.c.h.b16 %v685
        %v924 = vunpack.c.l.b16 %v686
        %v925 = vunpack.c.h.b16 %v686
        %v926 = vunpack.c.l.b16 %v687
        %v927 = vunpack.c.h.b16 %v687
        %v928 = vunpack.c.l.b16 %v688
        %v929 = vunpack.c.h.b16 %v688
        %v930 = vunpack.c.l.b16 %v689
        %v931 = vunpack.c.h.b16 %v689
        %v932 = vunpack.c.l.b16 %v690
        %v933 = vunpack.c.h.b16 %v690
        %v934 = vunpack.c.l.b16 %v691
        %v935 = vunpack.c.h.b16 %v691
        %v936 = vunpack.c.l.b16 %v692
        %v937 = vunpack.c.h.b16 %v692
        %v938 = vunpack.c.l.b16 %v693
        %v939 = vunpack.c.h.b16 %v693
        %v940 = vunpack.c.l.b16 %v694
        %v941 = vunpack.c.h.b16 %v694
        %v942 = vunpack.c.l.b16 %v695
        %v943 = vunpack.c.h.b16 %v695
        %v944 = vunpack.c.l.b16 %v696
        %v945 = vunpack.c.h.b16 %v696
        %v946 = vunpack.c.l.b16 %v697
        %v947 = vunpack.c.h.b16 %v697
        %v948 = vunpack.c.l.b16 %v698
        %v949 = vunpack.c.h.b16 %v698
        %v950 = vunpack.c.l.b16 %v699
        %v951 = vunpack.c.h.b16 %v699
        %v952 = vpack.c.b16 %v922, %v920
        %v953 = vpack.c.b16 %v923, %v921
        %v954 = vpack.c.b16 %v926, %v924
        %v955 = vpack.c.b16 %v927, %v925
        %v956 = vpack.c.b16 %v930, %v928
        %v957 = vpack.c.b16 %v931, %v929
        %v958 = vpack.c.b16 %v934, %v932
        %v959 = vpack.c.b16 %v935, %v933
        %v960 = vpack.c.b16 %v938, %v936
        %v961 = vpack.c.b16 %v939, %v937
        %v962 = vpack.c.b16 %v942, %v940
        %v963 = vpack.c.b16 %v943, %v941
        %v964 = vpack.c.b16 %v946, %v944
        %v965 = vpack.c.b16 %v947, %v945
        %v966 = vpack.c.b16 %v950, %v948
        %v967 = vpack.c.b16 %v951, %v949
        %984 = vmatprep.subr.bf16.mxu0 %v967
        %985 = vmatpush1.bf16.msra.mxu0 %v966
        %986 = vmatprep.subr.bf16.mxu0 %v965
        %987 = vmatpush1.bf16.msra.mxu0 %v964
        %988 = vmatprep.subr.bf16.mxu0 %v963
        %989 = vmatpush1.bf16.msra.mxu0 %v962
        %990 = vmatprep.subr.bf16.mxu0 %v961
        %991 = vmatpush1.bf16.msra.mxu0 %v960
        %992 = vmatprep.subr.bf16.mxu0 %v959
        %993 = vmatpush1.bf16.msra.mxu0 %v958
        %994 = vmatprep.subr.bf16.mxu0 %v957
        %995 = vmatpush1.bf16.msra.mxu0 %v956
        %996 = vmatprep.subr.bf16.mxu0 %v955
        %997 = vmatpush1.bf16.msra.mxu0 %v954
        %998 = vmatprep.subr.bf16.mxu0 %v953
        %999 = vmatpush1.bf16.msra.mxu0 %v952
        %1000 = vmatprep.subr.bf16.mxu0 0
        %1001 = vmatpush2.bf16.msra.mxu0 0
        %1002 = vmatprep.subr.bf16.mxu0 0
        %1003 = vmatpush2.bf16.msra.mxu0 0
        %1004 = vmatprep.subr.bf16.mxu0 0
        %1005 = vmatpush2.bf16.msra.mxu0 0
        %1006 = vmatprep.subr.bf16.mxu0 0
        %1007 = vmatpush2.bf16.msra.mxu0 0
        %1008 = vmatprep.subr.bf16.mxu0 0
        %1009 = vmatpush2.bf16.msra.mxu0 0
        %1010 = vmatprep.subr.bf16.mxu0 0
        %1011 = vmatpush2.bf16.msra.mxu0 0
        %1012 = vmatprep.subr.bf16.mxu0 0
        %1013 = vmatpush2.bf16.msra.mxu0 0
        %1014 = vmatprep.subr.bf16.mxu0 0
        %1015 = vmatpush2.bf16.msra.mxu0 0
        %1016 = vmatprep.mubr.bf16.mxu0 0
        %1017 = vmatmul.mubr.bf16.gmra.mxu0 %v840
        %v1018 = vpop.f32.mrf.mxu0
        %v1019 = vadd.f32 %v705, %v1018
        %v1020 = vpop.f32.mrf.mxu0
        %v1021 = vadd.f32 %v709, %v1020
        %v1022 = vpop.f32.mrf.mxu0
        %v1023 = vadd.f32 %v705, %v1022
        %v1024 = vpop.f32.mrf.mxu0
        %v1025 = vadd.f32 %v709, %v1024
        %1026 = vmatprep.mubr.bf16.mxu0 0
        %1027 = vmatmul.mubr.bf16.gmra.mxu0 %v841
        %v1028 = vpop.f32.mrf.mxu0
        %v1029 = vadd.f32 %v705, %v1028
        %v1030 = vpop.f32.mrf.mxu0
        %v1031 = vadd.f32 %v709, %v1030
        %v1032 = vpop.f32.mrf.mxu0
        %v1033 = vadd.f32 %v705, %v1032
        %v1034 = vpop.f32.mrf.mxu0
        %v1035 = vadd.f32 %v709, %v1034
        %1036 = vmatprep.mubr.bf16.mxu0 0
        %1037 = vmatmul.mubr.bf16.gmra.mxu0 %v842
        %v1038 = vpop.f32.mrf.mxu0
        %v1039 = vadd.f32 %v705, %v1038
        %v1040 = vpop.f32.mrf.mxu0
        %v1041 = vadd.f32 %v709, %v1040
        %v1042 = vpop.f32.mrf.mxu0
        %v1043 = vadd.f32 %v705, %v1042
        %v1044 = vpop.f32.mrf.mxu0
        %v1045 = vadd.f32 %v709, %v1044
        %1046 = vmatprep.mubr.bf16.mxu0 0
        %1047 = vmatmul.mubr.bf16.gmra.mxu0 %v843
        %v1048 = vpop.f32.mrf.mxu0
        %v1049 = vadd.f32 %v705, %v1048
        %v1050 = vpop.f32.mrf.mxu0
        %v1051 = vadd.f32 %v709, %v1050
        %v1052 = vpop.f32.mrf.mxu0
        %v1053 = vadd.f32 %v705, %v1052
        %v1054 = vpop.f32.mrf.mxu0
        %v1055 = vadd.f32 %v709, %v1054
        %1056 = vmatprep.mubr.bf16.mxu0 0
        %1057 = vmatmul.mubr.bf16.gmra.mxu0 %v844
        %v1058 = vpop.f32.mrf.mxu0
        %v1059 = vadd.f32 %v705, %v1058
        %v1060 = vpop.f32.mrf.mxu0
        %v1061 = vadd.f32 %v709, %v1060
        %v1062 = vpop.f32.mrf.mxu0
        %v1063 = vadd.f32 %v705, %v1062
        %v1064 = vpop.f32.mrf.mxu0
        %v1065 = vadd.f32 %v709, %v1064
        %1066 = vmatprep.mubr.bf16.mxu0 0
        %1067 = vmatmul.mubr.bf16.gmra.mxu0 %v845
        %v1068 = vpop.f32.mrf.mxu0
        %v1069 = vadd.f32 %v705, %v1068
        %v1070 = vpop.f32.mrf.mxu0
        %v1071 = vadd.f32 %v709, %v1070
        %v1072 = vpop.f32.mrf.mxu0
        %v1073 = vadd.f32 %v705, %v1072
        %v1074 = vpop.f32.mrf.mxu0
        %v1075 = vadd.f32 %v709, %v1074
        %1076 = vmatprep.mubr.bf16.mxu0 0
        %1077 = vmatmul.mubr.bf16.gmra.mxu0 %v846
        %v1078 = vpop.f32.mrf.mxu0
        %v1079 = vadd.f32 %v705, %v1078
        %v1080 = vpop.f32.mrf.mxu0
        %v1081 = vadd.f32 %v709, %v1080
        %v1082 = vpop.f32.mrf.mxu0
        %v1083 = vadd.f32 %v705, %v1082
        %v1084 = vpop.f32.mrf.mxu0
        %v1085 = vadd.f32 %v709, %v1084
        %1086 = vmatprep.mubr.bf16.mxu0 0
        %1087 = vmatmul.mubr.bf16.gmra.mxu0 %v847
        %v1088 = vpop.f32.mrf.mxu0
        %v1089 = vadd.f32 %v705, %v1088
        %v1090 = vpop.f32.mrf.mxu0
        %v1091 = vadd.f32 %v709, %v1090
        %v1092 = vpop.f32.mrf.mxu0
        %v1093 = vadd.f32 %v705, %v1092
        %v1094 = vpop.f32.mrf.mxu0
        %v1095 = vadd.f32 %v709, %v1094
        %1096 = vmatprep.mubr.bf16.mxu0 0
        %1097 = vmatmul.mubr.bf16.gmra.mxu0 %v848
        %v1098 = vpop.f32.mrf.mxu0
        %v1099 = vadd.f32 %v705, %v1098
        %v1100 = vpop.f32.mrf.mxu0
        %v1101 = vadd.f32 %v709, %v1100
        %v1102 = vpop.f32.mrf.mxu0
        %v1103 = vadd.f32 %v705, %v1102
        %v1104 = vpop.f32.mrf.mxu0
        %v1105 = vadd.f32 %v709, %v1104
        %1106 = vmatprep.mubr.bf16.mxu0 0
        %1107 = vmatmul.mubr.bf16.gmra.mxu0 %v849
        %v1108 = vpop.f32.mrf.mxu0
        %v1109 = vadd.f32 %v705, %v1108
        %v1110 = vpop.f32.mrf.mxu0
        %v1111 = vadd.f32 %v709, %v1110
        %v1112 = vpop.f32.mrf.mxu0
        %v1113 = vadd.f32 %v705, %v1112
        %v1114 = vpop.f32.mrf.mxu0
        %v1115 = vadd.f32 %v709, %v1114
        %1116 = vmatprep.mubr.bf16.mxu0 0
        %1117 = vmatmul.mubr.bf16.gmra.mxu0 %v850
        %v1118 = vpop.f32.mrf.mxu0
        %v1119 = vadd.f32 %v705, %v1118
        %v1120 = vpop.f32.mrf.mxu0
        %v1121 = vadd.f32 %v709, %v1120
        %v1122 = vpop.f32.mrf.mxu0
        %v1123 = vadd.f32 %v705, %v1122
        %v1124 = vpop.f32.mrf.mxu0
        %v1125 = vadd.f32 %v709, %v1124
        %1126 = vmatprep.mubr.bf16.mxu0 0
        %1127 = vmatmul.mubr.bf16.gmra.mxu0 %v851
        %v1128 = vpop.f32.mrf.mxu0
        %v1129 = vadd.f32 %v705, %v1128
        %v1130 = vpop.f32.mrf.mxu0
        %v1131 = vadd.f32 %v709, %v1130
        %v1132 = vpop.f32.mrf.mxu0
        %v1133 = vadd.f32 %v705, %v1132
        %v1134 = vpop.f32.mrf.mxu0
        %v1135 = vadd.f32 %v709, %v1134
        %1136 = vmatprep.mubr.bf16.mxu0 0
        %1137 = vmatmul.mubr.bf16.gmra.mxu0 %v852
        %v1138 = vpop.f32.mrf.mxu0
        %v1139 = vadd.f32 %v705, %v1138
        %v1140 = vpop.f32.mrf.mxu0
        %v1141 = vadd.f32 %v709, %v1140
        %v1142 = vpop.f32.mrf.mxu0
        %v1143 = vadd.f32 %v705, %v1142
        %v1144 = vpop.f32.mrf.mxu0
        %v1145 = vadd.f32 %v709, %v1144
        %1146 = vmatprep.mubr.bf16.mxu0 0
        %1147 = vmatmul.mubr.bf16.gmra.mxu0 %v853
        %v1148 = vpop.f32.mrf.mxu0
        %v1149 = vadd.f32 %v705, %v1148
        %v1150 = vpop.f32.mrf.mxu0
        %v1151 = vadd.f32 %v709, %v1150
        %v1152 = vpop.f32.mrf.mxu0
        %v1153 = vadd.f32 %v705, %v1152
        %v1154 = vpop.f32.mrf.mxu0
        %v1155 = vadd.f32 %v709, %v1154
        %1156 = vmatprep.mubr.bf16.mxu0 0
        %1157 = vmatmul.mubr.bf16.gmra.mxu0 %v854
        %v1158 = vpop.f32.mrf.mxu0
        %v1159 = vadd.f32 %v705, %v1158
        %v1160 = vpop.f32.mrf.mxu0
        %v1161 = vadd.f32 %v709, %v1160
        %v1162 = vpop.f32.mrf.mxu0
        %v1163 = vadd.f32 %v705, %v1162
        %v1164 = vpop.f32.mrf.mxu0
        %v1165 = vadd.f32 %v709, %v1164
        %1166 = vmatprep.mubr.bf16.mxu0 0
        %1167 = vmatmul.mubr.bf16.gmra.mxu0 %v855
        %v1168 = vpop.f32.mrf.mxu0
        %v1169 = vadd.f32 %v705, %v1168
        %v1170 = vpop.f32.mrf.mxu0
        %v1171 = vadd.f32 %v709, %v1170
        %v1172 = vpop.f32.mrf.mxu0
        %v1173 = vadd.f32 %v705, %v1172
        %v1174 = vpop.f32.mrf.mxu0
        %v1175 = vadd.f32 %v709, %v1174
        %1176 = vmatprep.mubr.bf16.mxu0 0
        %1177 = vmatmul.mubr.bf16.gmra.mxu0 %v856
        %v1178 = vpop.f32.mrf.mxu0
        %v1179 = vadd.f32 %v705, %v1178
        %v1180 = vpop.f32.mrf.mxu0
        %v1181 = vadd.f32 %v709, %v1180
        %v1182 = vpop.f32.mrf.mxu0
        %v1183 = vadd.f32 %v705, %v1182
        %v1184 = vpop.f32.mrf.mxu0
        %v1185 = vadd.f32 %v709, %v1184
        %1186 = vmatprep.mubr.bf16.mxu0 0
        %1187 = vmatmul.mubr.bf16.gmra.mxu0 %v857
        %v1188 = vpop.f32.mrf.mxu0
        %v1189 = vadd.f32 %v705, %v1188
        %v1190 = vpop.f32.mrf.mxu0
        %v1191 = vadd.f32 %v709, %v1190
        %v1192 = vpop.f32.mrf.mxu0
        %v1193 = vadd.f32 %v705, %v1192
        %v1194 = vpop.f32.mrf.mxu0
        %v1195 = vadd.f32 %v709, %v1194
        %1196 = vmatprep.mubr.bf16.mxu0 0
        %1197 = vmatmul.mubr.bf16.gmra.mxu0 %v858
        %v1198 = vpop.f32.mrf.mxu0
        %v1199 = vadd.f32 %v705, %v1198
        %v1200 = vpop.f32.mrf.mxu0
        %v1201 = vadd.f32 %v709, %v1200
        %v1202 = vpop.f32.mrf.mxu0
        %v1203 = vadd.f32 %v705, %v1202
        %v1204 = vpop.f32.mrf.mxu0
        %v1205 = vadd.f32 %v709, %v1204
        %1206 = vmatprep.mubr.bf16.mxu0 0
        %1207 = vmatmul.mubr.bf16.gmra.mxu0 %v859
        %v1208 = vpop.f32.mrf.mxu0
        %v1209 = vadd.f32 %v705, %v1208
        %v1210 = vpop.f32.mrf.mxu0
        %v1211 = vadd.f32 %v709, %v1210
        %v1212 = vpop.f32.mrf.mxu0
        %v1213 = vadd.f32 %v705, %v1212
        %v1214 = vpop.f32.mrf.mxu0
        %v1215 = vadd.f32 %v709, %v1214
        %1216 = vmatprep.mubr.bf16.mxu0 0
        %1217 = vmatmul.mubr.bf16.gmra.mxu0 %v860
        %v1218 = vpop.f32.mrf.mxu0
        %v1219 = vadd.f32 %v705, %v1218
        %v1220 = vpop.f32.mrf.mxu0
        %v1221 = vadd.f32 %v709, %v1220
        %v1222 = vpop.f32.mrf.mxu0
        %v1223 = vadd.f32 %v705, %v1222
        %v1224 = vpop.f32.mrf.mxu0
        %v1225 = vadd.f32 %v709, %v1224
        %1226 = vmatprep.mubr.bf16.mxu0 0
        %1227 = vmatmul.mubr.bf16.gmra.mxu0 %v861
        %v1228 = vpop.f32.mrf.mxu0
        %v1229 = vadd.f32 %v705, %v1228
        %v1230 = vpop.f32.mrf.mxu0
        %v1231 = vadd.f32 %v709, %v1230
        %v1232 = vpop.f32.mrf.mxu0
        %v1233 = vadd.f32 %v705, %v1232
        %v1234 = vpop.f32.mrf.mxu0
        %v1235 = vadd.f32 %v709, %v1234
        %1236 = vmatprep.mubr.bf16.mxu0 0
        %1237 = vmatmul.mubr.bf16.gmra.mxu0 %v862
        %v1238 = vpop.f32.mrf.mxu0
        %v1239 = vadd.f32 %v705, %v1238
        %v1240 = vpop.f32.mrf.mxu0
        %v1241 = vadd.f32 %v709, %v1240
        %v1242 = vpop.f32.mrf.mxu0
        %v1243 = vadd.f32 %v705, %v1242
        %v1244 = vpop.f32.mrf.mxu0
        %v1245 = vadd.f32 %v709, %v1244
        %1246 = vmatprep.mubr.bf16.mxu0 0
        %1247 = vmatmul.mubr.bf16.gmra.mxu0 %v863
        %v1248 = vpop.f32.mrf.mxu0
        %v1249 = vadd.f32 %v705, %v1248
        %v1250 = vpop.f32.mrf.mxu0
        %v1251 = vadd.f32 %v709, %v1250
        %v1252 = vpop.f32.mrf.mxu0
        %v1253 = vadd.f32 %v705, %v1252
        %v1254 = vpop.f32.mrf.mxu0
        %v1255 = vadd.f32 %v709, %v1254
        %1256 = vmatprep.mubr.bf16.mxu0 0
        %1257 = vmatmul.mubr.bf16.gmra.mxu0 %v864
        %v1258 = vpop.f32.mrf.mxu0
        %v1259 = vadd.f32 %v705, %v1258
        %v1260 = vpop.f32.mrf.mxu0
        %v1261 = vadd.f32 %v709, %v1260
        %v1262 = vpop.f32.mrf.mxu0
        %v1263 = vadd.f32 %v705, %v1262
        %v1264 = vpop.f32.mrf.mxu0
        %v1265 = vadd.f32 %v709, %v1264
        %1266 = vmatprep.mubr.bf16.mxu0 0
        %1267 = vmatmul.mubr.bf16.gmra.mxu0 %v865
        %v1268 = vpop.f32.mrf.mxu0
        %v1269 = vadd.f32 %v705, %v1268
        %v1270 = vpop.f32.mrf.mxu0
        %v1271 = vadd.f32 %v709, %v1270
        %v1272 = vpop.f32.mrf.mxu0
        %v1273 = vadd.f32 %v705, %v1272
        %v1274 = vpop.f32.mrf.mxu0
        %v1275 = vadd.f32 %v709, %v1274
        %1276 = vmatprep.mubr.bf16.mxu0 0
        %1277 = vmatmul.mubr.bf16.gmra.mxu0 %v866
        %v1278 = vpop.f32.mrf.mxu0
        %v1279 = vadd.f32 %v705, %v1278
        %v1280 = vpop.f32.mrf.mxu0
        %v1281 = vadd.f32 %v709, %v1280
        %v1282 = vpop.f32.mrf.mxu0
        %v1283 = vadd.f32 %v705, %v1282
        %v1284 = vpop.f32.mrf.mxu0
        %v1285 = vadd.f32 %v709, %v1284
        %1286 = vmatprep.mubr.bf16.mxu0 0
        %1287 = vmatmul.mubr.bf16.gmra.mxu0 %v867
        %v1288 = vpop.f32.mrf.mxu0
        %v1289 = vadd.f32 %v705, %v1288
        %v1290 = vpop.f32.mrf.mxu0
        %v1291 = vadd.f32 %v709, %v1290
        %v1292 = vpop.f32.mrf.mxu0
        %v1293 = vadd.f32 %v705, %v1292
        %v1294 = vpop.f32.mrf.mxu0
        %v1295 = vadd.f32 %v709, %v1294
        %1296 = vmatprep.mubr.bf16.mxu0 0
        %1297 = vmatmul.mubr.bf16.gmra.mxu0 %v868
        %v1298 = vpop.f32.mrf.mxu0
        %v1299 = vadd.f32 %v705, %v1298
        %v1300 = vpop.f32.mrf.mxu0
        %v1301 = vadd.f32 %v709, %v1300
        %v1302 = vpop.f32.mrf.mxu0
        %v1303 = vadd.f32 %v705, %v1302
        %v1304 = vpop.f32.mrf.mxu0
        %v1305 = vadd.f32 %v709, %v1304
        %1306 = vmatprep.mubr.bf16.mxu0 0
        %1307 = vmatmul.mubr.bf16.gmra.mxu0 %v869
        %v1308 = vpop.f32.mrf.mxu0
        %v1309 = vadd.f32 %v705, %v1308
        %v1310 = vpop.f32.mrf.mxu0
        %v1311 = vadd.f32 %v709, %v1310
        %v1312 = vpop.f32.mrf.mxu0
        %v1313 = vadd.f32 %v705, %v1312
        %v1314 = vpop.f32.mrf.mxu0
        %v1315 = vadd.f32 %v709, %v1314
        %1316 = vmatprep.mubr.bf16.mxu0 0
        %1317 = vmatmul.mubr.bf16.gmra.mxu0 %v870
        %v1318 = vpop.f32.mrf.mxu0
        %v1319 = vadd.f32 %v705, %v1318
        %v1320 = vpop.f32.mrf.mxu0
        %v1321 = vadd.f32 %v709, %v1320
        %v1322 = vpop.f32.mrf.mxu0
        %v1323 = vadd.f32 %v705, %v1322
        %v1324 = vpop.f32.mrf.mxu0
        %v1325 = vadd.f32 %v709, %v1324
        %1326 = vmatprep.mubr.bf16.mxu0 0
        %1327 = vmatmul.mubr.bf16.gmra.mxu0 %v871
        %v1328 = vpop.f32.mrf.mxu0
        %v1329 = vadd.f32 %v705, %v1328
        %v1330 = vpop.f32.mrf.mxu0
        %v1331 = vadd.f32 %v709, %v1330
        %v1332 = vpop.f32.mrf.mxu0
        %v1333 = vadd.f32 %v705, %v1332
        %v1334 = vpop.f32.mrf.mxu0
        %v1335 = vadd.f32 %v709, %v1334
        %1336 = vdwg.mxu0
        %v1337 = vmax.f32 %v1019, 0.0
        %v1338 = vmax.f32 %v1021, 0.0
        %v1339 = vmax.f32 %v1023, 0.0
        %v1340 = vmax.f32 %v1025, 0.0
        %v1341 = vmax.f32 %v1029, 0.0
        %v1342 = vmax.f32 %v1031, 0.0
        %v1343 = vmax.f32 %v1033, 0.0
        %v1344 = vmax.f32 %v1035, 0.0
        %v1345 = vmax.f32 %v1039, 0.0
        %v1346 = vmax.f32 %v1041, 0.0
        %v1347 = vmax.f32 %v1043, 0.0
        %v1348 = vmax.f32 %v1045, 0.0
        %v1349 = vmax.f32 %v1049, 0.0
        %v1350 = vmax.f32 %v1051, 0.0
        %v1351 = vmax.f32 %v1053, 0.0
        %v1352 = vmax.f32 %v1055, 0.0
        %v1353 = vmax.f32 %v1059, 0.0
        %v1354 = vmax.f32 %v1061, 0.0
        %v1355 = vmax.f32 %v1063, 0.0
        %v1356 = vmax.f32 %v1065, 0.0
        %v1357 = vmax.f32 %v1069, 0.0
        %v1358 = vmax.f32 %v1071, 0.0
        %v1359 = vmax.f32 %v1073, 0.0
        %v1360 = vmax.f32 %v1075, 0.0
        %v1361 = vmax.f32 %v1079, 0.0
        %v1362 = vmax.f32 %v1081, 0.0
        %v1363 = vmax.f32 %v1083, 0.0
        %v1364 = vmax.f32 %v1085, 0.0
        %v1365 = vmax.f32 %v1089, 0.0
        %v1366 = vmax.f32 %v1091, 0.0
        %v1367 = vmax.f32 %v1093, 0.0
        %v1368 = vmax.f32 %v1095, 0.0
        %v1369 = vmax.f32 %v1099, 0.0
        %v1370 = vmax.f32 %v1101, 0.0
        %v1371 = vmax.f32 %v1103, 0.0
        %v1372 = vmax.f32 %v1105, 0.0
        %v1373 = vmax.f32 %v1109, 0.0
        %v1374 = vmax.f32 %v1111, 0.0
        %v1375 = vmax.f32 %v1113, 0.0
        %v1376 = vmax.f32 %v1115, 0.0
        %v1377 = vmax.f32 %v1119, 0.0
        %v1378 = vmax.f32 %v1121, 0.0
        %v1379 = vmax.f32 %v1123, 0.0
        %v1380 = vmax.f32 %v1125, 0.0
        %v1381 = vmax.f32 %v1129, 0.0
        %v1382 = vmax.f32 %v1131, 0.0
        %v1383 = vmax.f32 %v1133, 0.0
        %v1384 = vmax.f32 %v1135, 0.0
        %v1385 = vmax.f32 %v1139, 0.0
        %v1386 = vmax.f32 %v1141, 0.0
        %v1387 = vmax.f32 %v1143, 0.0
        %v1388 = vmax.f32 %v1145, 0.0
        %v1389 = vmax.f32 %v1149, 0.0
        %v1390 = vmax.f32 %v1151, 0.0
        %v1391 = vmax.f32 %v1153, 0.0
        %v1392 = vmax.f32 %v1155, 0.0
        %v1393 = vmax.f32 %v1159, 0.0
        %v1394 = vmax.f32 %v1161, 0.0
        %v1395 = vmax.f32 %v1163, 0.0
        %v1396 = vmax.f32 %v1165, 0.0
        %v1397 = vmax.f32 %v1169, 0.0
        %v1398 = vmax.f32 %v1171, 0.0
        %v1399 = vmax.f32 %v1173, 0.0
        %v1400 = vmax.f32 %v1175, 0.0
        %v1401 = vmax.f32 %v1179, 0.0
        %v1402 = vmax.f32 %v1181, 0.0
        %v1403 = vmax.f32 %v1183, 0.0
        %v1404 = vmax.f32 %v1185, 0.0
        %v1405 = vmax.f32 %v1189, 0.0
        %v1406 = vmax.f32 %v1191, 0.0
        %v1407 = vmax.f32 %v1193, 0.0
        %v1408 = vmax.f32 %v1195, 0.0
        %v1409 = vmax.f32 %v1199, 0.0
        %v1410 = vmax.f32 %v1201, 0.0
        %v1411 = vmax.f32 %v1203, 0.0
        %v1412 = vmax.f32 %v1205, 0.0
        %v1413 = vmax.f32 %v1209, 0.0
        %v1414 = vmax.f32 %v1211, 0.0
        %v1415 = vmax.f32 %v1213, 0.0
        %v1416 = vmax.f32 %v1215, 0.0
        %v1417 = vmax.f32 %v1219, 0.0
        %v1418 = vmax.f32 %v1221, 0.0
        %v1419 = vmax.f32 %v1223, 0.0
        %v1420 = vmax.f32 %v1225, 0.0
        %v1421 = vmax.f32 %v1229, 0.0
        %v1422 = vmax.f32 %v1231, 0.0
        %v1423 = vmax.f32 %v1233, 0.0
        %v1424 = vmax.f32 %v1235, 0.0
        %v1425 = vmax.f32 %v1239, 0.0
        %v1426 = vmax.f32 %v1241, 0.0
        %v1427 = vmax.f32 %v1243, 0.0
        %v1428 = vmax.f32 %v1245, 0.0
        %v1429 = vmax.f32 %v1249, 0.0
        %v1430 = vmax.f32 %v1251, 0.0
        %v1431 = vmax.f32 %v1253, 0.0
        %v1432 = vmax.f32 %v1255, 0.0
        %v1433 = vmax.f32 %v1259, 0.0
        %v1434 = vmax.f32 %v1261, 0.0
        %v1435 = vmax.f32 %v1263, 0.0
        %v1436 = vmax.f32 %v1265, 0.0
        %v1437 = vmax.f32 %v1269, 0.0
        %v1438 = vmax.f32 %v1271, 0.0
        %v1439 = vmax.f32 %v1273, 0.0
        %v1440 = vmax.f32 %v1275, 0.0
        %v1441 = vmax.f32 %v1279, 0.0
        %v1442 = vmax.f32 %v1281, 0.0
        %v1443 = vmax.f32 %v1283, 0.0
        %v1444 = vmax.f32 %v1285, 0.0
        %v1445 = vmax.f32 %v1289, 0.0
        %v1446 = vmax.f32 %v1291, 0.0
        %v1447 = vmax.f32 %v1293, 0.0
        %v1448 = vmax.f32 %v1295, 0.0
        %v1449 = vmax.f32 %v1299, 0.0
        %v1450 = vmax.f32 %v1301, 0.0
        %v1451 = vmax.f32 %v1303, 0.0
        %v1452 = vmax.f32 %v1305, 0.0
        %v1453 = vmax.f32 %v1309, 0.0
        %v1454 = vmax.f32 %v1311, 0.0
        %v1455 = vmax.f32 %v1313, 0.0
        %v1456 = vmax.f32 %v1315, 0.0
        %v1457 = vmax.f32 %v1319, 0.0
        %v1458 = vmax.f32 %v1321, 0.0
        %v1459 = vmax.f32 %v1323, 0.0
        %v1460 = vmax.f32 %v1325, 0.0
        %v1461 = vmax.f32 %v1329, 0.0
        %v1462 = vmax.f32 %v1331, 0.0
        %v1463 = vmax.f32 %v1333, 0.0
        %v1464 = vmax.f32 %v1335, 0.0
        %v1465 = vpack.c.bf16 %v1339, %v1337
        %v1466 = vpack.c.bf16 %v1340, %v1338
        %v1467 = vpack.c.bf16 %v1343, %v1341
        %v1468 = vpack.c.bf16 %v1344, %v1342
        %v1469 = vpack.c.bf16 %v1347, %v1345
        %v1470 = vpack.c.bf16 %v1348, %v1346
        %v1471 = vpack.c.bf16 %v1351, %v1349
        %v1472 = vpack.c.bf16 %v1352, %v1350
        %v1473 = vpack.c.bf16 %v1355, %v1353
        %v1474 = vpack.c.bf16 %v1356, %v1354
        %v1475 = vpack.c.bf16 %v1359, %v1357
        %v1476 = vpack.c.bf16 %v1360, %v1358
        %v1477 = vpack.c.bf16 %v1363, %v1361
        %v1478 = vpack.c.bf16 %v1364, %v1362
        %v1479 = vpack.c.bf16 %v1367, %v1365
        %v1480 = vpack.c.bf16 %v1368, %v1366
        %v1481 = vpack.c.bf16 %v1371, %v1369
        %v1482 = vpack.c.bf16 %v1372, %v1370
        %v1483 = vpack.c.bf16 %v1375, %v1373
        %v1484 = vpack.c.bf16 %v1376, %v1374
        %v1485 = vpack.c.bf16 %v1379, %v1377
        %v1486 = vpack.c.bf16 %v1380, %v1378
        %v1487 = vpack.c.bf16 %v1383, %v1381
        %v1488 = vpack.c.bf16 %v1384, %v1382
        %v1489 = vpack.c.bf16 %v1387, %v1385
        %v1490 = vpack.c.bf16 %v1388, %v1386
        %v1491 = vpack.c.bf16 %v1391, %v1389
        %v1492 = vpack.c.bf16 %v1392, %v1390
        %v1493 = vpack.c.bf16 %v1395, %v1393
        %v1494 = vpack.c.bf16 %v1396, %v1394
        %v1495 = vpack.c.bf16 %v1399, %v1397
        %v1496 = vpack.c.bf16 %v1400, %v1398
        %v1497 = vpack.c.bf16 %v1403, %v1401
        %v1498 = vpack.c.bf16 %v1404, %v1402
        %v1499 = vpack.c.bf16 %v1407, %v1405
        %v1500 = vpack.c.bf16 %v1408, %v1406
        %v1501 = vpack.c.bf16 %v1411, %v1409
        %v1502 = vpack.c.bf16 %v1412, %v1410
        %v1503 = vpack.c.bf16 %v1415, %v1413
        %v1504 = vpack.c.bf16 %v1416, %v1414
        %v1505 = vpack.c.bf16 %v1419, %v1417
        %v1506 = vpack.c.bf16 %v1420, %v1418
        %v1507 = vpack.c.bf16 %v1423, %v1421
        %v1508 = vpack.c.bf16 %v1424, %v1422
        %v1509 = vpack.c.bf16 %v1427, %v1425
        %v1510 = vpack.c.bf16 %v1428, %v1426
        %v1511 = vpack.c.bf16 %v1431, %v1429
        %v1512 = vpack.c.bf16 %v1432, %v1430
        %v1513 = vpack.c.bf16 %v1435, %v1433
        %v1514 = vpack.c.bf16 %v1436, %v1434
        %v1515 = vpack.c.bf16 %v1439, %v1437
        %v1516 = vpack.c.bf16 %v1440, %v1438
        %v1517 = vpack.c.bf16 %v1443, %v1441
        %v1518 = vpack.c.bf16 %v1444, %v1442
        %v1519 = vpack.c.bf16 %v1447, %v1445
        %v1520 = vpack.c.bf16 %v1448, %v1446
        %v1521 = vpack.c.bf16 %v1451, %v1449
        %v1522 = vpack.c.bf16 %v1452, %v1450
        %v1523 = vpack.c.bf16 %v1455, %v1453
        %v1524 = vpack.c.bf16 %v1456, %v1454
        %v1525 = vpack.c.bf16 %v1459, %v1457
        %v1526 = vpack.c.bf16 %v1460, %v1458
        %v1527 = vpack.c.bf16 %v1463, %v1461
        %v1528 = vpack.c.bf16 %v1464, %v1462
        %v1529 = vld [vmem:[#allocation7] sm:$0xff]
        %v1530 = vld [vmem:[#allocation7 + $0x8] sm:$0xff]
        %v1531 = vld [vmem:[#allocation7 + $0x10] sm:$0xff]
        %v1532 = vld [vmem:[#allocation7 + $0x18] sm:$0xff]
        %v1533 = vld [vmem:[#allocation7 + $0x20] sm:$0xff]
        %v1534 = vld [vmem:[#allocation7 + $0x28] sm:$0xff]
        %v1535 = vld [vmem:[#allocation7 + $0x30] sm:$0xff]
        %v1536 = vld [vmem:[#allocation7 + $0x38] sm:$0xff]
        %v1537 = vld [vmem:[#allocation7 + $0x40] sm:$0xff]
        %v1538 = vld [vmem:[#allocation7 + $0x48] sm:$0xff]
        %v1539 = vld [vmem:[#allocation7 + $0x50] sm:$0xff]
        %v1540 = vld [vmem:[#allocation7 + $0x58] sm:$0xff]
        %v1541 = vld [vmem:[#allocation7 + $0x60] sm:$0xff]
        %v1542 = vld [vmem:[#allocation7 + $0x68] sm:$0xff]
        %v1543 = vld [vmem:[#allocation7 + $0x70] sm:$0xff]
        %v1544 = vld [vmem:[#allocation7 + $0x78] sm:$0xff]
        %v1545 = vld [vmem:[#allocation7 + $0x80] sm:$0xff]
        %v1546 = vld [vmem:[#allocation7 + $0x88] sm:$0xff]
        %v1547 = vld [vmem:[#allocation7 + $0x90] sm:$0xff]
        %v1548 = vld [vmem:[#allocation7 + $0x98] sm:$0xff]
        %v1549 = vld [vmem:[#allocation7 + $0xa0] sm:$0xff]
        %v1550 = vld [vmem:[#allocation7 + $0xa8] sm:$0xff]
        %v1551 = vld [vmem:[#allocation7 + $0xb0] sm:$0xff]
        %v1552 = vld [vmem:[#allocation7 + $0xb8] sm:$0xff]
        %v1553 = vld [vmem:[#allocation7 + $0xc0] sm:$0xff]
        %v1554 = vld [vmem:[#allocation7 + $0xc8] sm:$0xff]
        %v1555 = vld [vmem:[#allocation7 + $0xd0] sm:$0xff]
        %v1556 = vld [vmem:[#allocation7 + $0xd8] sm:$0xff]
        %v1557 = vld [vmem:[#allocation7 + $0xe0] sm:$0xff]
        %v1558 = vld [vmem:[#allocation7 + $0xe8] sm:$0xff]
        %v1559 = vld [vmem:[#allocation7 + $0xf0] sm:$0xff]
        %v1560 = vld [vmem:[#allocation7 + $0xf8] sm:$0xff]
        %v1561 = vld [vmem:[%s4] sm:$0x3]
        %v1563 = vlaneseq
        %v1564 = vshrl.u32 %v1563, 7
        %v1565 = vsub.s32 0, %v1564
        %v1566 = vrot.slane %v1561, %v1565
        %v1567 = vlaneseq
        %v1568 = vshrl.u32 %v1567, 7
        %v1569 = vsub.s32 1, %v1568
        %v1570 = vrot.slane %v1561, %v1569
        %v1605 = vunpack.c.l.b16 %v1529
        %v1606 = vunpack.c.h.b16 %v1529
        %v1607 = vunpack.c.l.b16 %v1530
        %v1608 = vunpack.c.h.b16 %v1530
        %v1609 = vunpack.c.l.b16 %v1531
        %v1610 = vunpack.c.h.b16 %v1531
        %v1611 = vunpack.c.l.b16 %v1532
        %v1612 = vunpack.c.h.b16 %v1532
        %v1613 = vunpack.c.l.b16 %v1533
        %v1614 = vunpack.c.h.b16 %v1533
        %v1615 = vunpack.c.l.b16 %v1534
        %v1616 = vunpack.c.h.b16 %v1534
        %v1617 = vunpack.c.l.b16 %v1535
        %v1618 = vunpack.c.h.b16 %v1535
        %v1619 = vunpack.c.l.b16 %v1536
        %v1620 = vunpack.c.h.b16 %v1536
        %v1621 = vunpack.c.l.b16 %v1537
        %v1622 = vunpack.c.h.b16 %v1537
        %v1623 = vunpack.c.l.b16 %v1538
        %v1624 = vunpack.c.h.b16 %v1538
        %v1625 = vunpack.c.l.b16 %v1539
        %v1626 = vunpack.c.h.b16 %v1539
        %v1627 = vunpack.c.l.b16 %v1540
        %v1628 = vunpack.c.h.b16 %v1540
        %v1629 = vunpack.c.l.b16 %v1541
        %v1630 = vunpack.c.h.b16 %v1541
        %v1631 = vunpack.c.l.b16 %v1542
        %v1632 = vunpack.c.h.b16 %v1542
        %v1633 = vunpack.c.l.b16 %v1543
        %v1634 = vunpack.c.h.b16 %v1543
        %v1635 = vunpack.c.l.b16 %v1544
        %v1636 = vunpack.c.h.b16 %v1544
        %v1637 = vunpack.c.l.b16 %v1545
        %v1638 = vunpack.c.h.b16 %v1545
        %v1639 = vunpack.c.l.b16 %v1546
        %v1640 = vunpack.c.h.b16 %v1546
        %v1641 = vunpack.c.l.b16 %v1547
        %v1642 = vunpack.c.h.b16 %v1547
        %v1643 = vunpack.c.l.b16 %v1548
        %v1644 = vunpack.c.h.b16 %v1548
        %v1645 = vunpack.c.l.b16 %v1549
        %v1646 = vunpack.c.h.b16 %v1549
        %v1647 = vunpack.c.l.b16 %v1550
        %v1648 = vunpack.c.h.b16 %v1550
        %v1649 = vunpack.c.l.b16 %v1551
        %v1650 = vunpack.c.h.b16 %v1551
        %v1651 = vunpack.c.l.b16 %v1552
        %v1652 = vunpack.c.h.b16 %v1552
        %v1653 = vunpack.c.l.b16 %v1553
        %v1654 = vunpack.c.h.b16 %v1553
        %v1655 = vunpack.c.l.b16 %v1554
        %v1656 = vunpack.c.h.b16 %v1554
        %v1657 = vunpack.c.l.b16 %v1555
        %v1658 = vunpack.c.h.b16 %v1555
        %v1659 = vunpack.c.l.b16 %v1556
        %v1660 = vunpack.c.h.b16 %v1556
        %v1661 = vunpack.c.l.b16 %v1557
        %v1662 = vunpack.c.h.b16 %v1557
        %v1663 = vunpack.c.l.b16 %v1558
        %v1664 = vunpack.c.h.b16 %v1558
        %v1665 = vunpack.c.l.b16 %v1559
        %v1666 = vunpack.c.h.b16 %v1559
        %v1667 = vunpack.c.l.b16 %v1560
        %v1668 = vunpack.c.h.b16 %v1560
        %v1669 = vpack.c.b16 %v1607, %v1605
        %v1670 = vpack.c.b16 %v1608, %v1606
        %v1671 = vpack.c.b16 %v1611, %v1609
        %v1672 = vpack.c.b16 %v1612, %v1610
        %v1673 = vpack.c.b16 %v1615, %v1613
        %v1674 = vpack.c.b16 %v1616, %v1614
        %v1675 = vpack.c.b16 %v1619, %v1617
        %v1676 = vpack.c.b16 %v1620, %v1618
        %v1677 = vpack.c.b16 %v1623, %v1621
        %v1678 = vpack.c.b16 %v1624, %v1622
        %v1679 = vpack.c.b16 %v1627, %v1625
        %v1680 = vpack.c.b16 %v1628, %v1626
        %v1681 = vpack.c.b16 %v1631, %v1629
        %v1682 = vpack.c.b16 %v1632, %v1630
        %v1683 = vpack.c.b16 %v1635, %v1633
        %v1684 = vpack.c.b16 %v1636, %v1634
        %v1685 = vpack.c.b16 %v1639, %v1637
        %v1686 = vpack.c.b16 %v1640, %v1638
        %v1687 = vpack.c.b16 %v1643, %v1641
        %v1688 = vpack.c.b16 %v1644, %v1642
        %v1689 = vpack.c.b16 %v1647, %v1645
        %v1690 = vpack.c.b16 %v1648, %v1646
        %v1691 = vpack.c.b16 %v1651, %v1649
        %v1692 = vpack.c.b16 %v1652, %v1650
        %v1693 = vpack.c.b16 %v1655, %v1653
        %v1694 = vpack.c.b16 %v1656, %v1654
        %v1695 = vpack.c.b16 %v1659, %v1657
        %v1696 = vpack.c.b16 %v1660, %v1658
        %v1697 = vpack.c.b16 %v1663, %v1661
        %v1698 = vpack.c.b16 %v1664, %v1662
        %v1699 = vpack.c.b16 %v1667, %v1665
        %v1700 = vpack.c.b16 %v1668, %v1666
        %1733 = vmatprep.subr.bf16.mxu0 %v1684
        %1734 = vmatpush1.bf16.msra.mxu0 %v1683
        %1735 = vmatprep.subr.bf16.mxu0 %v1682
        %1736 = vmatpush1.bf16.msra.mxu0 %v1681
        %1737 = vmatprep.subr.bf16.mxu0 %v1680
        %1738 = vmatpush1.bf16.msra.mxu0 %v1679
        %1739 = vmatprep.subr.bf16.mxu0 %v1678
        %1740 = vmatpush1.bf16.msra.mxu0 %v1677
        %1741 = vmatprep.subr.bf16.mxu0 %v1676
        %1742 = vmatpush1.bf16.msra.mxu0 %v1675
        %1743 = vmatprep.subr.bf16.mxu0 %v1674
        %1744 = vmatpush1.bf16.msra.mxu0 %v1673
        %1745 = vmatprep.subr.bf16.mxu0 %v1672
        %1746 = vmatpush1.bf16.msra.mxu0 %v1671
        %1747 = vmatprep.subr.bf16.mxu0 %v1670
        %1748 = vmatpush1.bf16.msra.mxu0 %v1669
        %1749 = vmatprep.subr.bf16.mxu0 %v1700
        %1750 = vmatpush2.bf16.msra.mxu0 %v1699
        %1751 = vmatprep.subr.bf16.mxu0 %v1698
        %1752 = vmatpush2.bf16.msra.mxu0 %v1697
        %1753 = vmatprep.subr.bf16.mxu0 %v1696
        %1754 = vmatpush2.bf16.msra.mxu0 %v1695
        %1755 = vmatprep.subr.bf16.mxu0 %v1694
        %1756 = vmatpush2.bf16.msra.mxu0 %v1693
        %1757 = vmatprep.subr.bf16.mxu0 %v1692
        %1758 = vmatpush2.bf16.msra.mxu0 %v1691
        %1759 = vmatprep.subr.bf16.mxu0 %v1690
        %1760 = vmatpush2.bf16.msra.mxu0 %v1689
        %1761 = vmatprep.subr.bf16.mxu0 %v1688
        %1762 = vmatpush2.bf16.msra.mxu0 %v1687
        %1763 = vmatprep.subr.bf16.mxu0 %v1686
        %1764 = vmatpush2.bf16.msra.mxu0 %v1685
        %1765 = vmatprep.mubr.bf16.mxu0 %v1466
        %1766 = vmatmul.mubr.bf16.gmra.mxu0 %v1465
        %v1767 = vpop.f32.mrf.mxu0
        %v1768 = vadd.f32 %v1566, %v1767
        %v1769 = vpop.f32.mrf.mxu0
        %v1770 = vadd.f32 %v1570, %v1769
        %v1771 = vpop.f32.mrf.mxu0
        %v1772 = vadd.f32 %v1566, %v1771
        %v1773 = vpop.f32.mrf.mxu0
        %v1774 = vadd.f32 %v1570, %v1773
        %1775 = vmatprep.mubr.bf16.mxu0 %v1468
        %1776 = vmatmul.mubr.bf16.gmra.mxu0 %v1467
        %v1777 = vpop.f32.mrf.mxu0
        %v1778 = vadd.f32 %v1566, %v1777
        %v1779 = vpop.f32.mrf.mxu0
        %v1780 = vadd.f32 %v1570, %v1779
        %v1781 = vpop.f32.mrf.mxu0
        %v1782 = vadd.f32 %v1566, %v1781
        %v1783 = vpop.f32.mrf.mxu0
        %v1784 = vadd.f32 %v1570, %v1783
        %1785 = vmatprep.mubr.bf16.mxu0 %v1470
        %1786 = vmatmul.mubr.bf16.gmra.mxu0 %v1469
        %v1787 = vpop.f32.mrf.mxu0
        %v1788 = vadd.f32 %v1566, %v1787
        %v1789 = vpop.f32.mrf.mxu0
        %v1790 = vadd.f32 %v1570, %v1789
        %v1791 = vpop.f32.mrf.mxu0
        %v1792 = vadd.f32 %v1566, %v1791
        %v1793 = vpop.f32.mrf.mxu0
        %v1794 = vadd.f32 %v1570, %v1793
        %1795 = vmatprep.mubr.bf16.mxu0 %v1472
        %1796 = vmatmul.mubr.bf16.gmra.mxu0 %v1471
        %v1797 = vpop.f32.mrf.mxu0
        %v1798 = vadd.f32 %v1566, %v1797
        %v1799 = vpop.f32.mrf.mxu0
        %v1800 = vadd.f32 %v1570, %v1799
        %v1801 = vpop.f32.mrf.mxu0
        %v1802 = vadd.f32 %v1566, %v1801
        %v1803 = vpop.f32.mrf.mxu0
        %v1804 = vadd.f32 %v1570, %v1803
        %1805 = vmatprep.mubr.bf16.mxu0 %v1474
        %1806 = vmatmul.mubr.bf16.gmra.mxu0 %v1473
        %v1807 = vpop.f32.mrf.mxu0
        %v1808 = vadd.f32 %v1566, %v1807
        %v1809 = vpop.f32.mrf.mxu0
        %v1810 = vadd.f32 %v1570, %v1809
        %v1811 = vpop.f32.mrf.mxu0
        %v1812 = vadd.f32 %v1566, %v1811
        %v1813 = vpop.f32.mrf.mxu0
        %v1814 = vadd.f32 %v1570, %v1813
        %1815 = vmatprep.mubr.bf16.mxu0 %v1476
        %1816 = vmatmul.mubr.bf16.gmra.mxu0 %v1475
        %v1817 = vpop.f32.mrf.mxu0
        %v1818 = vadd.f32 %v1566, %v1817
        %v1819 = vpop.f32.mrf.mxu0
        %v1820 = vadd.f32 %v1570, %v1819
        %v1821 = vpop.f32.mrf.mxu0
        %v1822 = vadd.f32 %v1566, %v1821
        %v1823 = vpop.f32.mrf.mxu0
        %v1824 = vadd.f32 %v1570, %v1823
        %1825 = vmatprep.mubr.bf16.mxu0 %v1478
        %1826 = vmatmul.mubr.bf16.gmra.mxu0 %v1477
        %v1827 = vpop.f32.mrf.mxu0
        %v1828 = vadd.f32 %v1566, %v1827
        %v1829 = vpop.f32.mrf.mxu0
        %v1830 = vadd.f32 %v1570, %v1829
        %v1831 = vpop.f32.mrf.mxu0
        %v1832 = vadd.f32 %v1566, %v1831
        %v1833 = vpop.f32.mrf.mxu0
        %v1834 = vadd.f32 %v1570, %v1833
        %1835 = vmatprep.mubr.bf16.mxu0 %v1480
        %1836 = vmatmul.mubr.bf16.gmra.mxu0 %v1479
        %v1837 = vpop.f32.mrf.mxu0
        %v1838 = vadd.f32 %v1566, %v1837
        %v1839 = vpop.f32.mrf.mxu0
        %v1840 = vadd.f32 %v1570, %v1839
        %v1841 = vpop.f32.mrf.mxu0
        %v1842 = vadd.f32 %v1566, %v1841
        %v1843 = vpop.f32.mrf.mxu0
        %v1844 = vadd.f32 %v1570, %v1843
        %1845 = vmatprep.mubr.bf16.mxu0 %v1482
        %1846 = vmatmul.mubr.bf16.gmra.mxu0 %v1481
        %v1847 = vpop.f32.mrf.mxu0
        %v1848 = vadd.f32 %v1566, %v1847
        %v1849 = vpop.f32.mrf.mxu0
        %v1850 = vadd.f32 %v1570, %v1849
        %v1851 = vpop.f32.mrf.mxu0
        %v1852 = vadd.f32 %v1566, %v1851
        %v1853 = vpop.f32.mrf.mxu0
        %v1854 = vadd.f32 %v1570, %v1853
        %1855 = vmatprep.mubr.bf16.mxu0 %v1484
        %1856 = vmatmul.mubr.bf16.gmra.mxu0 %v1483
        %v1857 = vpop.f32.mrf.mxu0
        %v1858 = vadd.f32 %v1566, %v1857
        %v1859 = vpop.f32.mrf.mxu0
        %v1860 = vadd.f32 %v1570, %v1859
        %v1861 = vpop.f32.mrf.mxu0
        %v1862 = vadd.f32 %v1566, %v1861
        %v1863 = vpop.f32.mrf.mxu0
        %v1864 = vadd.f32 %v1570, %v1863
        %1865 = vmatprep.mubr.bf16.mxu0 %v1486
        %1866 = vmatmul.mubr.bf16.gmra.mxu0 %v1485
        %v1867 = vpop.f32.mrf.mxu0
        %v1868 = vadd.f32 %v1566, %v1867
        %v1869 = vpop.f32.mrf.mxu0
        %v1870 = vadd.f32 %v1570, %v1869
        %v1871 = vpop.f32.mrf.mxu0
        %v1872 = vadd.f32 %v1566, %v1871
        %v1873 = vpop.f32.mrf.mxu0
        %v1874 = vadd.f32 %v1570, %v1873
        %1875 = vmatprep.mubr.bf16.mxu0 %v1488
        %1876 = vmatmul.mubr.bf16.gmra.mxu0 %v1487
        %v1877 = vpop.f32.mrf.mxu0
        %v1878 = vadd.f32 %v1566, %v1877
        %v1879 = vpop.f32.mrf.mxu0
        %v1880 = vadd.f32 %v1570, %v1879
        %v1881 = vpop.f32.mrf.mxu0
        %v1882 = vadd.f32 %v1566, %v1881
        %v1883 = vpop.f32.mrf.mxu0
        %v1884 = vadd.f32 %v1570, %v1883
        %1885 = vmatprep.mubr.bf16.mxu0 %v1490
        %1886 = vmatmul.mubr.bf16.gmra.mxu0 %v1489
        %v1887 = vpop.f32.mrf.mxu0
        %v1888 = vadd.f32 %v1566, %v1887
        %v1889 = vpop.f32.mrf.mxu0
        %v1890 = vadd.f32 %v1570, %v1889
        %v1891 = vpop.f32.mrf.mxu0
        %v1892 = vadd.f32 %v1566, %v1891
        %v1893 = vpop.f32.mrf.mxu0
        %v1894 = vadd.f32 %v1570, %v1893
        %1895 = vmatprep.mubr.bf16.mxu0 %v1492
        %1896 = vmatmul.mubr.bf16.gmra.mxu0 %v1491
        %v1897 = vpop.f32.mrf.mxu0
        %v1898 = vadd.f32 %v1566, %v1897
        %v1899 = vpop.f32.mrf.mxu0
        %v1900 = vadd.f32 %v1570, %v1899
        %v1901 = vpop.f32.mrf.mxu0
        %v1902 = vadd.f32 %v1566, %v1901
        %v1903 = vpop.f32.mrf.mxu0
        %v1904 = vadd.f32 %v1570, %v1903
        %1905 = vmatprep.mubr.bf16.mxu0 %v1494
        %1906 = vmatmul.mubr.bf16.gmra.mxu0 %v1493
        %v1907 = vpop.f32.mrf.mxu0
        %v1908 = vadd.f32 %v1566, %v1907
        %v1909 = vpop.f32.mrf.mxu0
        %v1910 = vadd.f32 %v1570, %v1909
        %v1911 = vpop.f32.mrf.mxu0
        %v1912 = vadd.f32 %v1566, %v1911
        %v1913 = vpop.f32.mrf.mxu0
        %v1914 = vadd.f32 %v1570, %v1913
        %1915 = vmatprep.mubr.bf16.mxu0 %v1496
        %1916 = vmatmul.mubr.bf16.gmra.mxu0 %v1495
        %v1917 = vpop.f32.mrf.mxu0
        %v1918 = vadd.f32 %v1566, %v1917
        %v1919 = vpop.f32.mrf.mxu0
        %v1920 = vadd.f32 %v1570, %v1919
        %v1921 = vpop.f32.mrf.mxu0
        %v1922 = vadd.f32 %v1566, %v1921
        %v1923 = vpop.f32.mrf.mxu0
        %v1924 = vadd.f32 %v1570, %v1923
        %1925 = vmatprep.mubr.bf16.mxu0 %v1498
        %1926 = vmatmul.mubr.bf16.gmra.mxu0 %v1497
        %v1927 = vpop.f32.mrf.mxu0
        %v1928 = vadd.f32 %v1566, %v1927
        %v1929 = vpop.f32.mrf.mxu0
        %v1930 = vadd.f32 %v1570, %v1929
        %v1931 = vpop.f32.mrf.mxu0
        %v1932 = vadd.f32 %v1566, %v1931
        %v1933 = vpop.f32.mrf.mxu0
        %v1934 = vadd.f32 %v1570, %v1933
        %1935 = vmatprep.mubr.bf16.mxu0 %v1500
        %1936 = vmatmul.mubr.bf16.gmra.mxu0 %v1499
        %v1937 = vpop.f32.mrf.mxu0
        %v1938 = vadd.f32 %v1566, %v1937
        %v1939 = vpop.f32.mrf.mxu0
        %v1940 = vadd.f32 %v1570, %v1939
        %v1941 = vpop.f32.mrf.mxu0
        %v1942 = vadd.f32 %v1566, %v1941
        %v1943 = vpop.f32.mrf.mxu0
        %v1944 = vadd.f32 %v1570, %v1943
        %1945 = vmatprep.mubr.bf16.mxu0 %v1502
        %1946 = vmatmul.mubr.bf16.gmra.mxu0 %v1501
        %v1947 = vpop.f32.mrf.mxu0
        %v1948 = vadd.f32 %v1566, %v1947
        %v1949 = vpop.f32.mrf.mxu0
        %v1950 = vadd.f32 %v1570, %v1949
        %v1951 = vpop.f32.mrf.mxu0
        %v1952 = vadd.f32 %v1566, %v1951
        %v1953 = vpop.f32.mrf.mxu0
        %v1954 = vadd.f32 %v1570, %v1953
        %1955 = vmatprep.mubr.bf16.mxu0 %v1504
        %1956 = vmatmul.mubr.bf16.gmra.mxu0 %v1503
        %v1957 = vpop.f32.mrf.mxu0
        %v1958 = vadd.f32 %v1566, %v1957
        %v1959 = vpop.f32.mrf.mxu0
        %v1960 = vadd.f32 %v1570, %v1959
        %v1961 = vpop.f32.mrf.mxu0
        %v1962 = vadd.f32 %v1566, %v1961
        %v1963 = vpop.f32.mrf.mxu0
        %v1964 = vadd.f32 %v1570, %v1963
        %1965 = vmatprep.mubr.bf16.mxu0 %v1506
        %1966 = vmatmul.mubr.bf16.gmra.mxu0 %v1505
        %v1967 = vpop.f32.mrf.mxu0
        %v1968 = vadd.f32 %v1566, %v1967
        %v1969 = vpop.f32.mrf.mxu0
        %v1970 = vadd.f32 %v1570, %v1969
        %v1971 = vpop.f32.mrf.mxu0
        %v1972 = vadd.f32 %v1566, %v1971
        %v1973 = vpop.f32.mrf.mxu0
        %v1974 = vadd.f32 %v1570, %v1973
        %1975 = vmatprep.mubr.bf16.mxu0 %v1508
        %1976 = vmatmul.mubr.bf16.gmra.mxu0 %v1507
        %v1977 = vpop.f32.mrf.mxu0
        %v1978 = vadd.f32 %v1566, %v1977
        %v1979 = vpop.f32.mrf.mxu0
        %v1980 = vadd.f32 %v1570, %v1979
        %v1981 = vpop.f32.mrf.mxu0
        %v1982 = vadd.f32 %v1566, %v1981
        %v1983 = vpop.f32.mrf.mxu0
        %v1984 = vadd.f32 %v1570, %v1983
        %1985 = vmatprep.mubr.bf16.mxu0 %v1510
        %1986 = vmatmul.mubr.bf16.gmra.mxu0 %v1509
        %v1987 = vpop.f32.mrf.mxu0
        %v1988 = vadd.f32 %v1566, %v1987
        %v1989 = vpop.f32.mrf.mxu0
        %v1990 = vadd.f32 %v1570, %v1989
        %v1991 = vpop.f32.mrf.mxu0
        %v1992 = vadd.f32 %v1566, %v1991
        %v1993 = vpop.f32.mrf.mxu0
        %v1994 = vadd.f32 %v1570, %v1993
        %1995 = vmatprep.mubr.bf16.mxu0 %v1512
        %1996 = vmatmul.mubr.bf16.gmra.mxu0 %v1511
        %v1997 = vpop.f32.mrf.mxu0
        %v1998 = vadd.f32 %v1566, %v1997
        %v1999 = vpop.f32.mrf.mxu0
        %v2000 = vadd.f32 %v1570, %v1999
        %v2001 = vpop.f32.mrf.mxu0
        %v2002 = vadd.f32 %v1566, %v2001
        %v2003 = vpop.f32.mrf.mxu0
        %v2004 = vadd.f32 %v1570, %v2003
        %2005 = vmatprep.mubr.bf16.mxu0 %v1514
        %2006 = vmatmul.mubr.bf16.gmra.mxu0 %v1513
        %v2007 = vpop.f32.mrf.mxu0
        %v2008 = vadd.f32 %v1566, %v2007
        %v2009 = vpop.f32.mrf.mxu0
        %v2010 = vadd.f32 %v1570, %v2009
        %v2011 = vpop.f32.mrf.mxu0
        %v2012 = vadd.f32 %v1566, %v2011
        %v2013 = vpop.f32.mrf.mxu0
        %v2014 = vadd.f32 %v1570, %v2013
        %2015 = vmatprep.mubr.bf16.mxu0 %v1516
        %2016 = vmatmul.mubr.bf16.gmra.mxu0 %v1515
        %v2017 = vpop.f32.mrf.mxu0
        %v2018 = vadd.f32 %v1566, %v2017
        %v2019 = vpop.f32.mrf.mxu0
        %v2020 = vadd.f32 %v1570, %v2019
        %v2021 = vpop.f32.mrf.mxu0
        %v2022 = vadd.f32 %v1566, %v2021
        %v2023 = vpop.f32.mrf.mxu0
        %v2024 = vadd.f32 %v1570, %v2023
        %2025 = vmatprep.mubr.bf16.mxu0 %v1518
        %2026 = vmatmul.mubr.bf16.gmra.mxu0 %v1517
        %v2027 = vpop.f32.mrf.mxu0
        %v2028 = vadd.f32 %v1566, %v2027
        %v2029 = vpop.f32.mrf.mxu0
        %v2030 = vadd.f32 %v1570, %v2029
        %v2031 = vpop.f32.mrf.mxu0
        %v2032 = vadd.f32 %v1566, %v2031
        %v2033 = vpop.f32.mrf.mxu0
        %v2034 = vadd.f32 %v1570, %v2033
        %2035 = vmatprep.mubr.bf16.mxu0 %v1520
        %2036 = vmatmul.mubr.bf16.gmra.mxu0 %v1519
        %v2037 = vpop.f32.mrf.mxu0
        %v2038 = vadd.f32 %v1566, %v2037
        %v2039 = vpop.f32.mrf.mxu0
        %v2040 = vadd.f32 %v1570, %v2039
        %v2041 = vpop.f32.mrf.mxu0
        %v2042 = vadd.f32 %v1566, %v2041
        %v2043 = vpop.f32.mrf.mxu0
        %v2044 = vadd.f32 %v1570, %v2043
        %2045 = vmatprep.mubr.bf16.mxu0 %v1522
        %2046 = vmatmul.mubr.bf16.gmra.mxu0 %v1521
        %v2047 = vpop.f32.mrf.mxu0
        %v2048 = vadd.f32 %v1566, %v2047
        %v2049 = vpop.f32.mrf.mxu0
        %v2050 = vadd.f32 %v1570, %v2049
        %v2051 = vpop.f32.mrf.mxu0
        %v2052 = vadd.f32 %v1566, %v2051
        %v2053 = vpop.f32.mrf.mxu0
        %v2054 = vadd.f32 %v1570, %v2053
        %2055 = vmatprep.mubr.bf16.mxu0 %v1524
        %2056 = vmatmul.mubr.bf16.gmra.mxu0 %v1523
        %v2057 = vpop.f32.mrf.mxu0
        %v2058 = vadd.f32 %v1566, %v2057
        %v2059 = vpop.f32.mrf.mxu0
        %v2060 = vadd.f32 %v1570, %v2059
        %v2061 = vpop.f32.mrf.mxu0
        %v2062 = vadd.f32 %v1566, %v2061
        %v2063 = vpop.f32.mrf.mxu0
        %v2064 = vadd.f32 %v1570, %v2063
        %2065 = vmatprep.mubr.bf16.mxu0 %v1526
        %2066 = vmatmul.mubr.bf16.gmra.mxu0 %v1525
        %v2067 = vpop.f32.mrf.mxu0
        %v2068 = vadd.f32 %v1566, %v2067
        %v2069 = vpop.f32.mrf.mxu0
        %v2070 = vadd.f32 %v1570, %v2069
        %v2071 = vpop.f32.mrf.mxu0
        %v2072 = vadd.f32 %v1566, %v2071
        %v2073 = vpop.f32.mrf.mxu0
        %v2074 = vadd.f32 %v1570, %v2073
        %2075 = vmatprep.mubr.bf16.mxu0 %v1528
        %2076 = vmatmul.mubr.bf16.gmra.mxu0 %v1527
        %v2077 = vpop.f32.mrf.mxu0
        %v2078 = vadd.f32 %v1566, %v2077
        %v2079 = vpop.f32.mrf.mxu0
        %v2080 = vadd.f32 %v1570, %v2079
        %v2081 = vpop.f32.mrf.mxu0
        %v2082 = vadd.f32 %v1566, %v2081
        %v2083 = vpop.f32.mrf.mxu0
        %v2084 = vadd.f32 %v1570, %v2083
        %2085 = vdwg.mxu0
        %v2086 = vmax.f32 %v1768, 0.0
        %v2087 = vmax.f32 %v1770, 0.0
        %v2088 = vmax.f32 %v1772, 0.0
        %v2089 = vmax.f32 %v1774, 0.0
        %v2090 = vmax.f32 %v1778, 0.0
        %v2091 = vmax.f32 %v1780, 0.0
        %v2092 = vmax.f32 %v1782, 0.0
        %v2093 = vmax.f32 %v1784, 0.0
        %v2094 = vmax.f32 %v1788, 0.0
        %v2095 = vmax.f32 %v1790, 0.0
        %v2096 = vmax.f32 %v1792, 0.0
        %v2097 = vmax.f32 %v1794, 0.0
        %v2098 = vmax.f32 %v1798, 0.0
        %v2099 = vmax.f32 %v1800, 0.0
        %v2100 = vmax.f32 %v1802, 0.0
        %v2101 = vmax.f32 %v1804, 0.0
        %v2102 = vmax.f32 %v1808, 0.0
        %v2103 = vmax.f32 %v1810, 0.0
        %v2104 = vmax.f32 %v1812, 0.0
        %v2105 = vmax.f32 %v1814, 0.0
        %v2106 = vmax.f32 %v1818, 0.0
        %v2107 = vmax.f32 %v1820, 0.0
        %v2108 = vmax.f32 %v1822, 0.0
        %v2109 = vmax.f32 %v1824, 0.0
        %v2110 = vmax.f32 %v1828, 0.0
        %v2111 = vmax.f32 %v1830, 0.0
        %v2112 = vmax.f32 %v1832, 0.0
        %v2113 = vmax.f32 %v1834, 0.0
        %v2114 = vmax.f32 %v1838, 0.0
        %v2115 = vmax.f32 %v1840, 0.0
        %v2116 = vmax.f32 %v1842, 0.0
        %v2117 = vmax.f32 %v1844, 0.0
        %v2118 = vmax.f32 %v1848, 0.0
        %v2119 = vmax.f32 %v1850, 0.0
        %v2120 = vmax.f32 %v1852, 0.0
        %v2121 = vmax.f32 %v1854, 0.0
        %v2122 = vmax.f32 %v1858, 0.0
        %v2123 = vmax.f32 %v1860, 0.0
        %v2124 = vmax.f32 %v1862, 0.0
        %v2125 = vmax.f32 %v1864, 0.0
        %v2126 = vmax.f32 %v1868, 0.0
        %v2127 = vmax.f32 %v1870, 0.0
        %v2128 = vmax.f32 %v1872, 0.0
        %v2129 = vmax.f32 %v1874, 0.0
        %v2130 = vmax.f32 %v1878, 0.0
        %v2131 = vmax.f32 %v1880, 0.0
        %v2132 = vmax.f32 %v1882, 0.0
        %v2133 = vmax.f32 %v1884, 0.0
        %v2134 = vmax.f32 %v1888, 0.0
        %v2135 = vmax.f32 %v1890, 0.0
        %v2136 = vmax.f32 %v1892, 0.0
        %v2137 = vmax.f32 %v1894, 0.0
        %v2138 = vmax.f32 %v1898, 0.0
        %v2139 = vmax.f32 %v1900, 0.0
        %v2140 = vmax.f32 %v1902, 0.0
        %v2141 = vmax.f32 %v1904, 0.0
        %v2142 = vmax.f32 %v1908, 0.0
        %v2143 = vmax.f32 %v1910, 0.0
        %v2144 = vmax.f32 %v1912, 0.0
        %v2145 = vmax.f32 %v1914, 0.0
        %v2146 = vmax.f32 %v1918, 0.0
        %v2147 = vmax.f32 %v1920, 0.0
        %v2148 = vmax.f32 %v1922, 0.0
        %v2149 = vmax.f32 %v1924, 0.0
        %v2150 = vmax.f32 %v1928, 0.0
        %v2151 = vmax.f32 %v1930, 0.0
        %v2152 = vmax.f32 %v1932, 0.0
        %v2153 = vmax.f32 %v1934, 0.0
        %v2154 = vmax.f32 %v1938, 0.0
        %v2155 = vmax.f32 %v1940, 0.0
        %v2156 = vmax.f32 %v1942, 0.0
        %v2157 = vmax.f32 %v1944, 0.0
        %v2158 = vmax.f32 %v1948, 0.0
        %v2159 = vmax.f32 %v1950, 0.0
        %v2160 = vmax.f32 %v1952, 0.0
        %v2161 = vmax.f32 %v1954, 0.0
        %v2162 = vmax.f32 %v1958, 0.0
        %v2163 = vmax.f32 %v1960, 0.0
        %v2164 = vmax.f32 %v1962, 0.0
        %v2165 = vmax.f32 %v1964, 0.0
        %v2166 = vmax.f32 %v1968, 0.0
        %v2167 = vmax.f32 %v1970, 0.0
        %v2168 = vmax.f32 %v1972, 0.0
        %v2169 = vmax.f32 %v1974, 0.0
        %v2170 = vmax.f32 %v1978, 0.0
        %v2171 = vmax.f32 %v1980, 0.0
        %v2172 = vmax.f32 %v1982, 0.0
        %v2173 = vmax.f32 %v1984, 0.0
        %v2174 = vmax.f32 %v1988, 0.0
        %v2175 = vmax.f32 %v1990, 0.0
        %v2176 = vmax.f32 %v1992, 0.0
        %v2177 = vmax.f32 %v1994, 0.0
        %v2178 = vmax.f32 %v1998, 0.0
        %v2179 = vmax.f32 %v2000, 0.0
        %v2180 = vmax.f32 %v2002, 0.0
        %v2181 = vmax.f32 %v2004, 0.0
        %v2182 = vmax.f32 %v2008, 0.0
        %v2183 = vmax.f32 %v2010, 0.0
        %v2184 = vmax.f32 %v2012, 0.0
        %v2185 = vmax.f32 %v2014, 0.0
        %v2186 = vmax.f32 %v2018, 0.0
        %v2187 = vmax.f32 %v2020, 0.0
        %v2188 = vmax.f32 %v2022, 0.0
        %v2189 = vmax.f32 %v2024, 0.0
        %v2190 = vmax.f32 %v2028, 0.0
        %v2191 = vmax.f32 %v2030, 0.0
        %v2192 = vmax.f32 %v2032, 0.0
        %v2193 = vmax.f32 %v2034, 0.0
        %v2194 = vmax.f32 %v2038, 0.0
        %v2195 = vmax.f32 %v2040, 0.0
        %v2196 = vmax.f32 %v2042, 0.0
        %v2197 = vmax.f32 %v2044, 0.0
        %v2198 = vmax.f32 %v2048, 0.0
        %v2199 = vmax.f32 %v2050, 0.0
        %v2200 = vmax.f32 %v2052, 0.0
        %v2201 = vmax.f32 %v2054, 0.0
        %v2202 = vmax.f32 %v2058, 0.0
        %v2203 = vmax.f32 %v2060, 0.0
        %v2204 = vmax.f32 %v2062, 0.0
        %v2205 = vmax.f32 %v2064, 0.0
        %v2206 = vmax.f32 %v2068, 0.0
        %v2207 = vmax.f32 %v2070, 0.0
        %v2208 = vmax.f32 %v2072, 0.0
        %v2209 = vmax.f32 %v2074, 0.0
        %v2210 = vmax.f32 %v2078, 0.0
        %v2211 = vmax.f32 %v2080, 0.0
        %v2212 = vmax.f32 %v2082, 0.0
        %v2213 = vmax.f32 %v2084, 0.0
        %v2214 = vpack.c.bf16 %v2088, %v2086
        %v2215 = vpack.c.bf16 %v2089, %v2087
        %v2216 = vpack.c.bf16 %v2092, %v2090
        %v2217 = vpack.c.bf16 %v2093, %v2091
        %v2218 = vpack.c.bf16 %v2096, %v2094
        %v2219 = vpack.c.bf16 %v2097, %v2095
        %v2220 = vpack.c.bf16 %v2100, %v2098
        %v2221 = vpack.c.bf16 %v2101, %v2099
        %v2222 = vpack.c.bf16 %v2104, %v2102
        %v2223 = vpack.c.bf16 %v2105, %v2103
        %v2224 = vpack.c.bf16 %v2108, %v2106
        %v2225 = vpack.c.bf16 %v2109, %v2107
        %v2226 = vpack.c.bf16 %v2112, %v2110
        %v2227 = vpack.c.bf16 %v2113, %v2111
        %v2228 = vpack.c.bf16 %v2116, %v2114
        %v2229 = vpack.c.bf16 %v2117, %v2115
        %v2230 = vpack.c.bf16 %v2120, %v2118
        %v2231 = vpack.c.bf16 %v2121, %v2119
        %v2232 = vpack.c.bf16 %v2124, %v2122
        %v2233 = vpack.c.bf16 %v2125, %v2123
        %v2234 = vpack.c.bf16 %v2128, %v2126
        %v2235 = vpack.c.bf16 %v2129, %v2127
        %v2236 = vpack.c.bf16 %v2132, %v2130
        %v2237 = vpack.c.bf16 %v2133, %v2131
        %v2238 = vpack.c.bf16 %v2136, %v2134
        %v2239 = vpack.c.bf16 %v2137, %v2135
        %v2240 = vpack.c.bf16 %v2140, %v2138
        %v2241 = vpack.c.bf16 %v2141, %v2139
        %v2242 = vpack.c.bf16 %v2144, %v2142
        %v2243 = vpack.c.bf16 %v2145, %v2143
        %v2244 = vpack.c.bf16 %v2148, %v2146
        %v2245 = vpack.c.bf16 %v2149, %v2147
        %v2246 = vpack.c.bf16 %v2152, %v2150
        %v2247 = vpack.c.bf16 %v2153, %v2151
        %v2248 = vpack.c.bf16 %v2156, %v2154
        %v2249 = vpack.c.bf16 %v2157, %v2155
        %v2250 = vpack.c.bf16 %v2160, %v2158
        %v2251 = vpack.c.bf16 %v2161, %v2159
        %v2252 = vpack.c.bf16 %v2164, %v2162
        %v2253 = vpack.c.bf16 %v2165, %v2163
        %v2254 = vpack.c.bf16 %v2168, %v2166
        %v2255 = vpack.c.bf16 %v2169, %v2167
        %v2256 = vpack.c.bf16 %v2172, %v2170
        %v2257 = vpack.c.bf16 %v2173, %v2171
        %v2258 = vpack.c.bf16 %v2176, %v2174
        %v2259 = vpack.c.bf16 %v2177, %v2175
        %v2260 = vpack.c.bf16 %v2180, %v2178
        %v2261 = vpack.c.bf16 %v2181, %v2179
        %v2262 = vpack.c.bf16 %v2184, %v2182
        %v2263 = vpack.c.bf16 %v2185, %v2183
        %v2264 = vpack.c.bf16 %v2188, %v2186
        %v2265 = vpack.c.bf16 %v2189, %v2187
        %v2266 = vpack.c.bf16 %v2192, %v2190
        %v2267 = vpack.c.bf16 %v2193, %v2191
        %v2268 = vpack.c.bf16 %v2196, %v2194
        %v2269 = vpack.c.bf16 %v2197, %v2195
        %v2270 = vpack.c.bf16 %v2200, %v2198
        %v2271 = vpack.c.bf16 %v2201, %v2199
        %v2272 = vpack.c.bf16 %v2204, %v2202
        %v2273 = vpack.c.bf16 %v2205, %v2203
        %v2274 = vpack.c.bf16 %v2208, %v2206
        %v2275 = vpack.c.bf16 %v2209, %v2207
        %v2276 = vpack.c.bf16 %v2212, %v2210
        %v2277 = vpack.c.bf16 %v2213, %v2211
        %v2278 = vld [vmem:[#allocation8] sm:$0xff]
        %v2279 = vld [vmem:[#allocation8 + $0x8] sm:$0xff]
        %v2280 = vld [vmem:[#allocation8 + $0x10] sm:$0xff]
        %v2281 = vld [vmem:[#allocation8 + $0x18] sm:$0xff]
        %v2282 = vld [vmem:[#allocation8 + $0x20] sm:$0xff]
        %v2283 = vld [vmem:[#allocation8 + $0x28] sm:$0xff]
        %v2284 = vld [vmem:[#allocation8 + $0x30] sm:$0xff]
        %v2285 = vld [vmem:[#allocation8 + $0x38] sm:$0xff]
        %v2286 = vld [vmem:[#allocation8 + $0x40] sm:$0xff]
        %v2287 = vld [vmem:[#allocation8 + $0x48] sm:$0xff]
        %v2288 = vld [vmem:[#allocation8 + $0x50] sm:$0xff]
        %v2289 = vld [vmem:[#allocation8 + $0x58] sm:$0xff]
        %v2290 = vld [vmem:[#allocation8 + $0x60] sm:$0xff]
        %v2291 = vld [vmem:[#allocation8 + $0x68] sm:$0xff]
        %v2292 = vld [vmem:[#allocation8 + $0x70] sm:$0xff]
        %v2293 = vld [vmem:[#allocation8 + $0x78] sm:$0xff]
        %v2294 = vld [vmem:[#allocation8 + $0x80] sm:$0xff]
        %v2295 = vld [vmem:[#allocation8 + $0x88] sm:$0xff]
        %v2296 = vld [vmem:[#allocation8 + $0x90] sm:$0xff]
        %v2297 = vld [vmem:[#allocation8 + $0x98] sm:$0xff]
        %v2298 = vld [vmem:[#allocation8 + $0xa0] sm:$0xff]
        %v2299 = vld [vmem:[#allocation8 + $0xa8] sm:$0xff]
        %v2300 = vld [vmem:[#allocation8 + $0xb0] sm:$0xff]
        %v2301 = vld [vmem:[#allocation8 + $0xb8] sm:$0xff]
        %v2302 = vld [vmem:[#allocation8 + $0xc0] sm:$0xff]
        %v2303 = vld [vmem:[#allocation8 + $0xc8] sm:$0xff]
        %v2304 = vld [vmem:[#allocation8 + $0xd0] sm:$0xff]
        %v2305 = vld [vmem:[#allocation8 + $0xd8] sm:$0xff]
        %v2306 = vld [vmem:[#allocation8 + $0xe0] sm:$0xff]
        %v2307 = vld [vmem:[#allocation8 + $0xe8] sm:$0xff]
        %v2308 = vld [vmem:[#allocation8 + $0xf0] sm:$0xff]
        %v2309 = vld [vmem:[#allocation8 + $0xf8] sm:$0xff]
        %v2310 = vld [vmem:[%s6] sm:$0x3]
        %v2312 = vlaneseq
        %v2313 = vshrl.u32 %v2312, 7
        %v2314 = vsub.s32 0, %v2313
        %v2315 = vrot.slane %v2310, %v2314
        %v2316 = vlaneseq
        %v2317 = vshrl.u32 %v2316, 7
        %v2318 = vsub.s32 1, %v2317
        %v2319 = vrot.slane %v2310, %v2318
        %v2354 = vunpack.c.l.b16 %v2278
        %v2355 = vunpack.c.h.b16 %v2278
        %v2356 = vunpack.c.l.b16 %v2279
        %v2357 = vunpack.c.h.b16 %v2279
        %v2358 = vunpack.c.l.b16 %v2280
        %v2359 = vunpack.c.h.b16 %v2280
        %v2360 = vunpack.c.l.b16 %v2281
        %v2361 = vunpack.c.h.b16 %v2281
        %v2362 = vunpack.c.l.b16 %v2282
        %v2363 = vunpack.c.h.b16 %v2282
        %v2364 = vunpack.c.l.b16 %v2283
        %v2365 = vunpack.c.h.b16 %v2283
        %v2366 = vunpack.c.l.b16 %v2284
        %v2367 = vunpack.c.h.b16 %v2284
        %v2368 = vunpack.c.l.b16 %v2285
        %v2369 = vunpack.c.h.b16 %v2285
        %v2370 = vunpack.c.l.b16 %v2286
        %v2371 = vunpack.c.h.b16 %v2286
        %v2372 = vunpack.c.l.b16 %v2287
        %v2373 = vunpack.c.h.b16 %v2287
        %v2374 = vunpack.c.l.b16 %v2288
        %v2375 = vunpack.c.h.b16 %v2288
        %v2376 = vunpack.c.l.b16 %v2289
        %v2377 = vunpack.c.h.b16 %v2289
        %v2378 = vunpack.c.l.b16 %v2290
        %v2379 = vunpack.c.h.b16 %v2290
        %v2380 = vunpack.c.l.b16 %v2291
        %v2381 = vunpack.c.h.b16 %v2291
        %v2382 = vunpack.c.l.b16 %v2292
        %v2383 = vunpack.c.h.b16 %v2292
        %v2384 = vunpack.c.l.b16 %v2293
        %v2385 = vunpack.c.h.b16 %v2293
        %v2386 = vunpack.c.l.b16 %v2294
        %v2387 = vunpack.c.h.b16 %v2294
        %v2388 = vunpack.c.l.b16 %v2295
        %v2389 = vunpack.c.h.b16 %v2295
        %v2390 = vunpack.c.l.b16 %v2296
        %v2391 = vunpack.c.h.b16 %v2296
        %v2392 = vunpack.c.l.b16 %v2297
        %v2393 = vunpack.c.h.b16 %v2297
        %v2394 = vunpack.c.l.b16 %v2298
        %v2395 = vunpack.c.h.b16 %v2298
        %v2396 = vunpack.c.l.b16 %v2299
        %v2397 = vunpack.c.h.b16 %v2299
        %v2398 = vunpack.c.l.b16 %v2300
        %v2399 = vunpack.c.h.b16 %v2300
        %v2400 = vunpack.c.l.b16 %v2301
        %v2401 = vunpack.c.h.b16 %v2301
        %v2402 = vunpack.c.l.b16 %v2302
        %v2403 = vunpack.c.h.b16 %v2302
        %v2404 = vunpack.c.l.b16 %v2303
        %v2405 = vunpack.c.h.b16 %v2303
        %v2406 = vunpack.c.l.b16 %v2304
        %v2407 = vunpack.c.h.b16 %v2304
        %v2408 = vunpack.c.l.b16 %v2305
        %v2409 = vunpack.c.h.b16 %v2305
        %v2410 = vunpack.c.l.b16 %v2306
        %v2411 = vunpack.c.h.b16 %v2306
        %v2412 = vunpack.c.l.b16 %v2307
        %v2413 = vunpack.c.h.b16 %v2307
        %v2414 = vunpack.c.l.b16 %v2308
        %v2415 = vunpack.c.h.b16 %v2308
        %v2416 = vunpack.c.l.b16 %v2309
        %v2417 = vunpack.c.h.b16 %v2309
        %v2418 = vpack.c.b16 %v2356, %v2354
        %v2419 = vpack.c.b16 %v2357, %v2355
        %v2420 = vpack.c.b16 %v2360, %v2358
        %v2421 = vpack.c.b16 %v2361, %v2359
        %v2422 = vpack.c.b16 %v2364, %v2362
        %v2423 = vpack.c.b16 %v2365, %v2363
        %v2424 = vpack.c.b16 %v2368, %v2366
        %v2425 = vpack.c.b16 %v2369, %v2367
        %v2426 = vpack.c.b16 %v2372, %v2370
        %v2427 = vpack.c.b16 %v2373, %v2371
        %v2428 = vpack.c.b16 %v2376, %v2374
        %v2429 = vpack.c.b16 %v2377, %v2375
        %v2430 = vpack.c.b16 %v2380, %v2378
        %v2431 = vpack.c.b16 %v2381, %v2379
        %v2432 = vpack.c.b16 %v2384, %v2382
        %v2433 = vpack.c.b16 %v2385, %v2383
        %v2434 = vpack.c.b16 %v2388, %v2386
        %v2435 = vpack.c.b16 %v2389, %v2387
        %v2436 = vpack.c.b16 %v2392, %v2390
        %v2437 = vpack.c.b16 %v2393, %v2391
        %v2438 = vpack.c.b16 %v2396, %v2394
        %v2439 = vpack.c.b16 %v2397, %v2395
        %v2440 = vpack.c.b16 %v2400, %v2398
        %v2441 = vpack.c.b16 %v2401, %v2399
        %v2442 = vpack.c.b16 %v2404, %v2402
        %v2443 = vpack.c.b16 %v2405, %v2403
        %v2444 = vpack.c.b16 %v2408, %v2406
        %v2445 = vpack.c.b16 %v2409, %v2407
        %v2446 = vpack.c.b16 %v2412, %v2410
        %v2447 = vpack.c.b16 %v2413, %v2411
        %v2448 = vpack.c.b16 %v2416, %v2414
        %v2449 = vpack.c.b16 %v2417, %v2415
        %2482 = vmatprep.subr.bf16.mxu0 %v2433
        %2483 = vmatpush1.bf16.msra.mxu0 %v2432
        %2484 = vmatprep.subr.bf16.mxu0 %v2431
        %2485 = vmatpush1.bf16.msra.mxu0 %v2430
        %2486 = vmatprep.subr.bf16.mxu0 %v2429
        %2487 = vmatpush1.bf16.msra.mxu0 %v2428
        %2488 = vmatprep.subr.bf16.mxu0 %v2427
        %2489 = vmatpush1.bf16.msra.mxu0 %v2426
        %2490 = vmatprep.subr.bf16.mxu0 %v2425
        %2491 = vmatpush1.bf16.msra.mxu0 %v2424
        %2492 = vmatprep.subr.bf16.mxu0 %v2423
        %2493 = vmatpush1.bf16.msra.mxu0 %v2422
        %2494 = vmatprep.subr.bf16.mxu0 %v2421
        %2495 = vmatpush1.bf16.msra.mxu0 %v2420
        %2496 = vmatprep.subr.bf16.mxu0 %v2419
        %2497 = vmatpush1.bf16.msra.mxu0 %v2418
        %2498 = vmatprep.subr.bf16.mxu0 %v2449
        %2499 = vmatpush2.bf16.msra.mxu0 %v2448
        %2500 = vmatprep.subr.bf16.mxu0 %v2447
        %2501 = vmatpush2.bf16.msra.mxu0 %v2446
        %2502 = vmatprep.subr.bf16.mxu0 %v2445
        %2503 = vmatpush2.bf16.msra.mxu0 %v2444
        %2504 = vmatprep.subr.bf16.mxu0 %v2443
        %2505 = vmatpush2.bf16.msra.mxu0 %v2442
        %2506 = vmatprep.subr.bf16.mxu0 %v2441
        %2507 = vmatpush2.bf16.msra.mxu0 %v2440
        %2508 = vmatprep.subr.bf16.mxu0 %v2439
        %2509 = vmatpush2.bf16.msra.mxu0 %v2438
        %2510 = vmatprep.subr.bf16.mxu0 %v2437
        %2511 = vmatpush2.bf16.msra.mxu0 %v2436
        %2512 = vmatprep.subr.bf16.mxu0 %v2435
        %2513 = vmatpush2.bf16.msra.mxu0 %v2434
        %2514 = vmatprep.mubr.bf16.mxu0 %v2215
        %2515 = vmatmul.mubr.bf16.gmra.mxu0 %v2214
        %v2516 = vpop.f32.mrf.mxu0
        %v2517 = vadd.f32 %v2315, %v2516
        %v2518 = vpop.f32.mrf.mxu0
        %v2519 = vadd.f32 %v2319, %v2518
        %v2520 = vpop.f32.mrf.mxu0
        %v2521 = vadd.f32 %v2315, %v2520
        %v2522 = vpop.f32.mrf.mxu0
        %v2523 = vadd.f32 %v2319, %v2522
        %2524 = vmatprep.mubr.bf16.mxu0 %v2217
        %2525 = vmatmul.mubr.bf16.gmra.mxu0 %v2216
        %v2526 = vpop.f32.mrf.mxu0
        %v2527 = vadd.f32 %v2315, %v2526
        %v2528 = vpop.f32.mrf.mxu0
        %v2529 = vadd.f32 %v2319, %v2528
        %v2530 = vpop.f32.mrf.mxu0
        %v2531 = vadd.f32 %v2315, %v2530
        %v2532 = vpop.f32.mrf.mxu0
        %v2533 = vadd.f32 %v2319, %v2532
        %2534 = vmatprep.mubr.bf16.mxu0 %v2219
        %2535 = vmatmul.mubr.bf16.gmra.mxu0 %v2218
        %v2536 = vpop.f32.mrf.mxu0
        %v2537 = vadd.f32 %v2315, %v2536
        %v2538 = vpop.f32.mrf.mxu0
        %v2539 = vadd.f32 %v2319, %v2538
        %v2540 = vpop.f32.mrf.mxu0
        %v2541 = vadd.f32 %v2315, %v2540
        %v2542 = vpop.f32.mrf.mxu0
        %v2543 = vadd.f32 %v2319, %v2542
        %2544 = vmatprep.mubr.bf16.mxu0 %v2221
        %2545 = vmatmul.mubr.bf16.gmra.mxu0 %v2220
        %v2546 = vpop.f32.mrf.mxu0
        %v2547 = vadd.f32 %v2315, %v2546
        %v2548 = vpop.f32.mrf.mxu0
        %v2549 = vadd.f32 %v2319, %v2548
        %v2550 = vpop.f32.mrf.mxu0
        %v2551 = vadd.f32 %v2315, %v2550
        %v2552 = vpop.f32.mrf.mxu0
        %v2553 = vadd.f32 %v2319, %v2552
        %2554 = vmatprep.mubr.bf16.mxu0 %v2223
        %2555 = vmatmul.mubr.bf16.gmra.mxu0 %v2222
        %v2556 = vpop.f32.mrf.mxu0
        %v2557 = vadd.f32 %v2315, %v2556
        %v2558 = vpop.f32.mrf.mxu0
        %v2559 = vadd.f32 %v2319, %v2558
        %v2560 = vpop.f32.mrf.mxu0
        %v2561 = vadd.f32 %v2315, %v2560
        %v2562 = vpop.f32.mrf.mxu0
        %v2563 = vadd.f32 %v2319, %v2562
        %2564 = vmatprep.mubr.bf16.mxu0 %v2225
        %2565 = vmatmul.mubr.bf16.gmra.mxu0 %v2224
        %v2566 = vpop.f32.mrf.mxu0
        %v2567 = vadd.f32 %v2315, %v2566
        %v2568 = vpop.f32.mrf.mxu0
        %v2569 = vadd.f32 %v2319, %v2568
        %v2570 = vpop.f32.mrf.mxu0
        %v2571 = vadd.f32 %v2315, %v2570
        %v2572 = vpop.f32.mrf.mxu0
        %v2573 = vadd.f32 %v2319, %v2572
        %2574 = vmatprep.mubr.bf16.mxu0 %v2227
        %2575 = vmatmul.mubr.bf16.gmra.mxu0 %v2226
        %v2576 = vpop.f32.mrf.mxu0
        %v2577 = vadd.f32 %v2315, %v2576
        %v2578 = vpop.f32.mrf.mxu0
        %v2579 = vadd.f32 %v2319, %v2578
        %v2580 = vpop.f32.mrf.mxu0
        %v2581 = vadd.f32 %v2315, %v2580
        %v2582 = vpop.f32.mrf.mxu0
        %v2583 = vadd.f32 %v2319, %v2582
        %2584 = vmatprep.mubr.bf16.mxu0 %v2229
        %2585 = vmatmul.mubr.bf16.gmra.mxu0 %v2228
        %v2586 = vpop.f32.mrf.mxu0
        %v2587 = vadd.f32 %v2315, %v2586
        %v2588 = vpop.f32.mrf.mxu0
        %v2589 = vadd.f32 %v2319, %v2588
        %v2590 = vpop.f32.mrf.mxu0
        %v2591 = vadd.f32 %v2315, %v2590
        %v2592 = vpop.f32.mrf.mxu0
        %v2593 = vadd.f32 %v2319, %v2592
        %2594 = vmatprep.mubr.bf16.mxu0 %v2231
        %2595 = vmatmul.mubr.bf16.gmra.mxu0 %v2230
        %v2596 = vpop.f32.mrf.mxu0
        %v2597 = vadd.f32 %v2315, %v2596
        %v2598 = vpop.f32.mrf.mxu0
        %v2599 = vadd.f32 %v2319, %v2598
        %v2600 = vpop.f32.mrf.mxu0
        %v2601 = vadd.f32 %v2315, %v2600
        %v2602 = vpop.f32.mrf.mxu0
        %v2603 = vadd.f32 %v2319, %v2602
        %2604 = vmatprep.mubr.bf16.mxu0 %v2233
        %2605 = vmatmul.mubr.bf16.gmra.mxu0 %v2232
        %v2606 = vpop.f32.mrf.mxu0
        %v2607 = vadd.f32 %v2315, %v2606
        %v2608 = vpop.f32.mrf.mxu0
        %v2609 = vadd.f32 %v2319, %v2608
        %v2610 = vpop.f32.mrf.mxu0
        %v2611 = vadd.f32 %v2315, %v2610
        %v2612 = vpop.f32.mrf.mxu0
        %v2613 = vadd.f32 %v2319, %v2612
        %2614 = vmatprep.mubr.bf16.mxu0 %v2235
        %2615 = vmatmul.mubr.bf16.gmra.mxu0 %v2234
        %v2616 = vpop.f32.mrf.mxu0
        %v2617 = vadd.f32 %v2315, %v2616
        %v2618 = vpop.f32.mrf.mxu0
        %v2619 = vadd.f32 %v2319, %v2618
        %v2620 = vpop.f32.mrf.mxu0
        %v2621 = vadd.f32 %v2315, %v2620
        %v2622 = vpop.f32.mrf.mxu0
        %v2623 = vadd.f32 %v2319, %v2622
        %2624 = vmatprep.mubr.bf16.mxu0 %v2237
        %2625 = vmatmul.mubr.bf16.gmra.mxu0 %v2236
        %v2626 = vpop.f32.mrf.mxu0
        %v2627 = vadd.f32 %v2315, %v2626
        %v2628 = vpop.f32.mrf.mxu0
        %v2629 = vadd.f32 %v2319, %v2628
        %v2630 = vpop.f32.mrf.mxu0
        %v2631 = vadd.f32 %v2315, %v2630
        %v2632 = vpop.f32.mrf.mxu0
        %v2633 = vadd.f32 %v2319, %v2632
        %2634 = vmatprep.mubr.bf16.mxu0 %v2239
        %2635 = vmatmul.mubr.bf16.gmra.mxu0 %v2238
        %v2636 = vpop.f32.mrf.mxu0
        %v2637 = vadd.f32 %v2315, %v2636
        %v2638 = vpop.f32.mrf.mxu0
        %v2639 = vadd.f32 %v2319, %v2638
        %v2640 = vpop.f32.mrf.mxu0
        %v2641 = vadd.f32 %v2315, %v2640
        %v2642 = vpop.f32.mrf.mxu0
        %v2643 = vadd.f32 %v2319, %v2642
        %2644 = vmatprep.mubr.bf16.mxu0 %v2241
        %2645 = vmatmul.mubr.bf16.gmra.mxu0 %v2240
        %v2646 = vpop.f32.mrf.mxu0
        %v2647 = vadd.f32 %v2315, %v2646
        %v2648 = vpop.f32.mrf.mxu0
        %v2649 = vadd.f32 %v2319, %v2648
        %v2650 = vpop.f32.mrf.mxu0
        %v2651 = vadd.f32 %v2315, %v2650
        %v2652 = vpop.f32.mrf.mxu0
        %v2653 = vadd.f32 %v2319, %v2652
        %2654 = vmatprep.mubr.bf16.mxu0 %v2243
        %2655 = vmatmul.mubr.bf16.gmra.mxu0 %v2242
        %v2656 = vpop.f32.mrf.mxu0
        %v2657 = vadd.f32 %v2315, %v2656
        %v2658 = vpop.f32.mrf.mxu0
        %v2659 = vadd.f32 %v2319, %v2658
        %v2660 = vpop.f32.mrf.mxu0
        %v2661 = vadd.f32 %v2315, %v2660
        %v2662 = vpop.f32.mrf.mxu0
        %v2663 = vadd.f32 %v2319, %v2662
        %2664 = vmatprep.mubr.bf16.mxu0 %v2245
        %2665 = vmatmul.mubr.bf16.gmra.mxu0 %v2244
        %v2666 = vpop.f32.mrf.mxu0
        %v2667 = vadd.f32 %v2315, %v2666
        %v2668 = vpop.f32.mrf.mxu0
        %v2669 = vadd.f32 %v2319, %v2668
        %v2670 = vpop.f32.mrf.mxu0
        %v2671 = vadd.f32 %v2315, %v2670
        %v2672 = vpop.f32.mrf.mxu0
        %v2673 = vadd.f32 %v2319, %v2672
        %2674 = vmatprep.mubr.bf16.mxu0 %v2247
        %2675 = vmatmul.mubr.bf16.gmra.mxu0 %v2246
        %v2676 = vpop.f32.mrf.mxu0
        %v2677 = vadd.f32 %v2315, %v2676
        %v2678 = vpop.f32.mrf.mxu0
        %v2679 = vadd.f32 %v2319, %v2678
        %v2680 = vpop.f32.mrf.mxu0
        %v2681 = vadd.f32 %v2315, %v2680
        %v2682 = vpop.f32.mrf.mxu0
        %v2683 = vadd.f32 %v2319, %v2682
        %2684 = vmatprep.mubr.bf16.mxu0 %v2249
        %2685 = vmatmul.mubr.bf16.gmra.mxu0 %v2248
        %v2686 = vpop.f32.mrf.mxu0
        %v2687 = vadd.f32 %v2315, %v2686
        %v2688 = vpop.f32.mrf.mxu0
        %v2689 = vadd.f32 %v2319, %v2688
        %v2690 = vpop.f32.mrf.mxu0
        %v2691 = vadd.f32 %v2315, %v2690
        %v2692 = vpop.f32.mrf.mxu0
        %v2693 = vadd.f32 %v2319, %v2692
        %2694 = vmatprep.mubr.bf16.mxu0 %v2251
        %2695 = vmatmul.mubr.bf16.gmra.mxu0 %v2250
        %v2696 = vpop.f32.mrf.mxu0
        %v2697 = vadd.f32 %v2315, %v2696
        %v2698 = vpop.f32.mrf.mxu0
        %v2699 = vadd.f32 %v2319, %v2698
        %v2700 = vpop.f32.mrf.mxu0
        %v2701 = vadd.f32 %v2315, %v2700
        %v2702 = vpop.f32.mrf.mxu0
        %v2703 = vadd.f32 %v2319, %v2702
        %2704 = vmatprep.mubr.bf16.mxu0 %v2253
        %2705 = vmatmul.mubr.bf16.gmra.mxu0 %v2252
        %v2706 = vpop.f32.mrf.mxu0
        %v2707 = vadd.f32 %v2315, %v2706
        %v2708 = vpop.f32.mrf.mxu0
        %v2709 = vadd.f32 %v2319, %v2708
        %v2710 = vpop.f32.mrf.mxu0
        %v2711 = vadd.f32 %v2315, %v2710
        %v2712 = vpop.f32.mrf.mxu0
        %v2713 = vadd.f32 %v2319, %v2712
        %2714 = vmatprep.mubr.bf16.mxu0 %v2255
        %2715 = vmatmul.mubr.bf16.gmra.mxu0 %v2254
        %v2716 = vpop.f32.mrf.mxu0
        %v2717 = vadd.f32 %v2315, %v2716
        %v2718 = vpop.f32.mrf.mxu0
        %v2719 = vadd.f32 %v2319, %v2718
        %v2720 = vpop.f32.mrf.mxu0
        %v2721 = vadd.f32 %v2315, %v2720
        %v2722 = vpop.f32.mrf.mxu0
        %v2723 = vadd.f32 %v2319, %v2722
        %2724 = vmatprep.mubr.bf16.mxu0 %v2257
        %2725 = vmatmul.mubr.bf16.gmra.mxu0 %v2256
        %v2726 = vpop.f32.mrf.mxu0
        %v2727 = vadd.f32 %v2315, %v2726
        %v2728 = vpop.f32.mrf.mxu0
        %v2729 = vadd.f32 %v2319, %v2728
        %v2730 = vpop.f32.mrf.mxu0
        %v2731 = vadd.f32 %v2315, %v2730
        %v2732 = vpop.f32.mrf.mxu0
        %v2733 = vadd.f32 %v2319, %v2732
        %2734 = vmatprep.mubr.bf16.mxu0 %v2259
        %2735 = vmatmul.mubr.bf16.gmra.mxu0 %v2258
        %v2736 = vpop.f32.mrf.mxu0
        %v2737 = vadd.f32 %v2315, %v2736
        %v2738 = vpop.f32.mrf.mxu0
        %v2739 = vadd.f32 %v2319, %v2738
        %v2740 = vpop.f32.mrf.mxu0
        %v2741 = vadd.f32 %v2315, %v2740
        %v2742 = vpop.f32.mrf.mxu0
        %v2743 = vadd.f32 %v2319, %v2742
        %2744 = vmatprep.mubr.bf16.mxu0 %v2261
        %2745 = vmatmul.mubr.bf16.gmra.mxu0 %v2260
        %v2746 = vpop.f32.mrf.mxu0
        %v2747 = vadd.f32 %v2315, %v2746
        %v2748 = vpop.f32.mrf.mxu0
        %v2749 = vadd.f32 %v2319, %v2748
        %v2750 = vpop.f32.mrf.mxu0
        %v2751 = vadd.f32 %v2315, %v2750
        %v2752 = vpop.f32.mrf.mxu0
        %v2753 = vadd.f32 %v2319, %v2752
        %2754 = vmatprep.mubr.bf16.mxu0 %v2263
        %2755 = vmatmul.mubr.bf16.gmra.mxu0 %v2262
        %v2756 = vpop.f32.mrf.mxu0
        %v2757 = vadd.f32 %v2315, %v2756
        %v2758 = vpop.f32.mrf.mxu0
        %v2759 = vadd.f32 %v2319, %v2758
        %v2760 = vpop.f32.mrf.mxu0
        %v2761 = vadd.f32 %v2315, %v2760
        %v2762 = vpop.f32.mrf.mxu0
        %v2763 = vadd.f32 %v2319, %v2762
        %2764 = vmatprep.mubr.bf16.mxu0 %v2265
        %2765 = vmatmul.mubr.bf16.gmra.mxu0 %v2264
        %v2766 = vpop.f32.mrf.mxu0
        %v2767 = vadd.f32 %v2315, %v2766
        %v2768 = vpop.f32.mrf.mxu0
        %v2769 = vadd.f32 %v2319, %v2768
        %v2770 = vpop.f32.mrf.mxu0
        %v2771 = vadd.f32 %v2315, %v2770
        %v2772 = vpop.f32.mrf.mxu0
        %v2773 = vadd.f32 %v2319, %v2772
        %2774 = vmatprep.mubr.bf16.mxu0 %v2267
        %2775 = vmatmul.mubr.bf16.gmra.mxu0 %v2266
        %v2776 = vpop.f32.mrf.mxu0
        %v2777 = vadd.f32 %v2315, %v2776
        %v2778 = vpop.f32.mrf.mxu0
        %v2779 = vadd.f32 %v2319, %v2778
        %v2780 = vpop.f32.mrf.mxu0
        %v2781 = vadd.f32 %v2315, %v2780
        %v2782 = vpop.f32.mrf.mxu0
        %v2783 = vadd.f32 %v2319, %v2782
        %2784 = vmatprep.mubr.bf16.mxu0 %v2269
        %2785 = vmatmul.mubr.bf16.gmra.mxu0 %v2268
        %v2786 = vpop.f32.mrf.mxu0
        %v2787 = vadd.f32 %v2315, %v2786
        %v2788 = vpop.f32.mrf.mxu0
        %v2789 = vadd.f32 %v2319, %v2788
        %v2790 = vpop.f32.mrf.mxu0
        %v2791 = vadd.f32 %v2315, %v2790
        %v2792 = vpop.f32.mrf.mxu0
        %v2793 = vadd.f32 %v2319, %v2792
        %2794 = vmatprep.mubr.bf16.mxu0 %v2271
        %2795 = vmatmul.mubr.bf16.gmra.mxu0 %v2270
        %v2796 = vpop.f32.mrf.mxu0
        %v2797 = vadd.f32 %v2315, %v2796
        %v2798 = vpop.f32.mrf.mxu0
        %v2799 = vadd.f32 %v2319, %v2798
        %v2800 = vpop.f32.mrf.mxu0
        %v2801 = vadd.f32 %v2315, %v2800
        %v2802 = vpop.f32.mrf.mxu0
        %v2803 = vadd.f32 %v2319, %v2802
        %2804 = vmatprep.mubr.bf16.mxu0 %v2273
        %2805 = vmatmul.mubr.bf16.gmra.mxu0 %v2272
        %v2806 = vpop.f32.mrf.mxu0
        %v2807 = vadd.f32 %v2315, %v2806
        %v2808 = vpop.f32.mrf.mxu0
        %v2809 = vadd.f32 %v2319, %v2808
        %v2810 = vpop.f32.mrf.mxu0
        %v2811 = vadd.f32 %v2315, %v2810
        %v2812 = vpop.f32.mrf.mxu0
        %v2813 = vadd.f32 %v2319, %v2812
        %2814 = vmatprep.mubr.bf16.mxu0 %v2275
        %2815 = vmatmul.mubr.bf16.gmra.mxu0 %v2274
        %v2816 = vpop.f32.mrf.mxu0
        %v2817 = vadd.f32 %v2315, %v2816
        %v2818 = vpop.f32.mrf.mxu0
        %v2819 = vadd.f32 %v2319, %v2818
        %v2820 = vpop.f32.mrf.mxu0
        %v2821 = vadd.f32 %v2315, %v2820
        %v2822 = vpop.f32.mrf.mxu0
        %v2823 = vadd.f32 %v2319, %v2822
        %2824 = vmatprep.mubr.bf16.mxu0 %v2277
        %2825 = vmatmul.mubr.bf16.gmra.mxu0 %v2276
        %v2826 = vpop.f32.mrf.mxu0
        %v2827 = vadd.f32 %v2315, %v2826
        %v2828 = vpop.f32.mrf.mxu0
        %v2829 = vadd.f32 %v2319, %v2828
        %v2830 = vpop.f32.mrf.mxu0
        %v2831 = vadd.f32 %v2315, %v2830
        %v2832 = vpop.f32.mrf.mxu0
        %v2833 = vadd.f32 %v2319, %v2832
        %2834 = vdwg.mxu0
        %v2835 = vpack.c.bf16 %v2521, %v2517
        %v2836 = vpack.c.bf16 %v2523, %v2519
        %v2837 = vpack.c.bf16 %v2531, %v2527
        %v2838 = vpack.c.bf16 %v2533, %v2529
        %v2839 = vpack.c.bf16 %v2541, %v2537
        %v2840 = vpack.c.bf16 %v2543, %v2539
        %v2841 = vpack.c.bf16 %v2551, %v2547
        %v2842 = vpack.c.bf16 %v2553, %v2549
        %v2843 = vpack.c.bf16 %v2561, %v2557
        %v2844 = vpack.c.bf16 %v2563, %v2559
        %v2845 = vpack.c.bf16 %v2571, %v2567
        %v2846 = vpack.c.bf16 %v2573, %v2569
        %v2847 = vpack.c.bf16 %v2581, %v2577
        %v2848 = vpack.c.bf16 %v2583, %v2579
        %v2849 = vpack.c.bf16 %v2591, %v2587
        %v2850 = vpack.c.bf16 %v2593, %v2589
        %v2851 = vpack.c.bf16 %v2601, %v2597
        %v2852 = vpack.c.bf16 %v2603, %v2599
        %v2853 = vpack.c.bf16 %v2611, %v2607
        %v2854 = vpack.c.bf16 %v2613, %v2609
        %v2855 = vpack.c.bf16 %v2621, %v2617
        %v2856 = vpack.c.bf16 %v2623, %v2619
        %v2857 = vpack.c.bf16 %v2631, %v2627
        %v2858 = vpack.c.bf16 %v2633, %v2629
        %v2859 = vpack.c.bf16 %v2641, %v2637
        %v2860 = vpack.c.bf16 %v2643, %v2639
        %v2861 = vpack.c.bf16 %v2651, %v2647
        %v2862 = vpack.c.bf16 %v2653, %v2649
        %v2863 = vpack.c.bf16 %v2661, %v2657
        %v2864 = vpack.c.bf16 %v2663, %v2659
        %v2865 = vpack.c.bf16 %v2671, %v2667
        %v2866 = vpack.c.bf16 %v2673, %v2669
        %v2867 = vpack.c.bf16 %v2681, %v2677
        %v2868 = vpack.c.bf16 %v2683, %v2679
        %v2869 = vpack.c.bf16 %v2691, %v2687
        %v2870 = vpack.c.bf16 %v2693, %v2689
        %v2871 = vpack.c.bf16 %v2701, %v2697
        %v2872 = vpack.c.bf16 %v2703, %v2699
        %v2873 = vpack.c.bf16 %v2711, %v2707
        %v2874 = vpack.c.bf16 %v2713, %v2709
        %v2875 = vpack.c.bf16 %v2721, %v2717
        %v2876 = vpack.c.bf16 %v2723, %v2719
        %v2877 = vpack.c.bf16 %v2731, %v2727
        %v2878 = vpack.c.bf16 %v2733, %v2729
        %v2879 = vpack.c.bf16 %v2741, %v2737
        %v2880 = vpack.c.bf16 %v2743, %v2739
        %v2881 = vpack.c.bf16 %v2751, %v2747
        %v2882 = vpack.c.bf16 %v2753, %v2749
        %v2883 = vpack.c.bf16 %v2761, %v2757
        %v2884 = vpack.c.bf16 %v2763, %v2759
        %v2885 = vpack.c.bf16 %v2771, %v2767
        %v2886 = vpack.c.bf16 %v2773, %v2769
        %v2887 = vpack.c.bf16 %v2781, %v2777
        %v2888 = vpack.c.bf16 %v2783, %v2779
        %v2889 = vpack.c.bf16 %v2791, %v2787
        %v2890 = vpack.c.bf16 %v2793, %v2789
        %v2891 = vpack.c.bf16 %v2801, %v2797
        %v2892 = vpack.c.bf16 %v2803, %v2799
        %v2893 = vpack.c.bf16 %v2811, %v2807
        %v2894 = vpack.c.bf16 %v2813, %v2809
        %v2895 = vpack.c.bf16 %v2821, %v2817
        %v2896 = vpack.c.bf16 %v2823, %v2819
        %v2897 = vpack.c.bf16 %v2831, %v2827
        %v2898 = vpack.c.bf16 %v2833, %v2829
        %v2899 = vld [vmem:[%s7] sm:$0x3]
        %v2901 = vlaneseq
        %v2902 = vshrl.u32 %v2901, 7
        %v2903 = vsub.s32 0, %v2902
        %v2904 = vrot.slane %v2899, %v2903
        %v2905 = vlaneseq
        %v2906 = vshrl.u32 %v2905, 7
        %v2907 = vsub.s32 1, %v2906
        %v2908 = vrot.slane %v2899, %v2907
        %v2911 = vmul.f32 %v2086, %v2904
        %v2912 = vmul.f32 %v2087, %v2908
        %v2913 = vmul.f32 %v2088, %v2904
        %v2914 = vmul.f32 %v2089, %v2908
        %v2915 = vmul.f32 %v2090, %v2904
        %v2916 = vmul.f32 %v2091, %v2908
        %v2917 = vmul.f32 %v2092, %v2904
        %v2918 = vmul.f32 %v2093, %v2908
        %v2919 = vmul.f32 %v2094, %v2904
        %v2920 = vmul.f32 %v2095, %v2908
        %v2921 = vmul.f32 %v2096, %v2904
        %v2922 = vmul.f32 %v2097, %v2908
        %v2923 = vmul.f32 %v2098, %v2904
        %v2924 = vmul.f32 %v2099, %v2908
        %v2925 = vmul.f32 %v2100, %v2904
        %v2926 = vmul.f32 %v2101, %v2908
        %v2927 = vmul.f32 %v2102, %v2904
        %v2928 = vmul.f32 %v2103, %v2908
        %v2929 = vmul.f32 %v2104, %v2904
        %v2930 = vmul.f32 %v2105, %v2908
        %v2931 = vmul.f32 %v2106, %v2904
        %v2932 = vmul.f32 %v2107, %v2908
        %v2933 = vmul.f32 %v2108, %v2904
        %v2934 = vmul.f32 %v2109, %v2908
        %v2935 = vmul.f32 %v2110, %v2904
        %v2936 = vmul.f32 %v2111, %v2908
        %v2937 = vmul.f32 %v2112, %v2904
        %v2938 = vmul.f32 %v2113, %v2908
        %v2939 = vmul.f32 %v2114, %v2904
        %v2940 = vmul.f32 %v2115, %v2908
        %v2941 = vmul.f32 %v2116, %v2904
        %v2942 = vmul.f32 %v2117, %v2908
        %v2943 = vmul.f32 %v2118, %v2904
        %v2944 = vmul.f32 %v2119, %v2908
        %v2945 = vmul.f32 %v2120, %v2904
        %v2946 = vmul.f32 %v2121, %v2908
        %v2947 = vmul.f32 %v2122, %v2904
        %v2948 = vmul.f32 %v2123, %v2908
        %v2949 = vmul.f32 %v2124, %v2904
        %v2950 = vmul.f32 %v2125, %v2908
        %v2951 = vmul.f32 %v2126, %v2904
        %v2952 = vmul.f32 %v2127, %v2908
        %v2953 = vmul.f32 %v2128, %v2904
        %v2954 = vmul.f32 %v2129, %v2908
        %v2955 = vmul.f32 %v2130, %v2904
        %v2956 = vmul.f32 %v2131, %v2908
        %v2957 = vmul.f32 %v2132, %v2904
        %v2958 = vmul.f32 %v2133, %v2908
        %v2959 = vmul.f32 %v2134, %v2904
        %v2960 = vmul.f32 %v2135, %v2908
        %v2961 = vmul.f32 %v2136, %v2904
        %v2962 = vmul.f32 %v2137, %v2908
        %v2963 = vmul.f32 %v2138, %v2904
        %v2964 = vmul.f32 %v2139, %v2908
        %v2965 = vmul.f32 %v2140, %v2904
        %v2966 = vmul.f32 %v2141, %v2908
        %v2967 = vmul.f32 %v2142, %v2904
        %v2968 = vmul.f32 %v2143, %v2908
        %v2969 = vmul.f32 %v2144, %v2904
        %v2970 = vmul.f32 %v2145, %v2908
        %v2971 = vmul.f32 %v2146, %v2904
        %v2972 = vmul.f32 %v2147, %v2908
        %v2973 = vmul.f32 %v2148, %v2904
        %v2974 = vmul.f32 %v2149, %v2908
        %v2975 = vmul.f32 %v2150, %v2904
        %v2976 = vmul.f32 %v2151, %v2908
        %v2977 = vmul.f32 %v2152, %v2904
        %v2978 = vmul.f32 %v2153, %v2908
        %v2979 = vmul.f32 %v2154, %v2904
        %v2980 = vmul.f32 %v2155, %v2908
        %v2981 = vmul.f32 %v2156, %v2904
        %v2982 = vmul.f32 %v2157, %v2908
        %v2983 = vmul.f32 %v2158, %v2904
        %v2984 = vmul.f32 %v2159, %v2908
        %v2985 = vmul.f32 %v2160, %v2904
        %v2986 = vmul.f32 %v2161, %v2908
        %v2987 = vmul.f32 %v2162, %v2904
        %v2988 = vmul.f32 %v2163, %v2908
        %v2989 = vmul.f32 %v2164, %v2904
        %v2990 = vmul.f32 %v2165, %v2908
        %v2991 = vmul.f32 %v2166, %v2904
        %v2992 = vmul.f32 %v2167, %v2908
        %v2993 = vmul.f32 %v2168, %v2904
        %v2994 = vmul.f32 %v2169, %v2908
        %v2995 = vmul.f32 %v2170, %v2904
        %v2996 = vmul.f32 %v2171, %v2908
        %v2997 = vmul.f32 %v2172, %v2904
        %v2998 = vmul.f32 %v2173, %v2908
        %v2999 = vmul.f32 %v2174, %v2904
        %v3000 = vmul.f32 %v2175, %v2908
        %v3001 = vmul.f32 %v2176, %v2904
        %v3002 = vmul.f32 %v2177, %v2908
        %v3003 = vmul.f32 %v2178, %v2904
        %v3004 = vmul.f32 %v2179, %v2908
        %v3005 = vmul.f32 %v2180, %v2904
        %v3006 = vmul.f32 %v2181, %v2908
        %v3007 = vmul.f32 %v2182, %v2904
        %v3008 = vmul.f32 %v2183, %v2908
        %v3009 = vmul.f32 %v2184, %v2904
        %v3010 = vmul.f32 %v2185, %v2908
        %v3011 = vmul.f32 %v2186, %v2904
        %v3012 = vmul.f32 %v2187, %v2908
        %v3013 = vmul.f32 %v2188, %v2904
        %v3014 = vmul.f32 %v2189, %v2908
        %v3015 = vmul.f32 %v2190, %v2904
        %v3016 = vmul.f32 %v2191, %v2908
        %v3017 = vmul.f32 %v2192, %v2904
        %v3018 = vmul.f32 %v2193, %v2908
        %v3019 = vmul.f32 %v2194, %v2904
        %v3020 = vmul.f32 %v2195, %v2908
        %v3021 = vmul.f32 %v2196, %v2904
        %v3022 = vmul.f32 %v2197, %v2908
        %v3023 = vmul.f32 %v2198, %v2904
        %v3024 = vmul.f32 %v2199, %v2908
        %v3025 = vmul.f32 %v2200, %v2904
        %v3026 = vmul.f32 %v2201, %v2908
        %v3027 = vmul.f32 %v2202, %v2904
        %v3028 = vmul.f32 %v2203, %v2908
        %v3029 = vmul.f32 %v2204, %v2904
        %v3030 = vmul.f32 %v2205, %v2908
        %v3031 = vmul.f32 %v2206, %v2904
        %v3032 = vmul.f32 %v2207, %v2908
        %v3033 = vmul.f32 %v2208, %v2904
        %v3034 = vmul.f32 %v2209, %v2908
        %v3035 = vmul.f32 %v2210, %v2904
        %v3036 = vmul.f32 %v2211, %v2908
        %v3037 = vmul.f32 %v2212, %v2904
        %v3038 = vmul.f32 %v2213, %v2908
        %v3039 = vadd.f32 %v2911, %v2912
        %3040 = vadd.xlane.f32.xlu0 %v3039
        %v3041 = vpop.xlane.xlu0 %3040
        %v3042 = vadd.f32 %v2913, %v2914
        %3043 = vadd.xlane.f32.xlu0 %v3042
        %v3044 = vpop.xlane.xlu0 %3043
        %v3045 = vadd.f32 %v2915, %v2916
        %3046 = vadd.xlane.f32.xlu0 %v3045
        %v3047 = vpop.xlane.xlu0 %3046
        %v3048 = vadd.f32 %v2917, %v2918
        %3049 = vadd.xlane.f32.xlu0 %v3048
        %v3050 = vpop.xlane.xlu0 %3049
        %v3051 = vadd.f32 %v2919, %v2920
        %3052 = vadd.xlane.f32.xlu0 %v3051
        %v3053 = vpop.xlane.xlu0 %3052
        %v3054 = vadd.f32 %v2921, %v2922
        %3055 = vadd.xlane.f32.xlu0 %v3054
        %v3056 = vpop.xlane.xlu0 %3055
        %v3057 = vadd.f32 %v2923, %v2924
        %3058 = vadd.xlane.f32.xlu0 %v3057
        %v3059 = vpop.xlane.xlu0 %3058
        %v3060 = vadd.f32 %v2925, %v2926
        %3061 = vadd.xlane.f32.xlu0 %v3060
        %v3062 = vpop.xlane.xlu0 %3061
        %v3063 = vadd.f32 %v2927, %v2928
        %3064 = vadd.xlane.f32.xlu0 %v3063
        %v3065 = vpop.xlane.xlu0 %3064
        %v3066 = vadd.f32 %v2929, %v2930
        %3067 = vadd.xlane.f32.xlu0 %v3066
        %v3068 = vpop.xlane.xlu0 %3067
        %v3069 = vadd.f32 %v2931, %v2932
        %3070 = vadd.xlane.f32.xlu0 %v3069
        %v3071 = vpop.xlane.xlu0 %3070
        %v3072 = vadd.f32 %v2933, %v2934
        %3073 = vadd.xlane.f32.xlu0 %v3072
        %v3074 = vpop.xlane.xlu0 %3073
        %v3075 = vadd.f32 %v2935, %v2936
        %3076 = vadd.xlane.f32.xlu0 %v3075
        %v3077 = vpop.xlane.xlu0 %3076
        %v3078 = vadd.f32 %v2937, %v2938
        %3079 = vadd.xlane.f32.xlu0 %v3078
        %v3080 = vpop.xlane.xlu0 %3079
        %v3081 = vadd.f32 %v2939, %v2940
        %3082 = vadd.xlane.f32.xlu0 %v3081
        %v3083 = vpop.xlane.xlu0 %3082
        %v3084 = vadd.f32 %v2941, %v2942
        %3085 = vadd.xlane.f32.xlu0 %v3084
        %v3086 = vpop.xlane.xlu0 %3085
        %v3087 = vadd.f32 %v2943, %v2944
        %3088 = vadd.xlane.f32.xlu0 %v3087
        %v3089 = vpop.xlane.xlu0 %3088
        %v3090 = vadd.f32 %v2945, %v2946
        %3091 = vadd.xlane.f32.xlu0 %v3090
        %v3092 = vpop.xlane.xlu0 %3091
        %v3093 = vadd.f32 %v2947, %v2948
        %3094 = vadd.xlane.f32.xlu0 %v3093
        %v3095 = vpop.xlane.xlu0 %3094
        %v3096 = vadd.f32 %v2949, %v2950
        %3097 = vadd.xlane.f32.xlu0 %v3096
        %v3098 = vpop.xlane.xlu0 %3097
        %v3099 = vadd.f32 %v2951, %v2952
        %3100 = vadd.xlane.f32.xlu0 %v3099
        %v3101 = vpop.xlane.xlu0 %3100
        %v3102 = vadd.f32 %v2953, %v2954
        %3103 = vadd.xlane.f32.xlu0 %v3102
        %v3104 = vpop.xlane.xlu0 %3103
        %v3105 = vadd.f32 %v2955, %v2956
        %3106 = vadd.xlane.f32.xlu0 %v3105
        %v3107 = vpop.xlane.xlu0 %3106
        %v3108 = vadd.f32 %v2957, %v2958
        %3109 = vadd.xlane.f32.xlu0 %v3108
        %v3110 = vpop.xlane.xlu0 %3109
        %v3111 = vadd.f32 %v2959, %v2960
        %3112 = vadd.xlane.f32.xlu0 %v3111
        %v3113 = vpop.xlane.xlu0 %3112
        %v3114 = vadd.f32 %v2961, %v2962
        %3115 = vadd.xlane.f32.xlu0 %v3114
        %v3116 = vpop.xlane.xlu0 %3115
        %v3117 = vadd.f32 %v2963, %v2964
        %3118 = vadd.xlane.f32.xlu0 %v3117
        %v3119 = vpop.xlane.xlu0 %3118
        %v3120 = vadd.f32 %v2965, %v2966
        %3121 = vadd.xlane.f32.xlu0 %v3120
        %v3122 = vpop.xlane.xlu0 %3121
        %v3123 = vadd.f32 %v2967, %v2968
        %3124 = vadd.xlane.f32.xlu0 %v3123
        %v3125 = vpop.xlane.xlu0 %3124
        %v3126 = vadd.f32 %v2969, %v2970
        %3127 = vadd.xlane.f32.xlu0 %v3126
        %v3128 = vpop.xlane.xlu0 %3127
        %v3129 = vadd.f32 %v2971, %v2972
        %3130 = vadd.xlane.f32.xlu0 %v3129
        %v3131 = vpop.xlane.xlu0 %3130
        %v3132 = vadd.f32 %v2973, %v2974
        %3133 = vadd.xlane.f32.xlu0 %v3132
        %v3134 = vpop.xlane.xlu0 %3133
        %v3135 = vadd.f32 %v2975, %v2976
        %3136 = vadd.xlane.f32.xlu0 %v3135
        %v3137 = vpop.xlane.xlu0 %3136
        %v3138 = vadd.f32 %v2977, %v2978
        %3139 = vadd.xlane.f32.xlu0 %v3138
        %v3140 = vpop.xlane.xlu0 %3139
        %v3141 = vadd.f32 %v2979, %v2980
        %3142 = vadd.xlane.f32.xlu0 %v3141
        %v3143 = vpop.xlane.xlu0 %3142
        %v3144 = vadd.f32 %v2981, %v2982
        %3145 = vadd.xlane.f32.xlu0 %v3144
        %v3146 = vpop.xlane.xlu0 %3145
        %v3147 = vadd.f32 %v2983, %v2984
        %3148 = vadd.xlane.f32.xlu0 %v3147
        %v3149 = vpop.xlane.xlu0 %3148
        %v3150 = vadd.f32 %v2985, %v2986
        %3151 = vadd.xlane.f32.xlu0 %v3150
        %v3152 = vpop.xlane.xlu0 %3151
        %v3153 = vadd.f32 %v2987, %v2988
        %3154 = vadd.xlane.f32.xlu0 %v3153
        %v3155 = vpop.xlane.xlu0 %3154
        %v3156 = vadd.f32 %v2989, %v2990
        %3157 = vadd.xlane.f32.xlu0 %v3156
        %v3158 = vpop.xlane.xlu0 %3157
        %v3159 = vadd.f32 %v2991, %v2992
        %3160 = vadd.xlane.f32.xlu0 %v3159
        %v3161 = vpop.xlane.xlu0 %3160
        %v3162 = vadd.f32 %v2993, %v2994
        %3163 = vadd.xlane.f32.xlu0 %v3162
        %v3164 = vpop.xlane.xlu0 %3163
        %v3165 = vadd.f32 %v2995, %v2996
        %3166 = vadd.xlane.f32.xlu0 %v3165
        %v3167 = vpop.xlane.xlu0 %3166
        %v3168 = vadd.f32 %v2997, %v2998
        %3169 = vadd.xlane.f32.xlu0 %v3168
        %v3170 = vpop.xlane.xlu0 %3169
        %v3171 = vadd.f32 %v2999, %v3000
        %3172 = vadd.xlane.f32.xlu0 %v3171
        %v3173 = vpop.xlane.xlu0 %3172
        %v3174 = vadd.f32 %v3001, %v3002
        %3175 = vadd.xlane.f32.xlu0 %v3174
        %v3176 = vpop.xlane.xlu0 %3175
        %v3177 = vadd.f32 %v3003, %v3004
        %3178 = vadd.xlane.f32.xlu0 %v3177
        %v3179 = vpop.xlane.xlu0 %3178
        %v3180 = vadd.f32 %v3005, %v3006
        %3181 = vadd.xlane.f32.xlu0 %v3180
        %v3182 = vpop.xlane.xlu0 %3181
        %v3183 = vadd.f32 %v3007, %v3008
        %3184 = vadd.xlane.f32.xlu0 %v3183
        %v3185 = vpop.xlane.xlu0 %3184
        %v3186 = vadd.f32 %v3009, %v3010
        %3187 = vadd.xlane.f32.xlu0 %v3186
        %v3188 = vpop.xlane.xlu0 %3187
        %v3189 = vadd.f32 %v3011, %v3012
        %3190 = vadd.xlane.f32.xlu0 %v3189
        %v3191 = vpop.xlane.xlu0 %3190
        %v3192 = vadd.f32 %v3013, %v3014
        %3193 = vadd.xlane.f32.xlu0 %v3192
        %v3194 = vpop.xlane.xlu0 %3193
        %v3195 = vadd.f32 %v3015, %v3016
        %3196 = vadd.xlane.f32.xlu0 %v3195
        %v3197 = vpop.xlane.xlu0 %3196
        %v3198 = vadd.f32 %v3017, %v3018
        %3199 = vadd.xlane.f32.xlu0 %v3198
        %v3200 = vpop.xlane.xlu0 %3199
        %v3201 = vadd.f32 %v3019, %v3020
        %3202 = vadd.xlane.f32.xlu0 %v3201
        %v3203 = vpop.xlane.xlu0 %3202
        %v3204 = vadd.f32 %v3021, %v3022
        %3205 = vadd.xlane.f32.xlu0 %v3204
        %v3206 = vpop.xlane.xlu0 %3205
        %v3207 = vadd.f32 %v3023, %v3024
        %3208 = vadd.xlane.f32.xlu0 %v3207
        %v3209 = vpop.xlane.xlu0 %3208
        %v3210 = vadd.f32 %v3025, %v3026
        %3211 = vadd.xlane.f32.xlu0 %v3210
        %v3212 = vpop.xlane.xlu0 %3211
        %v3213 = vadd.f32 %v3027, %v3028
        %3214 = vadd.xlane.f32.xlu0 %v3213
        %v3215 = vpop.xlane.xlu0 %3214
        %v3216 = vadd.f32 %v3029, %v3030
        %3217 = vadd.xlane.f32.xlu0 %v3216
        %v3218 = vpop.xlane.xlu0 %3217
        %v3219 = vadd.f32 %v3031, %v3032
        %3220 = vadd.xlane.f32.xlu0 %v3219
        %v3221 = vpop.xlane.xlu0 %3220
        %v3222 = vadd.f32 %v3033, %v3034
        %3223 = vadd.xlane.f32.xlu0 %v3222
        %v3224 = vpop.xlane.xlu0 %3223
        %v3225 = vadd.f32 %v3035, %v3036
        %3226 = vadd.xlane.f32.xlu0 %v3225
        %v3227 = vpop.xlane.xlu0 %3226
        %v3228 = vadd.f32 %v3037, %v3038
        %3229 = vadd.xlane.f32.xlu0 %v3228
        %v3230 = vpop.xlane.xlu0 %3229
        %v3231 = vld [vmem:[#allocation2] sm:$0x1]
        %v3233 = vlaneseq
        %v3234 = vshrl.u32 %v3233, 7
        %v3235 = vsub.s32 0, %v3234
        %v3236 = vrot.slane %v3231, %v3235
        %v3238 = vadd.f32 %v3041, %v3236
        %v3239 = vadd.f32 %v3044, %v3236
        %v3240 = vadd.f32 %v3047, %v3236
        %v3241 = vadd.f32 %v3050, %v3236
        %v3242 = vadd.f32 %v3053, %v3236
        %v3243 = vadd.f32 %v3056, %v3236
        %v3244 = vadd.f32 %v3059, %v3236
        %v3245 = vadd.f32 %v3062, %v3236
        %v3246 = vadd.f32 %v3065, %v3236
        %v3247 = vadd.f32 %v3068, %v3236
        %v3248 = vadd.f32 %v3071, %v3236
        %v3249 = vadd.f32 %v3074, %v3236
        %v3250 = vadd.f32 %v3077, %v3236
        %v3251 = vadd.f32 %v3080, %v3236
        %v3252 = vadd.f32 %v3083, %v3236
        %v3253 = vadd.f32 %v3086, %v3236
        %v3254 = vadd.f32 %v3089, %v3236
        %v3255 = vadd.f32 %v3092, %v3236
        %v3256 = vadd.f32 %v3095, %v3236
        %v3257 = vadd.f32 %v3098, %v3236
        %v3258 = vadd.f32 %v3101, %v3236
        %v3259 = vadd.f32 %v3104, %v3236
        %v3260 = vadd.f32 %v3107, %v3236
        %v3261 = vadd.f32 %v3110, %v3236
        %v3262 = vadd.f32 %v3113, %v3236
        %v3263 = vadd.f32 %v3116, %v3236
        %v3264 = vadd.f32 %v3119, %v3236
        %v3265 = vadd.f32 %v3122, %v3236
        %v3266 = vadd.f32 %v3125, %v3236
        %v3267 = vadd.f32 %v3128, %v3236
        %v3268 = vadd.f32 %v3131, %v3236
        %v3269 = vadd.f32 %v3134, %v3236
        %v3270 = vadd.f32 %v3137, %v3236
        %v3271 = vadd.f32 %v3140, %v3236
        %v3272 = vadd.f32 %v3143, %v3236
        %v3273 = vadd.f32 %v3146, %v3236
        %v3274 = vadd.f32 %v3149, %v3236
        %v3275 = vadd.f32 %v3152, %v3236
        %v3276 = vadd.f32 %v3155, %v3236
        %v3277 = vadd.f32 %v3158, %v3236
        %v3278 = vadd.f32 %v3161, %v3236
        %v3279 = vadd.f32 %v3164, %v3236
        %v3280 = vadd.f32 %v3167, %v3236
        %v3281 = vadd.f32 %v3170, %v3236
        %v3282 = vadd.f32 %v3173, %v3236
        %v3283 = vadd.f32 %v3176, %v3236
        %v3284 = vadd.f32 %v3179, %v3236
        %v3285 = vadd.f32 %v3182, %v3236
        %v3286 = vadd.f32 %v3185, %v3236
        %v3287 = vadd.f32 %v3188, %v3236
        %v3288 = vadd.f32 %v3191, %v3236
        %v3289 = vadd.f32 %v3194, %v3236
        %v3290 = vadd.f32 %v3197, %v3236
        %v3291 = vadd.f32 %v3200, %v3236
        %v3292 = vadd.f32 %v3203, %v3236
        %v3293 = vadd.f32 %v3206, %v3236
        %v3294 = vadd.f32 %v3209, %v3236
        %v3295 = vadd.f32 %v3212, %v3236
        %v3296 = vadd.f32 %v3215, %v3236
        %v3297 = vadd.f32 %v3218, %v3236
        %v3298 = vadd.f32 %v3221, %v3236
        %v3299 = vadd.f32 %v3224, %v3236
        %v3300 = vadd.f32 %v3227, %v3236
        %v3301 = vadd.f32 %v3230, %v3236
        %v3302 = vmax.f32 %v3238, 0.0
        %v3303 = vmax.f32 %v3239, 0.0
        %v3304 = vmax.f32 %v3240, 0.0
        %v3305 = vmax.f32 %v3241, 0.0
        %v3306 = vmax.f32 %v3242, 0.0
        %v3307 = vmax.f32 %v3243, 0.0
        %v3308 = vmax.f32 %v3244, 0.0
        %v3309 = vmax.f32 %v3245, 0.0
        %v3310 = vmax.f32 %v3246, 0.0
        %v3311 = vmax.f32 %v3247, 0.0
        %v3312 = vmax.f32 %v3248, 0.0
        %v3313 = vmax.f32 %v3249, 0.0
        %v3314 = vmax.f32 %v3250, 0.0
        %v3315 = vmax.f32 %v3251, 0.0
        %v3316 = vmax.f32 %v3252, 0.0
        %v3317 = vmax.f32 %v3253, 0.0
        %v3318 = vmax.f32 %v3254, 0.0
        %v3319 = vmax.f32 %v3255, 0.0
        %v3320 = vmax.f32 %v3256, 0.0
        %v3321 = vmax.f32 %v3257, 0.0
        %v3322 = vmax.f32 %v3258, 0.0
        %v3323 = vmax.f32 %v3259, 0.0
        %v3324 = vmax.f32 %v3260, 0.0
        %v3325 = vmax.f32 %v3261, 0.0
        %v3326 = vmax.f32 %v3262, 0.0
        %v3327 = vmax.f32 %v3263, 0.0
        %v3328 = vmax.f32 %v3264, 0.0
        %v3329 = vmax.f32 %v3265, 0.0
        %v3330 = vmax.f32 %v3266, 0.0
        %v3331 = vmax.f32 %v3267, 0.0
        %v3332 = vmax.f32 %v3268, 0.0
        %v3333 = vmax.f32 %v3269, 0.0
        %v3334 = vmax.f32 %v3270, 0.0
        %v3335 = vmax.f32 %v3271, 0.0
        %v3336 = vmax.f32 %v3272, 0.0
        %v3337 = vmax.f32 %v3273, 0.0
        %v3338 = vmax.f32 %v3274, 0.0
        %v3339 = vmax.f32 %v3275, 0.0
        %v3340 = vmax.f32 %v3276, 0.0
        %v3341 = vmax.f32 %v3277, 0.0
        %v3342 = vmax.f32 %v3278, 0.0
        %v3343 = vmax.f32 %v3279, 0.0
        %v3344 = vmax.f32 %v3280, 0.0
        %v3345 = vmax.f32 %v3281, 0.0
        %v3346 = vmax.f32 %v3282, 0.0
        %v3347 = vmax.f32 %v3283, 0.0
        %v3348 = vmax.f32 %v3284, 0.0
        %v3349 = vmax.f32 %v3285, 0.0
        %v3350 = vmax.f32 %v3286, 0.0
        %v3351 = vmax.f32 %v3287, 0.0
        %v3352 = vmax.f32 %v3288, 0.0
        %v3353 = vmax.f32 %v3289, 0.0
        %v3354 = vmax.f32 %v3290, 0.0
        %v3355 = vmax.f32 %v3291, 0.0
        %v3356 = vmax.f32 %v3292, 0.0
        %v3357 = vmax.f32 %v3293, 0.0
        %v3358 = vmax.f32 %v3294, 0.0
        %v3359 = vmax.f32 %v3295, 0.0
        %v3360 = vmax.f32 %v3296, 0.0
        %v3361 = vmax.f32 %v3297, 0.0
        %v3362 = vmax.f32 %v3298, 0.0
        %v3363 = vmax.f32 %v3299, 0.0
        %v3364 = vmax.f32 %v3300, 0.0
        %v3365 = vmax.f32 %v3301, 0.0
        %v3366 = vld [vmem:[#allocation10] sm:$0xf]
        %v3367 = vld [vmem:[#allocation10 + $0x4] sm:$0xf]
        %v3368 = vld [vmem:[#allocation10 + $0x8] sm:$0xf]
        %v3369 = vld [vmem:[#allocation10 + $0xc] sm:$0xf]
        %v3370 = vld [vmem:[#allocation10 + $0x10] sm:$0xf]
        %v3371 = vld [vmem:[#allocation10 + $0x14] sm:$0xf]
        %v3372 = vld [vmem:[#allocation10 + $0x18] sm:$0xf]
        %v3373 = vld [vmem:[#allocation10 + $0x1c] sm:$0xf]
        %v3374 = vld [vmem:[#allocation10 + $0x20] sm:$0xf]
        %v3375 = vld [vmem:[#allocation10 + $0x24] sm:$0xf]
        %v3376 = vld [vmem:[#allocation10 + $0x28] sm:$0xf]
        %v3377 = vld [vmem:[#allocation10 + $0x2c] sm:$0xf]
        %v3378 = vld [vmem:[#allocation10 + $0x30] sm:$0xf]
        %v3379 = vld [vmem:[#allocation10 + $0x34] sm:$0xf]
        %v3380 = vld [vmem:[#allocation10 + $0x38] sm:$0xf]
        %v3381 = vld [vmem:[#allocation10 + $0x3c] sm:$0xf]
        %v3382 = vld [vmem:[#allocation10 + $0x40] sm:$0xf]
        %v3383 = vld [vmem:[#allocation10 + $0x44] sm:$0xf]
        %v3384 = vld [vmem:[#allocation10 + $0x48] sm:$0xf]
        %v3385 = vld [vmem:[#allocation10 + $0x4c] sm:$0xf]
        %v3386 = vld [vmem:[#allocation10 + $0x50] sm:$0xf]
        %v3387 = vld [vmem:[#allocation10 + $0x54] sm:$0xf]
        %v3388 = vld [vmem:[#allocation10 + $0x58] sm:$0xf]
        %v3389 = vld [vmem:[#allocation10 + $0x5c] sm:$0xf]
        %v3390 = vld [vmem:[#allocation10 + $0x60] sm:$0xf]
        %v3391 = vld [vmem:[#allocation10 + $0x64] sm:$0xf]
        %v3392 = vld [vmem:[#allocation10 + $0x68] sm:$0xf]
        %v3393 = vld [vmem:[#allocation10 + $0x6c] sm:$0xf]
        %v3394 = vld [vmem:[#allocation10 + $0x70] sm:$0xf]
        %v3395 = vld [vmem:[#allocation10 + $0x74] sm:$0xf]
        %v3396 = vld [vmem:[#allocation10 + $0x78] sm:$0xf]
        %v3397 = vld [vmem:[#allocation10 + $0x7c] sm:$0xf]
        %v3398 = vld [vmem:[%s10] sm:$0xf]
        %v3399 = vld [vmem:[%s10 + $0x4] sm:$0xf]
        %v3400 = vld [vmem:[%s10 + $0x8] sm:$0xf]
        %v3401 = vld [vmem:[%s10 + $0xc] sm:$0xf]
        %v3402 = vld [vmem:[%s10 + $0x10] sm:$0xf]
        %v3403 = vld [vmem:[%s10 + $0x14] sm:$0xf]
        %v3404 = vld [vmem:[%s10 + $0x18] sm:$0xf]
        %v3405 = vld [vmem:[%s10 + $0x1c] sm:$0xf]
        %v3406 = vld [vmem:[%s10 + $0x20] sm:$0xf]
        %v3407 = vld [vmem:[%s10 + $0x24] sm:$0xf]
        %v3408 = vld [vmem:[%s10 + $0x28] sm:$0xf]
        %v3409 = vld [vmem:[%s10 + $0x2c] sm:$0xf]
        %v3410 = vld [vmem:[%s10 + $0x30] sm:$0xf]
        %v3411 = vld [vmem:[%s10 + $0x34] sm:$0xf]
        %v3412 = vld [vmem:[%s10 + $0x38] sm:$0xf]
        %v3413 = vld [vmem:[%s10 + $0x3c] sm:$0xf]
        %v3430 = vunpack.c.l.b16 %v3398
        %v3431 = vunpack.c.l.b16 %v3399
        %v3432 = vunpack.c.l.b16 %v3400
        %v3433 = vunpack.c.l.b16 %v3401
        %v3434 = vunpack.c.l.b16 %v3402
        %v3435 = vunpack.c.l.b16 %v3403
        %v3436 = vunpack.c.l.b16 %v3404
        %v3437 = vunpack.c.l.b16 %v3405
        %v3438 = vunpack.c.l.b16 %v3406
        %v3439 = vunpack.c.l.b16 %v3407
        %v3440 = vunpack.c.l.b16 %v3408
        %v3441 = vunpack.c.l.b16 %v3409
        %v3442 = vunpack.c.l.b16 %v3410
        %v3443 = vunpack.c.l.b16 %v3411
        %v3444 = vunpack.c.l.b16 %v3412
        %v3445 = vunpack.c.l.b16 %v3413
        %v3446 = vpack.c.b16 %v3431, %v3430
        %v3447 = vpack.c.b16 %v3433, %v3432
        %v3448 = vpack.c.b16 %v3435, %v3434
        %v3449 = vpack.c.b16 %v3437, %v3436
        %v3450 = vpack.c.b16 %v3439, %v3438
        %v3451 = vpack.c.b16 %v3441, %v3440
        %v3452 = vpack.c.b16 %v3443, %v3442
        %v3453 = vpack.c.b16 %v3445, %v3444
        %3462 = vmatprep.subr.bf16.mxu0 0
        %3463 = vmatpush1.bf16.msra.mxu0 %v3453
        %3464 = vmatprep.subr.bf16.mxu0 0
        %3465 = vmatpush1.bf16.msra.mxu0 %v3452
        %3466 = vmatprep.subr.bf16.mxu0 0
        %3467 = vmatpush1.bf16.msra.mxu0 %v3451
        %3468 = vmatprep.subr.bf16.mxu0 0
        %3469 = vmatpush1.bf16.msra.mxu0 %v3450
        %3470 = vmatprep.subr.bf16.mxu0 0
        %3471 = vmatpush1.bf16.msra.mxu0 %v3449
        %3472 = vmatprep.subr.bf16.mxu0 0
        %3473 = vmatpush1.bf16.msra.mxu0 %v3448
        %3474 = vmatprep.subr.bf16.mxu0 0
        %3475 = vmatpush1.bf16.msra.mxu0 %v3447
        %3476 = vmatprep.subr.bf16.mxu0 0
        %3477 = vmatpush1.bf16.msra.mxu0 %v3446
        %3478 = vmatprep.subr.bf16.mxu0 0
        %3479 = vmatpush2.bf16.msra.mxu0 0
        %3480 = vmatprep.subr.bf16.mxu0 0
        %3481 = vmatpush2.bf16.msra.mxu0 0
        %3482 = vmatprep.subr.bf16.mxu0 0
        %3483 = vmatpush2.bf16.msra.mxu0 0
        %3484 = vmatprep.subr.bf16.mxu0 0
        %3485 = vmatpush2.bf16.msra.mxu0 0
        %3486 = vmatprep.subr.bf16.mxu0 0
        %3487 = vmatpush2.bf16.msra.mxu0 0
        %3488 = vmatprep.subr.bf16.mxu0 0
        %3489 = vmatpush2.bf16.msra.mxu0 0
        %3490 = vmatprep.subr.bf16.mxu0 0
        %3491 = vmatpush2.bf16.msra.mxu0 0
        %3492 = vmatprep.subr.bf16.mxu0 0
        %3493 = vmatpush2.bf16.msra.mxu0 0
        %3494 = vmatprep.mubr.bf16.mxu0 0
        %3495 = vmatmul.mubr.bf16.gmra.mxu0 %v840
        %v3496 = vpop.f32.mrf.mxu0
        %v3497 = vadd.f32 0.0, %v3496
        %v3498 = vpop.f32.mrf.mxu0
        %v3499 = vpop.f32.mrf.mxu0
        %v3500 = vadd.f32 0.0, %v3499
        %v3501 = vpop.f32.mrf.mxu0
        %3502 = vmatprep.mubr.bf16.mxu0 0
        %3503 = vmatmul.mubr.bf16.gmra.mxu0 %v841
        %v3504 = vpop.f32.mrf.mxu0
        %v3505 = vadd.f32 0.0, %v3504
        %v3506 = vpop.f32.mrf.mxu0
        %v3507 = vpop.f32.mrf.mxu0
        %v3508 = vadd.f32 0.0, %v3507
        %v3509 = vpop.f32.mrf.mxu0
        %3510 = vmatprep.mubr.bf16.mxu0 0
        %3511 = vmatmul.mubr.bf16.gmra.mxu0 %v842
        %v3512 = vpop.f32.mrf.mxu0
        %v3513 = vadd.f32 0.0, %v3512
        %v3514 = vpop.f32.mrf.mxu0
        %v3515 = vpop.f32.mrf.mxu0
        %v3516 = vadd.f32 0.0, %v3515
        %v3517 = vpop.f32.mrf.mxu0
        %3518 = vmatprep.mubr.bf16.mxu0 0
        %3519 = vmatmul.mubr.bf16.gmra.mxu0 %v843
        %v3520 = vpop.f32.mrf.mxu0
        %v3521 = vadd.f32 0.0, %v3520
        %v3522 = vpop.f32.mrf.mxu0
        %v3523 = vpop.f32.mrf.mxu0
        %v3524 = vadd.f32 0.0, %v3523
        %v3525 = vpop.f32.mrf.mxu0
        %3526 = vmatprep.mubr.bf16.mxu0 0
        %3527 = vmatmul.mubr.bf16.gmra.mxu0 %v844
        %v3528 = vpop.f32.mrf.mxu0
        %v3529 = vadd.f32 0.0, %v3528
        %v3530 = vpop.f32.mrf.mxu0
        %v3531 = vpop.f32.mrf.mxu0
        %v3532 = vadd.f32 0.0, %v3531
        %v3533 = vpop.f32.mrf.mxu0
        %3534 = vmatprep.mubr.bf16.mxu0 0
        %3535 = vmatmul.mubr.bf16.gmra.mxu0 %v845
        %v3536 = vpop.f32.mrf.mxu0
        %v3537 = vadd.f32 0.0, %v3536
        %v3538 = vpop.f32.mrf.mxu0
        %v3539 = vpop.f32.mrf.mxu0
        %v3540 = vadd.f32 0.0, %v3539
        %v3541 = vpop.f32.mrf.mxu0
        %3542 = vmatprep.mubr.bf16.mxu0 0
        %3543 = vmatmul.mubr.bf16.gmra.mxu0 %v846
        %v3544 = vpop.f32.mrf.mxu0
        %v3545 = vadd.f32 0.0, %v3544
        %v3546 = vpop.f32.mrf.mxu0
        %v3547 = vpop.f32.mrf.mxu0
        %v3548 = vadd.f32 0.0, %v3547
        %v3549 = vpop.f32.mrf.mxu0
        %3550 = vmatprep.mubr.bf16.mxu0 0
        %3551 = vmatmul.mubr.bf16.gmra.mxu0 %v847
        %v3552 = vpop.f32.mrf.mxu0
        %v3553 = vadd.f32 0.0, %v3552
        %v3554 = vpop.f32.mrf.mxu0
        %v3555 = vpop.f32.mrf.mxu0
        %v3556 = vadd.f32 0.0, %v3555
        %v3557 = vpop.f32.mrf.mxu0
        %3558 = vmatprep.mubr.bf16.mxu0 0
        %3559 = vmatmul.mubr.bf16.gmra.mxu0 %v848
        %v3560 = vpop.f32.mrf.mxu0
        %v3561 = vadd.f32 0.0, %v3560
        %v3562 = vpop.f32.mrf.mxu0
        %v3563 = vpop.f32.mrf.mxu0
        %v3564 = vadd.f32 0.0, %v3563
        %v3565 = vpop.f32.mrf.mxu0
        %3566 = vmatprep.mubr.bf16.mxu0 0
        %3567 = vmatmul.mubr.bf16.gmra.mxu0 %v849
        %v3568 = vpop.f32.mrf.mxu0
        %v3569 = vadd.f32 0.0, %v3568
        %v3570 = vpop.f32.mrf.mxu0
        %v3571 = vpop.f32.mrf.mxu0
        %v3572 = vadd.f32 0.0, %v3571
        %v3573 = vpop.f32.mrf.mxu0
        %3574 = vmatprep.mubr.bf16.mxu0 0
        %3575 = vmatmul.mubr.bf16.gmra.mxu0 %v850
        %v3576 = vpop.f32.mrf.mxu0
        %v3577 = vadd.f32 0.0, %v3576
        %v3578 = vpop.f32.mrf.mxu0
        %v3579 = vpop.f32.mrf.mxu0
        %v3580 = vadd.f32 0.0, %v3579
        %v3581 = vpop.f32.mrf.mxu0
        %3582 = vmatprep.mubr.bf16.mxu0 0
        %3583 = vmatmul.mubr.bf16.gmra.mxu0 %v851
        %v3584 = vpop.f32.mrf.mxu0
        %v3585 = vadd.f32 0.0, %v3584
        %v3586 = vpop.f32.mrf.mxu0
        %v3587 = vpop.f32.mrf.mxu0
        %v3588 = vadd.f32 0.0, %v3587
        %v3589 = vpop.f32.mrf.mxu0
        %3590 = vmatprep.mubr.bf16.mxu0 0
        %3591 = vmatmul.mubr.bf16.gmra.mxu0 %v852
        %v3592 = vpop.f32.mrf.mxu0
        %v3593 = vadd.f32 0.0, %v3592
        %v3594 = vpop.f32.mrf.mxu0
        %v3595 = vpop.f32.mrf.mxu0
        %v3596 = vadd.f32 0.0, %v3595
        %v3597 = vpop.f32.mrf.mxu0
        %3598 = vmatprep.mubr.bf16.mxu0 0
        %3599 = vmatmul.mubr.bf16.gmra.mxu0 %v853
        %v3600 = vpop.f32.mrf.mxu0
        %v3601 = vadd.f32 0.0, %v3600
        %v3602 = vpop.f32.mrf.mxu0
        %v3603 = vpop.f32.mrf.mxu0
        %v3604 = vadd.f32 0.0, %v3603
        %v3605 = vpop.f32.mrf.mxu0
        %3606 = vmatprep.mubr.bf16.mxu0 0
        %3607 = vmatmul.mubr.bf16.gmra.mxu0 %v854
        %v3608 = vpop.f32.mrf.mxu0
        %v3609 = vadd.f32 0.0, %v3608
        %v3610 = vpop.f32.mrf.mxu0
        %v3611 = vpop.f32.mrf.mxu0
        %v3612 = vadd.f32 0.0, %v3611
        %v3613 = vpop.f32.mrf.mxu0
        %3614 = vmatprep.mubr.bf16.mxu0 0
        %3615 = vmatmul.mubr.bf16.gmra.mxu0 %v855
        %v3616 = vpop.f32.mrf.mxu0
        %v3617 = vadd.f32 0.0, %v3616
        %v3618 = vpop.f32.mrf.mxu0
        %v3619 = vpop.f32.mrf.mxu0
        %v3620 = vadd.f32 0.0, %v3619
        %v3621 = vpop.f32.mrf.mxu0
        %3622 = vmatprep.mubr.bf16.mxu0 0
        %3623 = vmatmul.mubr.bf16.gmra.mxu0 %v856
        %v3624 = vpop.f32.mrf.mxu0
        %v3625 = vadd.f32 0.0, %v3624
        %v3626 = vpop.f32.mrf.mxu0
        %v3627 = vpop.f32.mrf.mxu0
        %v3628 = vadd.f32 0.0, %v3627
        %v3629 = vpop.f32.mrf.mxu0
        %3630 = vmatprep.mubr.bf16.mxu0 0
        %3631 = vmatmul.mubr.bf16.gmra.mxu0 %v857
        %v3632 = vpop.f32.mrf.mxu0
        %v3633 = vadd.f32 0.0, %v3632
        %v3634 = vpop.f32.mrf.mxu0
        %v3635 = vpop.f32.mrf.mxu0
        %v3636 = vadd.f32 0.0, %v3635
        %v3637 = vpop.f32.mrf.mxu0
        %3638 = vmatprep.mubr.bf16.mxu0 0
        %3639 = vmatmul.mubr.bf16.gmra.mxu0 %v858
        %v3640 = vpop.f32.mrf.mxu0
        %v3641 = vadd.f32 0.0, %v3640
        %v3642 = vpop.f32.mrf.mxu0
        %v3643 = vpop.f32.mrf.mxu0
        %v3644 = vadd.f32 0.0, %v3643
        %v3645 = vpop.f32.mrf.mxu0
        %3646 = vmatprep.mubr.bf16.mxu0 0
        %3647 = vmatmul.mubr.bf16.gmra.mxu0 %v859
        %v3648 = vpop.f32.mrf.mxu0
        %v3649 = vadd.f32 0.0, %v3648
        %v3650 = vpop.f32.mrf.mxu0
        %v3651 = vpop.f32.mrf.mxu0
        %v3652 = vadd.f32 0.0, %v3651
        %v3653 = vpop.f32.mrf.mxu0
        %3654 = vmatprep.mubr.bf16.mxu0 0
        %3655 = vmatmul.mubr.bf16.gmra.mxu0 %v860
        %v3656 = vpop.f32.mrf.mxu0
        %v3657 = vadd.f32 0.0, %v3656
        %v3658 = vpop.f32.mrf.mxu0
        %v3659 = vpop.f32.mrf.mxu0
        %v3660 = vadd.f32 0.0, %v3659
        %v3661 = vpop.f32.mrf.mxu0
        %3662 = vmatprep.mubr.bf16.mxu0 0
        %3663 = vmatmul.mubr.bf16.gmra.mxu0 %v861
        %v3664 = vpop.f32.mrf.mxu0
        %v3665 = vadd.f32 0.0, %v3664
        %v3666 = vpop.f32.mrf.mxu0
        %v3667 = vpop.f32.mrf.mxu0
        %v3668 = vadd.f32 0.0, %v3667
        %v3669 = vpop.f32.mrf.mxu0
        %3670 = vmatprep.mubr.bf16.mxu0 0
        %3671 = vmatmul.mubr.bf16.gmra.mxu0 %v862
        %v3672 = vpop.f32.mrf.mxu0
        %v3673 = vadd.f32 0.0, %v3672
        %v3674 = vpop.f32.mrf.mxu0
        %v3675 = vpop.f32.mrf.mxu0
        %v3676 = vadd.f32 0.0, %v3675
        %v3677 = vpop.f32.mrf.mxu0
        %3678 = vmatprep.mubr.bf16.mxu0 0
        %3679 = vmatmul.mubr.bf16.gmra.mxu0 %v863
        %v3680 = vpop.f32.mrf.mxu0
        %v3681 = vadd.f32 0.0, %v3680
        %v3682 = vpop.f32.mrf.mxu0
        %v3683 = vpop.f32.mrf.mxu0
        %v3684 = vadd.f32 0.0, %v3683
        %v3685 = vpop.f32.mrf.mxu0
        %3686 = vmatprep.mubr.bf16.mxu0 0
        %3687 = vmatmul.mubr.bf16.gmra.mxu0 %v864
        %v3688 = vpop.f32.mrf.mxu0
        %v3689 = vadd.f32 0.0, %v3688
        %v3690 = vpop.f32.mrf.mxu0
        %v3691 = vpop.f32.mrf.mxu0
        %v3692 = vadd.f32 0.0, %v3691
        %v3693 = vpop.f32.mrf.mxu0
        %3694 = vmatprep.mubr.bf16.mxu0 0
        %3695 = vmatmul.mubr.bf16.gmra.mxu0 %v865
        %v3696 = vpop.f32.mrf.mxu0
        %v3697 = vadd.f32 0.0, %v3696
        %v3698 = vpop.f32.mrf.mxu0
        %v3699 = vpop.f32.mrf.mxu0
        %v3700 = vadd.f32 0.0, %v3699
        %v3701 = vpop.f32.mrf.mxu0
        %3702 = vmatprep.mubr.bf16.mxu0 0
        %3703 = vmatmul.mubr.bf16.gmra.mxu0 %v866
        %v3704 = vpop.f32.mrf.mxu0
        %v3705 = vadd.f32 0.0, %v3704
        %v3706 = vpop.f32.mrf.mxu0
        %v3707 = vpop.f32.mrf.mxu0
        %v3708 = vadd.f32 0.0, %v3707
        %v3709 = vpop.f32.mrf.mxu0
        %3710 = vmatprep.mubr.bf16.mxu0 0
        %3711 = vmatmul.mubr.bf16.gmra.mxu0 %v867
        %v3712 = vpop.f32.mrf.mxu0
        %v3713 = vadd.f32 0.0, %v3712
        %v3714 = vpop.f32.mrf.mxu0
        %v3715 = vpop.f32.mrf.mxu0
        %v3716 = vadd.f32 0.0, %v3715
        %v3717 = vpop.f32.mrf.mxu0
        %3718 = vmatprep.mubr.bf16.mxu0 0
        %3719 = vmatmul.mubr.bf16.gmra.mxu0 %v868
        %v3720 = vpop.f32.mrf.mxu0
        %v3721 = vadd.f32 0.0, %v3720
        %v3722 = vpop.f32.mrf.mxu0
        %v3723 = vpop.f32.mrf.mxu0
        %v3724 = vadd.f32 0.0, %v3723
        %v3725 = vpop.f32.mrf.mxu0
        %3726 = vmatprep.mubr.bf16.mxu0 0
        %3727 = vmatmul.mubr.bf16.gmra.mxu0 %v869
        %v3728 = vpop.f32.mrf.mxu0
        %v3729 = vadd.f32 0.0, %v3728
        %v3730 = vpop.f32.mrf.mxu0
        %v3731 = vpop.f32.mrf.mxu0
        %v3732 = vadd.f32 0.0, %v3731
        %v3733 = vpop.f32.mrf.mxu0
        %3734 = vmatprep.mubr.bf16.mxu0 0
        %3735 = vmatmul.mubr.bf16.gmra.mxu0 %v870
        %v3736 = vpop.f32.mrf.mxu0
        %v3737 = vadd.f32 0.0, %v3736
        %v3738 = vpop.f32.mrf.mxu0
        %v3739 = vpop.f32.mrf.mxu0
        %v3740 = vadd.f32 0.0, %v3739
        %v3741 = vpop.f32.mrf.mxu0
        %3742 = vmatprep.mubr.bf16.mxu0 0
        %3743 = vmatmul.mubr.bf16.gmra.mxu0 %v871
        %v3744 = vpop.f32.mrf.mxu0
        %v3745 = vadd.f32 0.0, %v3744
        %v3746 = vpop.f32.mrf.mxu0
        %v3747 = vpop.f32.mrf.mxu0
        %v3748 = vadd.f32 0.0, %v3747
        %v3749 = vpop.f32.mrf.mxu0
        %3750 = vdwg.mxu0
        %v3783 = vunpack.c.l.b16 %v3366
        %v3784 = vunpack.c.l.b16 %v3367
        %v3785 = vunpack.c.l.b16 %v3368
        %v3786 = vunpack.c.l.b16 %v3369
        %v3787 = vunpack.c.l.b16 %v3370
        %v3788 = vunpack.c.l.b16 %v3371
        %v3789 = vunpack.c.l.b16 %v3372
        %v3790 = vunpack.c.l.b16 %v3373
        %v3791 = vunpack.c.l.b16 %v3374
        %v3792 = vunpack.c.l.b16 %v3375
        %v3793 = vunpack.c.l.b16 %v3376
        %v3794 = vunpack.c.l.b16 %v3377
        %v3795 = vunpack.c.l.b16 %v3378
        %v3796 = vunpack.c.l.b16 %v3379
        %v3797 = vunpack.c.l.b16 %v3380
        %v3798 = vunpack.c.l.b16 %v3381
        %v3799 = vunpack.c.l.b16 %v3382
        %v3800 = vunpack.c.l.b16 %v3383
        %v3801 = vunpack.c.l.b16 %v3384
        %v3802 = vunpack.c.l.b16 %v3385
        %v3803 = vunpack.c.l.b16 %v3386
        %v3804 = vunpack.c.l.b16 %v3387
        %v3805 = vunpack.c.l.b16 %v3388
        %v3806 = vunpack.c.l.b16 %v3389
        %v3807 = vunpack.c.l.b16 %v3390
        %v3808 = vunpack.c.l.b16 %v3391
        %v3809 = vunpack.c.l.b16 %v3392
        %v3810 = vunpack.c.l.b16 %v3393
        %v3811 = vunpack.c.l.b16 %v3394
        %v3812 = vunpack.c.l.b16 %v3395
        %v3813 = vunpack.c.l.b16 %v3396
        %v3814 = vunpack.c.l.b16 %v3397
        %v3815 = vpack.c.b16 %v3784, %v3783
        %v3816 = vpack.c.b16 %v3786, %v3785
        %v3817 = vpack.c.b16 %v3788, %v3787
        %v3818 = vpack.c.b16 %v3790, %v3789
        %v3819 = vpack.c.b16 %v3792, %v3791
        %v3820 = vpack.c.b16 %v3794, %v3793
        %v3821 = vpack.c.b16 %v3796, %v3795
        %v3822 = vpack.c.b16 %v3798, %v3797
        %v3823 = vpack.c.b16 %v3800, %v3799
        %v3824 = vpack.c.b16 %v3802, %v3801
        %v3825 = vpack.c.b16 %v3804, %v3803
        %v3826 = vpack.c.b16 %v3806, %v3805
        %v3827 = vpack.c.b16 %v3808, %v3807
        %v3828 = vpack.c.b16 %v3810, %v3809
        %v3829 = vpack.c.b16 %v3812, %v3811
        %v3830 = vpack.c.b16 %v3814, %v3813
        %3847 = vmatprep.subr.bf16.mxu0 0
        %3848 = vmatpush1.bf16.msra.mxu0 %v3822
        %3849 = vmatprep.subr.bf16.mxu0 0
        %3850 = vmatpush1.bf16.msra.mxu0 %v3821
        %3851 = vmatprep.subr.bf16.mxu0 0
        %3852 = vmatpush1.bf16.msra.mxu0 %v3820
        %3853 = vmatprep.subr.bf16.mxu0 0
        %3854 = vmatpush1.bf16.msra.mxu0 %v3819
        %3855 = vmatprep.subr.bf16.mxu0 0
        %3856 = vmatpush1.bf16.msra.mxu0 %v3818
        %3857 = vmatprep.subr.bf16.mxu0 0
        %3858 = vmatpush1.bf16.msra.mxu0 %v3817
        %3859 = vmatprep.subr.bf16.mxu0 0
        %3860 = vmatpush1.bf16.msra.mxu0 %v3816
        %3861 = vmatprep.subr.bf16.mxu0 0
        %3862 = vmatpush1.bf16.msra.mxu0 %v3815
        %3863 = vmatprep.subr.bf16.mxu0 0
        %3864 = vmatpush2.bf16.msra.mxu0 %v3830
        %3865 = vmatprep.subr.bf16.mxu0 0
        %3866 = vmatpush2.bf16.msra.mxu0 %v3829
        %3867 = vmatprep.subr.bf16.mxu0 0
        %3868 = vmatpush2.bf16.msra.mxu0 %v3828
        %3869 = vmatprep.subr.bf16.mxu0 0
        %3870 = vmatpush2.bf16.msra.mxu0 %v3827
        %3871 = vmatprep.subr.bf16.mxu0 0
        %3872 = vmatpush2.bf16.msra.mxu0 %v3826
        %3873 = vmatprep.subr.bf16.mxu0 0
        %3874 = vmatpush2.bf16.msra.mxu0 %v3825
        %3875 = vmatprep.subr.bf16.mxu0 0
        %3876 = vmatpush2.bf16.msra.mxu0 %v3824
        %3877 = vmatprep.subr.bf16.mxu0 0
        %3878 = vmatpush2.bf16.msra.mxu0 %v3823
        %3879 = vmatprep.mubr.bf16.mxu0 %v2836
        %3880 = vmatmul.mubr.bf16.gmra.mxu0 %v2835
        %v3881 = vpop.f32.mrf.mxu0
        %v3882 = vadd.f32 %v3497, %v3881
        %v3883 = vpop.f32.mrf.mxu0
        %v3884 = vpop.f32.mrf.mxu0
        %v3885 = vadd.f32 %v3500, %v3884
        %v3886 = vpop.f32.mrf.mxu0
        %3887 = vmatprep.mubr.bf16.mxu0 %v2838
        %3888 = vmatmul.mubr.bf16.gmra.mxu0 %v2837
        %v3889 = vpop.f32.mrf.mxu0
        %v3890 = vadd.f32 %v3505, %v3889
        %v3891 = vpop.f32.mrf.mxu0
        %v3892 = vpop.f32.mrf.mxu0
        %v3893 = vadd.f32 %v3508, %v3892
        %v3894 = vpop.f32.mrf.mxu0
        %3895 = vmatprep.mubr.bf16.mxu0 %v2840
        %3896 = vmatmul.mubr.bf16.gmra.mxu0 %v2839
        %v3897 = vpop.f32.mrf.mxu0
        %v3898 = vadd.f32 %v3513, %v3897
        %v3899 = vpop.f32.mrf.mxu0
        %v3900 = vpop.f32.mrf.mxu0
        %v3901 = vadd.f32 %v3516, %v3900
        %v3902 = vpop.f32.mrf.mxu0
        %3903 = vmatprep.mubr.bf16.mxu0 %v2842
        %3904 = vmatmul.mubr.bf16.gmra.mxu0 %v2841
        %v3905 = vpop.f32.mrf.mxu0
        %v3906 = vadd.f32 %v3521, %v3905
        %v3907 = vpop.f32.mrf.mxu0
        %v3908 = vpop.f32.mrf.mxu0
        %v3909 = vadd.f32 %v3524, %v3908
        %v3910 = vpop.f32.mrf.mxu0
        %3911 = vmatprep.mubr.bf16.mxu0 %v2844
        %3912 = vmatmul.mubr.bf16.gmra.mxu0 %v2843
        %v3913 = vpop.f32.mrf.mxu0
        %v3914 = vadd.f32 %v3529, %v3913
        %v3915 = vpop.f32.mrf.mxu0
        %v3916 = vpop.f32.mrf.mxu0
        %v3917 = vadd.f32 %v3532, %v3916
        %v3918 = vpop.f32.mrf.mxu0
        %3919 = vmatprep.mubr.bf16.mxu0 %v2846
        %3920 = vmatmul.mubr.bf16.gmra.mxu0 %v2845
        %v3921 = vpop.f32.mrf.mxu0
        %v3922 = vadd.f32 %v3537, %v3921
        %v3923 = vpop.f32.mrf.mxu0
        %v3924 = vpop.f32.mrf.mxu0
        %v3925 = vadd.f32 %v3540, %v3924
        %v3926 = vpop.f32.mrf.mxu0
        %3927 = vmatprep.mubr.bf16.mxu0 %v2848
        %3928 = vmatmul.mubr.bf16.gmra.mxu0 %v2847
        %v3929 = vpop.f32.mrf.mxu0
        %v3930 = vadd.f32 %v3545, %v3929
        %v3931 = vpop.f32.mrf.mxu0
        %v3932 = vpop.f32.mrf.mxu0
        %v3933 = vadd.f32 %v3548, %v3932
        %v3934 = vpop.f32.mrf.mxu0
        %3935 = vmatprep.mubr.bf16.mxu0 %v2850
        %3936 = vmatmul.mubr.bf16.gmra.mxu0 %v2849
        %v3937 = vpop.f32.mrf.mxu0
        %v3938 = vadd.f32 %v3553, %v3937
        %v3939 = vpop.f32.mrf.mxu0
        %v3940 = vpop.f32.mrf.mxu0
        %v3941 = vadd.f32 %v3556, %v3940
        %v3942 = vpop.f32.mrf.mxu0
        %3943 = vmatprep.mubr.bf16.mxu0 %v2852
        %3944 = vmatmul.mubr.bf16.gmra.mxu0 %v2851
        %v3945 = vpop.f32.mrf.mxu0
        %v3946 = vadd.f32 %v3561, %v3945
        %v3947 = vpop.f32.mrf.mxu0
        %v3948 = vpop.f32.mrf.mxu0
        %v3949 = vadd.f32 %v3564, %v3948
        %v3950 = vpop.f32.mrf.mxu0
        %3951 = vmatprep.mubr.bf16.mxu0 %v2854
        %3952 = vmatmul.mubr.bf16.gmra.mxu0 %v2853
        %v3953 = vpop.f32.mrf.mxu0
        %v3954 = vadd.f32 %v3569, %v3953
        %v3955 = vpop.f32.mrf.mxu0
        %v3956 = vpop.f32.mrf.mxu0
        %v3957 = vadd.f32 %v3572, %v3956
        %v3958 = vpop.f32.mrf.mxu0
        %3959 = vmatprep.mubr.bf16.mxu0 %v2856
        %3960 = vmatmul.mubr.bf16.gmra.mxu0 %v2855
        %v3961 = vpop.f32.mrf.mxu0
        %v3962 = vadd.f32 %v3577, %v3961
        %v3963 = vpop.f32.mrf.mxu0
        %v3964 = vpop.f32.mrf.mxu0
        %v3965 = vadd.f32 %v3580, %v3964
        %v3966 = vpop.f32.mrf.mxu0
        %3967 = vmatprep.mubr.bf16.mxu0 %v2858
        %3968 = vmatmul.mubr.bf16.gmra.mxu0 %v2857
        %v3969 = vpop.f32.mrf.mxu0
        %v3970 = vadd.f32 %v3585, %v3969
        %v3971 = vpop.f32.mrf.mxu0
        %v3972 = vpop.f32.mrf.mxu0
        %v3973 = vadd.f32 %v3588, %v3972
        %v3974 = vpop.f32.mrf.mxu0
        %3975 = vmatprep.mubr.bf16.mxu0 %v2860
        %3976 = vmatmul.mubr.bf16.gmra.mxu0 %v2859
        %v3977 = vpop.f32.mrf.mxu0
        %v3978 = vadd.f32 %v3593, %v3977
        %v3979 = vpop.f32.mrf.mxu0
        %v3980 = vpop.f32.mrf.mxu0
        %v3981 = vadd.f32 %v3596, %v3980
        %v3982 = vpop.f32.mrf.mxu0
        %3983 = vmatprep.mubr.bf16.mxu0 %v2862
        %3984 = vmatmul.mubr.bf16.gmra.mxu0 %v2861
        %v3985 = vpop.f32.mrf.mxu0
        %v3986 = vadd.f32 %v3601, %v3985
        %v3987 = vpop.f32.mrf.mxu0
        %v3988 = vpop.f32.mrf.mxu0
        %v3989 = vadd.f32 %v3604, %v3988
        %v3990 = vpop.f32.mrf.mxu0
        %3991 = vmatprep.mubr.bf16.mxu0 %v2864
        %3992 = vmatmul.mubr.bf16.gmra.mxu0 %v2863
        %v3993 = vpop.f32.mrf.mxu0
        %v3994 = vadd.f32 %v3609, %v3993
        %v3995 = vpop.f32.mrf.mxu0
        %v3996 = vpop.f32.mrf.mxu0
        %v3997 = vadd.f32 %v3612, %v3996
        %v3998 = vpop.f32.mrf.mxu0
        %3999 = vmatprep.mubr.bf16.mxu0 %v2866
        %4000 = vmatmul.mubr.bf16.gmra.mxu0 %v2865
        %v4001 = vpop.f32.mrf.mxu0
        %v4002 = vadd.f32 %v3617, %v4001
        %v4003 = vpop.f32.mrf.mxu0
        %v4004 = vpop.f32.mrf.mxu0
        %v4005 = vadd.f32 %v3620, %v4004
        %v4006 = vpop.f32.mrf.mxu0
        %4007 = vmatprep.mubr.bf16.mxu0 %v2868
        %4008 = vmatmul.mubr.bf16.gmra.mxu0 %v2867
        %v4009 = vpop.f32.mrf.mxu0
        %v4010 = vadd.f32 %v3625, %v4009
        %v4011 = vpop.f32.mrf.mxu0
        %v4012 = vpop.f32.mrf.mxu0
        %v4013 = vadd.f32 %v3628, %v4012
        %v4014 = vpop.f32.mrf.mxu0
        %4015 = vmatprep.mubr.bf16.mxu0 %v2870
        %4016 = vmatmul.mubr.bf16.gmra.mxu0 %v2869
        %v4017 = vpop.f32.mrf.mxu0
        %v4018 = vadd.f32 %v3633, %v4017
        %v4019 = vpop.f32.mrf.mxu0
        %v4020 = vpop.f32.mrf.mxu0
        %v4021 = vadd.f32 %v3636, %v4020
        %v4022 = vpop.f32.mrf.mxu0
        %4023 = vmatprep.mubr.bf16.mxu0 %v2872
        %4024 = vmatmul.mubr.bf16.gmra.mxu0 %v2871
        %v4025 = vpop.f32.mrf.mxu0
        %v4026 = vadd.f32 %v3641, %v4025
        %v4027 = vpop.f32.mrf.mxu0
        %v4028 = vpop.f32.mrf.mxu0
        %v4029 = vadd.f32 %v3644, %v4028
        %v4030 = vpop.f32.mrf.mxu0
        %4031 = vmatprep.mubr.bf16.mxu0 %v2874
        %4032 = vmatmul.mubr.bf16.gmra.mxu0 %v2873
        %v4033 = vpop.f32.mrf.mxu0
        %v4034 = vadd.f32 %v3649, %v4033
        %v4035 = vpop.f32.mrf.mxu0
        %v4036 = vpop.f32.mrf.mxu0
        %v4037 = vadd.f32 %v3652, %v4036
        %v4038 = vpop.f32.mrf.mxu0
        %4039 = vmatprep.mubr.bf16.mxu0 %v2876
        %4040 = vmatmul.mubr.bf16.gmra.mxu0 %v2875
        %v4041 = vpop.f32.mrf.mxu0
        %v4042 = vadd.f32 %v3657, %v4041
        %v4043 = vpop.f32.mrf.mxu0
        %v4044 = vpop.f32.mrf.mxu0
        %v4045 = vadd.f32 %v3660, %v4044
        %v4046 = vpop.f32.mrf.mxu0
        %4047 = vmatprep.mubr.bf16.mxu0 %v2878
        %4048 = vmatmul.mubr.bf16.gmra.mxu0 %v2877
        %v4049 = vpop.f32.mrf.mxu0
        %v4050 = vadd.f32 %v3665, %v4049
        %v4051 = vpop.f32.mrf.mxu0
        %v4052 = vpop.f32.mrf.mxu0
        %v4053 = vadd.f32 %v3668, %v4052
        %v4054 = vpop.f32.mrf.mxu0
        %4055 = vmatprep.mubr.bf16.mxu0 %v2880
        %4056 = vmatmul.mubr.bf16.gmra.mxu0 %v2879
        %v4057 = vpop.f32.mrf.mxu0
        %v4058 = vadd.f32 %v3673, %v4057
        %v4059 = vpop.f32.mrf.mxu0
        %v4060 = vpop.f32.mrf.mxu0
        %v4061 = vadd.f32 %v3676, %v4060
        %v4062 = vpop.f32.mrf.mxu0
        %4063 = vmatprep.mubr.bf16.mxu0 %v2882
        %4064 = vmatmul.mubr.bf16.gmra.mxu0 %v2881
        %v4065 = vpop.f32.mrf.mxu0
        %v4066 = vadd.f32 %v3681, %v4065
        %v4067 = vpop.f32.mrf.mxu0
        %v4068 = vpop.f32.mrf.mxu0
        %v4069 = vadd.f32 %v3684, %v4068
        %v4070 = vpop.f32.mrf.mxu0
        %4071 = vmatprep.mubr.bf16.mxu0 %v2884
        %4072 = vmatmul.mubr.bf16.gmra.mxu0 %v2883
        %v4073 = vpop.f32.mrf.mxu0
        %v4074 = vadd.f32 %v3689, %v4073
        %v4075 = vpop.f32.mrf.mxu0
        %v4076 = vpop.f32.mrf.mxu0
        %v4077 = vadd.f32 %v3692, %v4076
        %v4078 = vpop.f32.mrf.mxu0
        %4079 = vmatprep.mubr.bf16.mxu0 %v2886
        %4080 = vmatmul.mubr.bf16.gmra.mxu0 %v2885
        %v4081 = vpop.f32.mrf.mxu0
        %v4082 = vadd.f32 %v3697, %v4081
        %v4083 = vpop.f32.mrf.mxu0
        %v4084 = vpop.f32.mrf.mxu0
        %v4085 = vadd.f32 %v3700, %v4084
        %v4086 = vpop.f32.mrf.mxu0
        %4087 = vmatprep.mubr.bf16.mxu0 %v2888
        %4088 = vmatmul.mubr.bf16.gmra.mxu0 %v2887
        %v4089 = vpop.f32.mrf.mxu0
        %v4090 = vadd.f32 %v3705, %v4089
        %v4091 = vpop.f32.mrf.mxu0
        %v4092 = vpop.f32.mrf.mxu0
        %v4093 = vadd.f32 %v3708, %v4092
        %v4094 = vpop.f32.mrf.mxu0
        %4095 = vmatprep.mubr.bf16.mxu0 %v2890
        %4096 = vmatmul.mubr.bf16.gmra.mxu0 %v2889
        %v4097 = vpop.f32.mrf.mxu0
        %v4098 = vadd.f32 %v3713, %v4097
        %v4099 = vpop.f32.mrf.mxu0
        %v4100 = vpop.f32.mrf.mxu0
        %v4101 = vadd.f32 %v3716, %v4100
        %v4102 = vpop.f32.mrf.mxu0
        %4103 = vmatprep.mubr.bf16.mxu0 %v2892
        %4104 = vmatmul.mubr.bf16.gmra.mxu0 %v2891
        %v4105 = vpop.f32.mrf.mxu0
        %v4106 = vadd.f32 %v3721, %v4105
        %v4107 = vpop.f32.mrf.mxu0
        %v4108 = vpop.f32.mrf.mxu0
        %v4109 = vadd.f32 %v3724, %v4108
        %v4110 = vpop.f32.mrf.mxu0
        %4111 = vmatprep.mubr.bf16.mxu0 %v2894
        %4112 = vmatmul.mubr.bf16.gmra.mxu0 %v2893
        %v4113 = vpop.f32.mrf.mxu0
        %v4114 = vadd.f32 %v3729, %v4113
        %v4115 = vpop.f32.mrf.mxu0
        %v4116 = vpop.f32.mrf.mxu0
        %v4117 = vadd.f32 %v3732, %v4116
        %v4118 = vpop.f32.mrf.mxu0
        %4119 = vmatprep.mubr.bf16.mxu0 %v2896
        %4120 = vmatmul.mubr.bf16.gmra.mxu0 %v2895
        %v4121 = vpop.f32.mrf.mxu0
        %v4122 = vadd.f32 %v3737, %v4121
        %v4123 = vpop.f32.mrf.mxu0
        %v4124 = vpop.f32.mrf.mxu0
        %v4125 = vadd.f32 %v3740, %v4124
        %v4126 = vpop.f32.mrf.mxu0
        %4127 = vmatprep.mubr.bf16.mxu0 %v2898
        %4128 = vmatmul.mubr.bf16.gmra.mxu0 %v2897
        %v4129 = vpop.f32.mrf.mxu0
        %v4130 = vadd.f32 %v3745, %v4129
        %v4131 = vpop.f32.mrf.mxu0
        %v4132 = vpop.f32.mrf.mxu0
        %v4133 = vadd.f32 %v3748, %v4132
        %v4134 = vpop.f32.mrf.mxu0
        %4135 = vdwg.mxu0
        %v4136 = vld [vmem:[%s11] sm:$0x1]
        %v4138 = vlaneseq
        %v4139 = vshrl.u32 %v4138, 7
        %v4140 = vsub.s32 0, %v4139
        %v4141 = vrot.slane %v4136, %v4140
        %v4143 = vadd.f32 %v3882, %v4141
        %v4144 = vadd.f32 %v3885, %v4141
        %v4145 = vadd.f32 %v3890, %v4141
        %v4146 = vadd.f32 %v3893, %v4141
        %v4147 = vadd.f32 %v3898, %v4141
        %v4148 = vadd.f32 %v3901, %v4141
        %v4149 = vadd.f32 %v3906, %v4141
        %v4150 = vadd.f32 %v3909, %v4141
        %v4151 = vadd.f32 %v3914, %v4141
        %v4152 = vadd.f32 %v3917, %v4141
        %v4153 = vadd.f32 %v3922, %v4141
        %v4154 = vadd.f32 %v3925, %v4141
        %v4155 = vadd.f32 %v3930, %v4141
        %v4156 = vadd.f32 %v3933, %v4141
        %v4157 = vadd.f32 %v3938, %v4141
        %v4158 = vadd.f32 %v3941, %v4141
        %v4159 = vadd.f32 %v3946, %v4141
        %v4160 = vadd.f32 %v3949, %v4141
        %v4161 = vadd.f32 %v3954, %v4141
        %v4162 = vadd.f32 %v3957, %v4141
        %v4163 = vadd.f32 %v3962, %v4141
        %v4164 = vadd.f32 %v3965, %v4141
        %v4165 = vadd.f32 %v3970, %v4141
        %v4166 = vadd.f32 %v3973, %v4141
        %v4167 = vadd.f32 %v3978, %v4141
        %v4168 = vadd.f32 %v3981, %v4141
        %v4169 = vadd.f32 %v3986, %v4141
        %v4170 = vadd.f32 %v3989, %v4141
        %v4171 = vadd.f32 %v3994, %v4141
        %v4172 = vadd.f32 %v3997, %v4141
        %v4173 = vadd.f32 %v4002, %v4141
        %v4174 = vadd.f32 %v4005, %v4141
        %v4175 = vadd.f32 %v4010, %v4141
        %v4176 = vadd.f32 %v4013, %v4141
        %v4177 = vadd.f32 %v4018, %v4141
        %v4178 = vadd.f32 %v4021, %v4141
        %v4179 = vadd.f32 %v4026, %v4141
        %v4180 = vadd.f32 %v4029, %v4141
        %v4181 = vadd.f32 %v4034, %v4141
        %v4182 = vadd.f32 %v4037, %v4141
        %v4183 = vadd.f32 %v4042, %v4141
        %v4184 = vadd.f32 %v4045, %v4141
        %v4185 = vadd.f32 %v4050, %v4141
        %v4186 = vadd.f32 %v4053, %v4141
        %v4187 = vadd.f32 %v4058, %v4141
        %v4188 = vadd.f32 %v4061, %v4141
        %v4189 = vadd.f32 %v4066, %v4141
        %v4190 = vadd.f32 %v4069, %v4141
        %v4191 = vadd.f32 %v4074, %v4141
        %v4192 = vadd.f32 %v4077, %v4141
        %v4193 = vadd.f32 %v4082, %v4141
        %v4194 = vadd.f32 %v4085, %v4141
        %v4195 = vadd.f32 %v4090, %v4141
        %v4196 = vadd.f32 %v4093, %v4141
        %v4197 = vadd.f32 %v4098, %v4141
        %v4198 = vadd.f32 %v4101, %v4141
        %v4199 = vadd.f32 %v4106, %v4141
        %v4200 = vadd.f32 %v4109, %v4141
        %v4201 = vadd.f32 %v4114, %v4141
        %v4202 = vadd.f32 %v4117, %v4141
        %v4203 = vadd.f32 %v4122, %v4141
        %v4204 = vadd.f32 %v4125, %v4141
        %v4205 = vadd.f32 %v4130, %v4141
        %v4206 = vadd.f32 %v4133, %v4141
        %v4207 = vmax.f32 %v4143, 0.0
        %v4208 = vmax.f32 %v4144, 0.0
        %v4209 = vmax.f32 %v4145, 0.0
        %v4210 = vmax.f32 %v4146, 0.0
        %v4211 = vmax.f32 %v4147, 0.0
        %v4212 = vmax.f32 %v4148, 0.0
        %v4213 = vmax.f32 %v4149, 0.0
        %v4214 = vmax.f32 %v4150, 0.0
        %v4215 = vmax.f32 %v4151, 0.0
        %v4216 = vmax.f32 %v4152, 0.0
        %v4217 = vmax.f32 %v4153, 0.0
        %v4218 = vmax.f32 %v4154, 0.0
        %v4219 = vmax.f32 %v4155, 0.0
        %v4220 = vmax.f32 %v4156, 0.0
        %v4221 = vmax.f32 %v4157, 0.0
        %v4222 = vmax.f32 %v4158, 0.0
        %v4223 = vmax.f32 %v4159, 0.0
        %v4224 = vmax.f32 %v4160, 0.0
        %v4225 = vmax.f32 %v4161, 0.0
        %v4226 = vmax.f32 %v4162, 0.0
        %v4227 = vmax.f32 %v4163, 0.0
        %v4228 = vmax.f32 %v4164, 0.0
        %v4229 = vmax.f32 %v4165, 0.0
        %v4230 = vmax.f32 %v4166, 0.0
        %v4231 = vmax.f32 %v4167, 0.0
        %v4232 = vmax.f32 %v4168, 0.0
        %v4233 = vmax.f32 %v4169, 0.0
        %v4234 = vmax.f32 %v4170, 0.0
        %v4235 = vmax.f32 %v4171, 0.0
        %v4236 = vmax.f32 %v4172, 0.0
        %v4237 = vmax.f32 %v4173, 0.0
        %v4238 = vmax.f32 %v4174, 0.0
        %v4239 = vmax.f32 %v4175, 0.0
        %v4240 = vmax.f32 %v4176, 0.0
        %v4241 = vmax.f32 %v4177, 0.0
        %v4242 = vmax.f32 %v4178, 0.0
        %v4243 = vmax.f32 %v4179, 0.0
        %v4244 = vmax.f32 %v4180, 0.0
        %v4245 = vmax.f32 %v4181, 0.0
        %v4246 = vmax.f32 %v4182, 0.0
        %v4247 = vmax.f32 %v4183, 0.0
        %v4248 = vmax.f32 %v4184, 0.0
        %v4249 = vmax.f32 %v4185, 0.0
        %v4250 = vmax.f32 %v4186, 0.0
        %v4251 = vmax.f32 %v4187, 0.0
        %v4252 = vmax.f32 %v4188, 0.0
        %v4253 = vmax.f32 %v4189, 0.0
        %v4254 = vmax.f32 %v4190, 0.0
        %v4255 = vmax.f32 %v4191, 0.0
        %v4256 = vmax.f32 %v4192, 0.0
        %v4257 = vmax.f32 %v4193, 0.0
        %v4258 = vmax.f32 %v4194, 0.0
        %v4259 = vmax.f32 %v4195, 0.0
        %v4260 = vmax.f32 %v4196, 0.0
        %v4261 = vmax.f32 %v4197, 0.0
        %v4262 = vmax.f32 %v4198, 0.0
        %v4263 = vmax.f32 %v4199, 0.0
        %v4264 = vmax.f32 %v4200, 0.0
        %v4265 = vmax.f32 %v4201, 0.0
        %v4266 = vmax.f32 %v4202, 0.0
        %v4267 = vmax.f32 %v4203, 0.0
        %v4268 = vmax.f32 %v4204, 0.0
        %v4269 = vmax.f32 %v4205, 0.0
        %v4270 = vmax.f32 %v4206, 0.0
        %v4271 = vpack.c.bf16 %v4208, %v4207
        %v4272 = vpack.c.bf16 %v4210, %v4209
        %v4273 = vpack.c.bf16 %v4212, %v4211
        %v4274 = vpack.c.bf16 %v4214, %v4213
        %v4275 = vpack.c.bf16 %v4216, %v4215
        %v4276 = vpack.c.bf16 %v4218, %v4217
        %v4277 = vpack.c.bf16 %v4220, %v4219
        %v4278 = vpack.c.bf16 %v4222, %v4221
        %v4279 = vpack.c.bf16 %v4224, %v4223
        %v4280 = vpack.c.bf16 %v4226, %v4225
        %v4281 = vpack.c.bf16 %v4228, %v4227
        %v4282 = vpack.c.bf16 %v4230, %v4229
        %v4283 = vpack.c.bf16 %v4232, %v4231
        %v4284 = vpack.c.bf16 %v4234, %v4233
        %v4285 = vpack.c.bf16 %v4236, %v4235
        %v4286 = vpack.c.bf16 %v4238, %v4237
        %v4287 = vpack.c.bf16 %v4240, %v4239
        %v4288 = vpack.c.bf16 %v4242, %v4241
        %v4289 = vpack.c.bf16 %v4244, %v4243
        %v4290 = vpack.c.bf16 %v4246, %v4245
        %v4291 = vpack.c.bf16 %v4248, %v4247
        %v4292 = vpack.c.bf16 %v4250, %v4249
        %v4293 = vpack.c.bf16 %v4252, %v4251
        %v4294 = vpack.c.bf16 %v4254, %v4253
        %v4295 = vpack.c.bf16 %v4256, %v4255
        %v4296 = vpack.c.bf16 %v4258, %v4257
        %v4297 = vpack.c.bf16 %v4260, %v4259
        %v4298 = vpack.c.bf16 %v4262, %v4261
        %v4299 = vpack.c.bf16 %v4264, %v4263
        %v4300 = vpack.c.bf16 %v4266, %v4265
        %v4301 = vpack.c.bf16 %v4268, %v4267
        %v4302 = vpack.c.bf16 %v4270, %v4269
        %v4303 = vld [vmem:[#allocation11] sm:$0xf]
        %v4304 = vld [vmem:[#allocation11 + $0x4] sm:$0xf]
        %v4305 = vld [vmem:[#allocation11 + $0x8] sm:$0xf]
        %v4306 = vld [vmem:[#allocation11 + $0xc] sm:$0xf]
        %v4307 = vld [vmem:[#allocation11 + $0x10] sm:$0xf]
        %v4308 = vld [vmem:[#allocation11 + $0x14] sm:$0xf]
        %v4309 = vld [vmem:[#allocation11 + $0x18] sm:$0xf]
        %v4310 = vld [vmem:[#allocation11 + $0x1c] sm:$0xf]
        %v4311 = vld [vmem:[#allocation11 + $0x20] sm:$0xf]
        %v4312 = vld [vmem:[#allocation11 + $0x24] sm:$0xf]
        %v4313 = vld [vmem:[#allocation11 + $0x28] sm:$0xf]
        %v4314 = vld [vmem:[#allocation11 + $0x2c] sm:$0xf]
        %v4315 = vld [vmem:[#allocation11 + $0x30] sm:$0xf]
        %v4316 = vld [vmem:[#allocation11 + $0x34] sm:$0xf]
        %v4317 = vld [vmem:[#allocation11 + $0x38] sm:$0xf]
        %v4318 = vld [vmem:[#allocation11 + $0x3c] sm:$0xf]
        %v4319 = vld [vmem:[%s13] sm:$0x1]
        %v4321 = vlaneseq
        %v4322 = vshrl.u32 %v4321, 7
        %v4323 = vsub.s32 0, %v4322
        %v4324 = vrot.slane %v4319, %v4323
        %v4342 = vunpack.c.l.b16 %v4303
        %v4343 = vunpack.c.l.b16 %v4304
        %v4344 = vunpack.c.l.b16 %v4305
        %v4345 = vunpack.c.l.b16 %v4306
        %v4346 = vunpack.c.l.b16 %v4307
        %v4347 = vunpack.c.l.b16 %v4308
        %v4348 = vunpack.c.l.b16 %v4309
        %v4349 = vunpack.c.l.b16 %v4310
        %v4350 = vunpack.c.l.b16 %v4311
        %v4351 = vunpack.c.l.b16 %v4312
        %v4352 = vunpack.c.l.b16 %v4313
        %v4353 = vunpack.c.l.b16 %v4314
        %v4354 = vunpack.c.l.b16 %v4315
        %v4355 = vunpack.c.l.b16 %v4316
        %v4356 = vunpack.c.l.b16 %v4317
        %v4357 = vunpack.c.l.b16 %v4318
        %v4358 = vpack.c.b16 %v4343, %v4342
        %v4359 = vpack.c.b16 %v4345, %v4344
        %v4360 = vpack.c.b16 %v4347, %v4346
        %v4361 = vpack.c.b16 %v4349, %v4348
        %v4362 = vpack.c.b16 %v4351, %v4350
        %v4363 = vpack.c.b16 %v4353, %v4352
        %v4364 = vpack.c.b16 %v4355, %v4354
        %v4365 = vpack.c.b16 %v4357, %v4356
        %4374 = vmatprep.subr.bf16.mxu0 0
        %4375 = vmatpush1.bf16.msra.mxu0 %v4365
        %4376 = vmatprep.subr.bf16.mxu0 0
        %4377 = vmatpush1.bf16.msra.mxu0 %v4364
        %4378 = vmatprep.subr.bf16.mxu0 0
        %4379 = vmatpush1.bf16.msra.mxu0 %v4363
        %4380 = vmatprep.subr.bf16.mxu0 0
        %4381 = vmatpush1.bf16.msra.mxu0 %v4362
        %4382 = vmatprep.subr.bf16.mxu0 0
        %4383 = vmatpush1.bf16.msra.mxu0 %v4361
        %4384 = vmatprep.subr.bf16.mxu0 0
        %4385 = vmatpush1.bf16.msra.mxu0 %v4360
        %4386 = vmatprep.subr.bf16.mxu0 0
        %4387 = vmatpush1.bf16.msra.mxu0 %v4359
        %4388 = vmatprep.subr.bf16.mxu0 0
        %4389 = vmatpush1.bf16.msra.mxu0 %v4358
        %4390 = vmatprep.subr.bf16.mxu0 0
        %4391 = vmatpush2.bf16.msra.mxu0 0
        %4392 = vmatprep.subr.bf16.mxu0 0
        %4393 = vmatpush2.bf16.msra.mxu0 0
        %4394 = vmatprep.subr.bf16.mxu0 0
        %4395 = vmatpush2.bf16.msra.mxu0 0
        %4396 = vmatprep.subr.bf16.mxu0 0
        %4397 = vmatpush2.bf16.msra.mxu0 0
        %4398 = vmatprep.subr.bf16.mxu0 0
        %4399 = vmatpush2.bf16.msra.mxu0 0
        %4400 = vmatprep.subr.bf16.mxu0 0
        %4401 = vmatpush2.bf16.msra.mxu0 0
        %4402 = vmatprep.subr.bf16.mxu0 0
        %4403 = vmatpush2.bf16.msra.mxu0 0
        %4404 = vmatprep.subr.bf16.mxu0 0
        %4405 = vmatpush2.bf16.msra.mxu0 0
        %4406 = vmatprep.mubr.bf16.mxu0 0
        %4407 = vmatmul.mubr.bf16.gmra.mxu0 %v4271
        %v4408 = vpop.f32.mrf.mxu0
        %v4409 = vadd.f32 %v4324, %v4408
        %v4410 = vpop.f32.mrf.mxu0
        %v4411 = vpop.f32.mrf.mxu0
        %v4412 = vadd.f32 %v4324, %v4411
        %v4413 = vpop.f32.mrf.mxu0
        %4414 = vmatprep.mubr.bf16.mxu0 0
        %4415 = vmatmul.mubr.bf16.gmra.mxu0 %v4272
        %v4416 = vpop.f32.mrf.mxu0
        %v4417 = vadd.f32 %v4324, %v4416
        %v4418 = vpop.f32.mrf.mxu0
        %v4419 = vpop.f32.mrf.mxu0
        %v4420 = vadd.f32 %v4324, %v4419
        %v4421 = vpop.f32.mrf.mxu0
        %4422 = vmatprep.mubr.bf16.mxu0 0
        %4423 = vmatmul.mubr.bf16.gmra.mxu0 %v4273
        %v4424 = vpop.f32.mrf.mxu0
        %v4425 = vadd.f32 %v4324, %v4424
        %v4426 = vpop.f32.mrf.mxu0
        %v4427 = vpop.f32.mrf.mxu0
        %v4428 = vadd.f32 %v4324, %v4427
        %v4429 = vpop.f32.mrf.mxu0
        %4430 = vmatprep.mubr.bf16.mxu0 0
        %4431 = vmatmul.mubr.bf16.gmra.mxu0 %v4274
        %v4432 = vpop.f32.mrf.mxu0
        %v4433 = vadd.f32 %v4324, %v4432
        %v4434 = vpop.f32.mrf.mxu0
        %v4435 = vpop.f32.mrf.mxu0
        %v4436 = vadd.f32 %v4324, %v4435
        %v4437 = vpop.f32.mrf.mxu0
        %4438 = vmatprep.mubr.bf16.mxu0 0
        %4439 = vmatmul.mubr.bf16.gmra.mxu0 %v4275
        %v4440 = vpop.f32.mrf.mxu0
        %v4441 = vadd.f32 %v4324, %v4440
        %v4442 = vpop.f32.mrf.mxu0
        %v4443 = vpop.f32.mrf.mxu0
        %v4444 = vadd.f32 %v4324, %v4443
        %v4445 = vpop.f32.mrf.mxu0
        %4446 = vmatprep.mubr.bf16.mxu0 0
        %4447 = vmatmul.mubr.bf16.gmra.mxu0 %v4276
        %v4448 = vpop.f32.mrf.mxu0
        %v4449 = vadd.f32 %v4324, %v4448
        %v4450 = vpop.f32.mrf.mxu0
        %v4451 = vpop.f32.mrf.mxu0
        %v4452 = vadd.f32 %v4324, %v4451
        %v4453 = vpop.f32.mrf.mxu0
        %4454 = vmatprep.mubr.bf16.mxu0 0
        %4455 = vmatmul.mubr.bf16.gmra.mxu0 %v4277
        %v4456 = vpop.f32.mrf.mxu0
        %v4457 = vadd.f32 %v4324, %v4456
        %v4458 = vpop.f32.mrf.mxu0
        %v4459 = vpop.f32.mrf.mxu0
        %v4460 = vadd.f32 %v4324, %v4459
        %v4461 = vpop.f32.mrf.mxu0
        %4462 = vmatprep.mubr.bf16.mxu0 0
        %4463 = vmatmul.mubr.bf16.gmra.mxu0 %v4278
        %v4464 = vpop.f32.mrf.mxu0
        %v4465 = vadd.f32 %v4324, %v4464
        %v4466 = vpop.f32.mrf.mxu0
        %v4467 = vpop.f32.mrf.mxu0
        %v4468 = vadd.f32 %v4324, %v4467
        %v4469 = vpop.f32.mrf.mxu0
        %4470 = vmatprep.mubr.bf16.mxu0 0
        %4471 = vmatmul.mubr.bf16.gmra.mxu0 %v4279
        %v4472 = vpop.f32.mrf.mxu0
        %v4473 = vadd.f32 %v4324, %v4472
        %v4474 = vpop.f32.mrf.mxu0
        %v4475 = vpop.f32.mrf.mxu0
        %v4476 = vadd.f32 %v4324, %v4475
        %v4477 = vpop.f32.mrf.mxu0
        %4478 = vmatprep.mubr.bf16.mxu0 0
        %4479 = vmatmul.mubr.bf16.gmra.mxu0 %v4280
        %v4480 = vpop.f32.mrf.mxu0
        %v4481 = vadd.f32 %v4324, %v4480
        %v4482 = vpop.f32.mrf.mxu0
        %v4483 = vpop.f32.mrf.mxu0
        %v4484 = vadd.f32 %v4324, %v4483
        %v4485 = vpop.f32.mrf.mxu0
        %4486 = vmatprep.mubr.bf16.mxu0 0
        %4487 = vmatmul.mubr.bf16.gmra.mxu0 %v4281
        %v4488 = vpop.f32.mrf.mxu0
        %v4489 = vadd.f32 %v4324, %v4488
        %v4490 = vpop.f32.mrf.mxu0
        %v4491 = vpop.f32.mrf.mxu0
        %v4492 = vadd.f32 %v4324, %v4491
        %v4493 = vpop.f32.mrf.mxu0
        %4494 = vmatprep.mubr.bf16.mxu0 0
        %4495 = vmatmul.mubr.bf16.gmra.mxu0 %v4282
        %v4496 = vpop.f32.mrf.mxu0
        %v4497 = vadd.f32 %v4324, %v4496
        %v4498 = vpop.f32.mrf.mxu0
        %v4499 = vpop.f32.mrf.mxu0
        %v4500 = vadd.f32 %v4324, %v4499
        %v4501 = vpop.f32.mrf.mxu0
        %4502 = vmatprep.mubr.bf16.mxu0 0
        %4503 = vmatmul.mubr.bf16.gmra.mxu0 %v4283
        %v4504 = vpop.f32.mrf.mxu0
        %v4505 = vadd.f32 %v4324, %v4504
        %v4506 = vpop.f32.mrf.mxu0
        %v4507 = vpop.f32.mrf.mxu0
        %v4508 = vadd.f32 %v4324, %v4507
        %v4509 = vpop.f32.mrf.mxu0
        %4510 = vmatprep.mubr.bf16.mxu0 0
        %4511 = vmatmul.mubr.bf16.gmra.mxu0 %v4284
        %v4512 = vpop.f32.mrf.mxu0
        %v4513 = vadd.f32 %v4324, %v4512
        %v4514 = vpop.f32.mrf.mxu0
        %v4515 = vpop.f32.mrf.mxu0
        %v4516 = vadd.f32 %v4324, %v4515
        %v4517 = vpop.f32.mrf.mxu0
        %4518 = vmatprep.mubr.bf16.mxu0 0
        %4519 = vmatmul.mubr.bf16.gmra.mxu0 %v4285
        %v4520 = vpop.f32.mrf.mxu0
        %v4521 = vadd.f32 %v4324, %v4520
        %v4522 = vpop.f32.mrf.mxu0
        %v4523 = vpop.f32.mrf.mxu0
        %v4524 = vadd.f32 %v4324, %v4523
        %v4525 = vpop.f32.mrf.mxu0
        %4526 = vmatprep.mubr.bf16.mxu0 0
        %4527 = vmatmul.mubr.bf16.gmra.mxu0 %v4286
        %v4528 = vpop.f32.mrf.mxu0
        %v4529 = vadd.f32 %v4324, %v4528
        %v4530 = vpop.f32.mrf.mxu0
        %v4531 = vpop.f32.mrf.mxu0
        %v4532 = vadd.f32 %v4324, %v4531
        %v4533 = vpop.f32.mrf.mxu0
        %4534 = vmatprep.mubr.bf16.mxu0 0
        %4535 = vmatmul.mubr.bf16.gmra.mxu0 %v4287
        %v4536 = vpop.f32.mrf.mxu0
        %v4537 = vadd.f32 %v4324, %v4536
        %v4538 = vpop.f32.mrf.mxu0
        %v4539 = vpop.f32.mrf.mxu0
        %v4540 = vadd.f32 %v4324, %v4539
        %v4541 = vpop.f32.mrf.mxu0
        %4542 = vmatprep.mubr.bf16.mxu0 0
        %4543 = vmatmul.mubr.bf16.gmra.mxu0 %v4288
        %v4544 = vpop.f32.mrf.mxu0
        %v4545 = vadd.f32 %v4324, %v4544
        %v4546 = vpop.f32.mrf.mxu0
        %v4547 = vpop.f32.mrf.mxu0
        %v4548 = vadd.f32 %v4324, %v4547
        %v4549 = vpop.f32.mrf.mxu0
        %4550 = vmatprep.mubr.bf16.mxu0 0
        %4551 = vmatmul.mubr.bf16.gmra.mxu0 %v4289
        %v4552 = vpop.f32.mrf.mxu0
        %v4553 = vadd.f32 %v4324, %v4552
        %v4554 = vpop.f32.mrf.mxu0
        %v4555 = vpop.f32.mrf.mxu0
        %v4556 = vadd.f32 %v4324, %v4555
        %v4557 = vpop.f32.mrf.mxu0
        %4558 = vmatprep.mubr.bf16.mxu0 0
        %4559 = vmatmul.mubr.bf16.gmra.mxu0 %v4290
        %v4560 = vpop.f32.mrf.mxu0
        %v4561 = vadd.f32 %v4324, %v4560
        %v4562 = vpop.f32.mrf.mxu0
        %v4563 = vpop.f32.mrf.mxu0
        %v4564 = vadd.f32 %v4324, %v4563
        %v4565 = vpop.f32.mrf.mxu0
        %4566 = vmatprep.mubr.bf16.mxu0 0
        %4567 = vmatmul.mubr.bf16.gmra.mxu0 %v4291
        %v4568 = vpop.f32.mrf.mxu0
        %v4569 = vadd.f32 %v4324, %v4568
        %v4570 = vpop.f32.mrf.mxu0
        %v4571 = vpop.f32.mrf.mxu0
        %v4572 = vadd.f32 %v4324, %v4571
        %v4573 = vpop.f32.mrf.mxu0
        %4574 = vmatprep.mubr.bf16.mxu0 0
        %4575 = vmatmul.mubr.bf16.gmra.mxu0 %v4292
        %v4576 = vpop.f32.mrf.mxu0
        %v4577 = vadd.f32 %v4324, %v4576
        %v4578 = vpop.f32.mrf.mxu0
        %v4579 = vpop.f32.mrf.mxu0
        %v4580 = vadd.f32 %v4324, %v4579
        %v4581 = vpop.f32.mrf.mxu0
        %4582 = vmatprep.mubr.bf16.mxu0 0
        %4583 = vmatmul.mubr.bf16.gmra.mxu0 %v4293
        %v4584 = vpop.f32.mrf.mxu0
        %v4585 = vadd.f32 %v4324, %v4584
        %v4586 = vpop.f32.mrf.mxu0
        %v4587 = vpop.f32.mrf.mxu0
        %v4588 = vadd.f32 %v4324, %v4587
        %v4589 = vpop.f32.mrf.mxu0
        %4590 = vmatprep.mubr.bf16.mxu0 0
        %4591 = vmatmul.mubr.bf16.gmra.mxu0 %v4294
        %v4592 = vpop.f32.mrf.mxu0
        %v4593 = vadd.f32 %v4324, %v4592
        %v4594 = vpop.f32.mrf.mxu0
        %v4595 = vpop.f32.mrf.mxu0
        %v4596 = vadd.f32 %v4324, %v4595
        %v4597 = vpop.f32.mrf.mxu0
        %4598 = vmatprep.mubr.bf16.mxu0 0
        %4599 = vmatmul.mubr.bf16.gmra.mxu0 %v4295
        %v4600 = vpop.f32.mrf.mxu0
        %v4601 = vadd.f32 %v4324, %v4600
        %v4602 = vpop.f32.mrf.mxu0
        %v4603 = vpop.f32.mrf.mxu0
        %v4604 = vadd.f32 %v4324, %v4603
        %v4605 = vpop.f32.mrf.mxu0
        %4606 = vmatprep.mubr.bf16.mxu0 0
        %4607 = vmatmul.mubr.bf16.gmra.mxu0 %v4296
        %v4608 = vpop.f32.mrf.mxu0
        %v4609 = vadd.f32 %v4324, %v4608
        %v4610 = vpop.f32.mrf.mxu0
        %v4611 = vpop.f32.mrf.mxu0
        %v4612 = vadd.f32 %v4324, %v4611
        %v4613 = vpop.f32.mrf.mxu0
        %4614 = vmatprep.mubr.bf16.mxu0 0
        %4615 = vmatmul.mubr.bf16.gmra.mxu0 %v4297
        %v4616 = vpop.f32.mrf.mxu0
        %v4617 = vadd.f32 %v4324, %v4616
        %v4618 = vpop.f32.mrf.mxu0
        %v4619 = vpop.f32.mrf.mxu0
        %v4620 = vadd.f32 %v4324, %v4619
        %v4621 = vpop.f32.mrf.mxu0
        %4622 = vmatprep.mubr.bf16.mxu0 0
        %4623 = vmatmul.mubr.bf16.gmra.mxu0 %v4298
        %v4624 = vpop.f32.mrf.mxu0
        %v4625 = vadd.f32 %v4324, %v4624
        %v4626 = vpop.f32.mrf.mxu0
        %v4627 = vpop.f32.mrf.mxu0
        %v4628 = vadd.f32 %v4324, %v4627
        %v4629 = vpop.f32.mrf.mxu0
        %4630 = vmatprep.mubr.bf16.mxu0 0
        %4631 = vmatmul.mubr.bf16.gmra.mxu0 %v4299
        %v4632 = vpop.f32.mrf.mxu0
        %v4633 = vadd.f32 %v4324, %v4632
        %v4634 = vpop.f32.mrf.mxu0
        %v4635 = vpop.f32.mrf.mxu0
        %v4636 = vadd.f32 %v4324, %v4635
        %v4637 = vpop.f32.mrf.mxu0
        %4638 = vmatprep.mubr.bf16.mxu0 0
        %4639 = vmatmul.mubr.bf16.gmra.mxu0 %v4300
        %v4640 = vpop.f32.mrf.mxu0
        %v4641 = vadd.f32 %v4324, %v4640
        %v4642 = vpop.f32.mrf.mxu0
        %v4643 = vpop.f32.mrf.mxu0
        %v4644 = vadd.f32 %v4324, %v4643
        %v4645 = vpop.f32.mrf.mxu0
        %4646 = vmatprep.mubr.bf16.mxu0 0
        %4647 = vmatmul.mubr.bf16.gmra.mxu0 %v4301
        %v4648 = vpop.f32.mrf.mxu0
        %v4649 = vadd.f32 %v4324, %v4648
        %v4650 = vpop.f32.mrf.mxu0
        %v4651 = vpop.f32.mrf.mxu0
        %v4652 = vadd.f32 %v4324, %v4651
        %v4653 = vpop.f32.mrf.mxu0
        %4654 = vmatprep.mubr.bf16.mxu0 0
        %4655 = vmatmul.mubr.bf16.gmra.mxu0 %v4302
        %v4656 = vpop.f32.mrf.mxu0
        %v4657 = vadd.f32 %v4324, %v4656
        %v4658 = vpop.f32.mrf.mxu0
        %v4659 = vpop.f32.mrf.mxu0
        %v4660 = vadd.f32 %v4324, %v4659
        %v4661 = vpop.f32.mrf.mxu0
        %4662 = vdwg.mxu0
        %v4663 = vmax.f32 %v4409, 0.0
        %v4664 = vmax.f32 %v4412, 0.0
        %v4665 = vmax.f32 %v4417, 0.0
        %v4666 = vmax.f32 %v4420, 0.0
        %v4667 = vmax.f32 %v4425, 0.0
        %v4668 = vmax.f32 %v4428, 0.0
        %v4669 = vmax.f32 %v4433, 0.0
        %v4670 = vmax.f32 %v4436, 0.0
        %v4671 = vmax.f32 %v4441, 0.0
        %v4672 = vmax.f32 %v4444, 0.0
        %v4673 = vmax.f32 %v4449, 0.0
        %v4674 = vmax.f32 %v4452, 0.0
        %v4675 = vmax.f32 %v4457, 0.0
        %v4676 = vmax.f32 %v4460, 0.0
        %v4677 = vmax.f32 %v4465, 0.0
        %v4678 = vmax.f32 %v4468, 0.0
        %v4679 = vmax.f32 %v4473, 0.0
        %v4680 = vmax.f32 %v4476, 0.0
        %v4681 = vmax.f32 %v4481, 0.0
        %v4682 = vmax.f32 %v4484, 0.0
        %v4683 = vmax.f32 %v4489, 0.0
        %v4684 = vmax.f32 %v4492, 0.0
        %v4685 = vmax.f32 %v4497, 0.0
        %v4686 = vmax.f32 %v4500, 0.0
        %v4687 = vmax.f32 %v4505, 0.0
        %v4688 = vmax.f32 %v4508, 0.0
        %v4689 = vmax.f32 %v4513, 0.0
        %v4690 = vmax.f32 %v4516, 0.0
        %v4691 = vmax.f32 %v4521, 0.0
        %v4692 = vmax.f32 %v4524, 0.0
        %v4693 = vmax.f32 %v4529, 0.0
        %v4694 = vmax.f32 %v4532, 0.0
        %v4695 = vmax.f32 %v4537, 0.0
        %v4696 = vmax.f32 %v4540, 0.0
        %v4697 = vmax.f32 %v4545, 0.0
        %v4698 = vmax.f32 %v4548, 0.0
        %v4699 = vmax.f32 %v4553, 0.0
        %v4700 = vmax.f32 %v4556, 0.0
        %v4701 = vmax.f32 %v4561, 0.0
        %v4702 = vmax.f32 %v4564, 0.0
        %v4703 = vmax.f32 %v4569, 0.0
        %v4704 = vmax.f32 %v4572, 0.0
        %v4705 = vmax.f32 %v4577, 0.0
        %v4706 = vmax.f32 %v4580, 0.0
        %v4707 = vmax.f32 %v4585, 0.0
        %v4708 = vmax.f32 %v4588, 0.0
        %v4709 = vmax.f32 %v4593, 0.0
        %v4710 = vmax.f32 %v4596, 0.0
        %v4711 = vmax.f32 %v4601, 0.0
        %v4712 = vmax.f32 %v4604, 0.0
        %v4713 = vmax.f32 %v4609, 0.0
        %v4714 = vmax.f32 %v4612, 0.0
        %v4715 = vmax.f32 %v4617, 0.0
        %v4716 = vmax.f32 %v4620, 0.0
        %v4717 = vmax.f32 %v4625, 0.0
        %v4718 = vmax.f32 %v4628, 0.0
        %v4719 = vmax.f32 %v4633, 0.0
        %v4720 = vmax.f32 %v4636, 0.0
        %v4721 = vmax.f32 %v4641, 0.0
        %v4722 = vmax.f32 %v4644, 0.0
        %v4723 = vmax.f32 %v4649, 0.0
        %v4724 = vmax.f32 %v4652, 0.0
        %v4725 = vmax.f32 %v4657, 0.0
        %v4726 = vmax.f32 %v4660, 0.0
        %v4727 = vpack.c.bf16 %v4664, %v4663
        %v4728 = vpack.c.bf16 %v4666, %v4665
        %v4729 = vpack.c.bf16 %v4668, %v4667
        %v4730 = vpack.c.bf16 %v4670, %v4669
        %v4731 = vpack.c.bf16 %v4672, %v4671
        %v4732 = vpack.c.bf16 %v4674, %v4673
        %v4733 = vpack.c.bf16 %v4676, %v4675
        %v4734 = vpack.c.bf16 %v4678, %v4677
        %v4735 = vpack.c.bf16 %v4680, %v4679
        %v4736 = vpack.c.bf16 %v4682, %v4681
        %v4737 = vpack.c.bf16 %v4684, %v4683
        %v4738 = vpack.c.bf16 %v4686, %v4685
        %v4739 = vpack.c.bf16 %v4688, %v4687
        %v4740 = vpack.c.bf16 %v4690, %v4689
        %v4741 = vpack.c.bf16 %v4692, %v4691
        %v4742 = vpack.c.bf16 %v4694, %v4693
        %v4743 = vpack.c.bf16 %v4696, %v4695
        %v4744 = vpack.c.bf16 %v4698, %v4697
        %v4745 = vpack.c.bf16 %v4700, %v4699
        %v4746 = vpack.c.bf16 %v4702, %v4701
        %v4747 = vpack.c.bf16 %v4704, %v4703
        %v4748 = vpack.c.bf16 %v4706, %v4705
        %v4749 = vpack.c.bf16 %v4708, %v4707
        %v4750 = vpack.c.bf16 %v4710, %v4709
        %v4751 = vpack.c.bf16 %v4712, %v4711
        %v4752 = vpack.c.bf16 %v4714, %v4713
        %v4753 = vpack.c.bf16 %v4716, %v4715
        %v4754 = vpack.c.bf16 %v4718, %v4717
        %v4755 = vpack.c.bf16 %v4720, %v4719
        %v4756 = vpack.c.bf16 %v4722, %v4721
        %v4757 = vpack.c.bf16 %v4724, %v4723
        %v4758 = vpack.c.bf16 %v4726, %v4725
        %v4759 = vld [vmem:[%s14] sm:$0xf]
        %v4760 = vld [vmem:[%s14 + $0x4] sm:$0xf]
        %v4761 = vld [vmem:[%s14 + $0x8] sm:$0xf]
        %v4762 = vld [vmem:[%s14 + $0xc] sm:$0xf]
        %v4763 = vld [vmem:[%s14 + $0x10] sm:$0xf]
        %v4764 = vld [vmem:[%s14 + $0x14] sm:$0xf]
        %v4765 = vld [vmem:[%s14 + $0x18] sm:$0xf]
        %v4766 = vld [vmem:[%s14 + $0x1c] sm:$0xf]
        %v4767 = vld [vmem:[%s14 + $0x20] sm:$0xf]
        %v4768 = vld [vmem:[%s14 + $0x24] sm:$0xf]
        %v4769 = vld [vmem:[%s14 + $0x28] sm:$0xf]
        %v4770 = vld [vmem:[%s14 + $0x2c] sm:$0xf]
        %v4771 = vld [vmem:[%s14 + $0x30] sm:$0xf]
        %v4772 = vld [vmem:[%s14 + $0x34] sm:$0xf]
        %v4773 = vld [vmem:[%s14 + $0x38] sm:$0xf]
        %v4774 = vld [vmem:[%s14 + $0x3c] sm:$0xf]
        %v4775 = vld [vmem:[%s15] sm:$0x1]
        %v4777 = vlaneseq
        %v4778 = vshrl.u32 %v4777, 7
        %v4779 = vsub.s32 0, %v4778
        %v4780 = vrot.slane %v4775, %v4779
        %v4798 = vunpack.c.l.b16 %v4759
        %v4799 = vunpack.c.l.b16 %v4760
        %v4800 = vunpack.c.l.b16 %v4761
        %v4801 = vunpack.c.l.b16 %v4762
        %v4802 = vunpack.c.l.b16 %v4763
        %v4803 = vunpack.c.l.b16 %v4764
        %v4804 = vunpack.c.l.b16 %v4765
        %v4805 = vunpack.c.l.b16 %v4766
        %v4806 = vunpack.c.l.b16 %v4767
        %v4807 = vunpack.c.l.b16 %v4768
        %v4808 = vunpack.c.l.b16 %v4769
        %v4809 = vunpack.c.l.b16 %v4770
        %v4810 = vunpack.c.l.b16 %v4771
        %v4811 = vunpack.c.l.b16 %v4772
        %v4812 = vunpack.c.l.b16 %v4773
        %v4813 = vunpack.c.l.b16 %v4774
        %v4814 = vpack.c.b16 %v4799, %v4798
        %v4815 = vpack.c.b16 %v4801, %v4800
        %v4816 = vpack.c.b16 %v4803, %v4802
        %v4817 = vpack.c.b16 %v4805, %v4804
        %v4818 = vpack.c.b16 %v4807, %v4806
        %v4819 = vpack.c.b16 %v4809, %v4808
        %v4820 = vpack.c.b16 %v4811, %v4810
        %v4821 = vpack.c.b16 %v4813, %v4812
        %4830 = vmatprep.subr.bf16.mxu0 0
        %4831 = vmatpush1.bf16.msra.mxu0 %v4821
        %4832 = vmatprep.subr.bf16.mxu0 0
        %4833 = vmatpush1.bf16.msra.mxu0 %v4820
        %4834 = vmatprep.subr.bf16.mxu0 0
        %4835 = vmatpush1.bf16.msra.mxu0 %v4819
        %4836 = vmatprep.subr.bf16.mxu0 0
        %4837 = vmatpush1.bf16.msra.mxu0 %v4818
        %4838 = vmatprep.subr.bf16.mxu0 0
        %4839 = vmatpush1.bf16.msra.mxu0 %v4817
        %4840 = vmatprep.subr.bf16.mxu0 0
        %4841 = vmatpush1.bf16.msra.mxu0 %v4816
        %4842 = vmatprep.subr.bf16.mxu0 0
        %4843 = vmatpush1.bf16.msra.mxu0 %v4815
        %4844 = vmatprep.subr.bf16.mxu0 0
        %4845 = vmatpush1.bf16.msra.mxu0 %v4814
        %4846 = vmatprep.subr.bf16.mxu0 0
        %4847 = vmatpush2.bf16.msra.mxu0 0
        %4848 = vmatprep.subr.bf16.mxu0 0
        %4849 = vmatpush2.bf16.msra.mxu0 0
        %4850 = vmatprep.subr.bf16.mxu0 0
        %4851 = vmatpush2.bf16.msra.mxu0 0
        %4852 = vmatprep.subr.bf16.mxu0 0
        %4853 = vmatpush2.bf16.msra.mxu0 0
        %4854 = vmatprep.subr.bf16.mxu0 0
        %4855 = vmatpush2.bf16.msra.mxu0 0
        %4856 = vmatprep.subr.bf16.mxu0 0
        %4857 = vmatpush2.bf16.msra.mxu0 0
        %4858 = vmatprep.subr.bf16.mxu0 0
        %4859 = vmatpush2.bf16.msra.mxu0 0
        %4860 = vmatprep.subr.bf16.mxu0 0
        %4861 = vmatpush2.bf16.msra.mxu0 0
        %4862 = vmatprep.mubr.bf16.mxu0 0
        %4863 = vmatmul.mubr.bf16.gmra.mxu0 %v4727
        %v4864 = vpop.f32.mrf.mxu0
        %v4865 = vadd.f32 %v4780, %v4864
        %v4866 = vpop.f32.mrf.mxu0
        %v4867 = vpop.f32.mrf.mxu0
        %v4868 = vadd.f32 %v4780, %v4867
        %v4869 = vpop.f32.mrf.mxu0
        %4870 = vmatprep.mubr.bf16.mxu0 0
        %4871 = vmatmul.mubr.bf16.gmra.mxu0 %v4728
        %v4872 = vpop.f32.mrf.mxu0
        %v4873 = vadd.f32 %v4780, %v4872
        %v4874 = vpop.f32.mrf.mxu0
        %v4875 = vpop.f32.mrf.mxu0
        %v4876 = vadd.f32 %v4780, %v4875
        %v4877 = vpop.f32.mrf.mxu0
        %4878 = vmatprep.mubr.bf16.mxu0 0
        %4879 = vmatmul.mubr.bf16.gmra.mxu0 %v4729
        %v4880 = vpop.f32.mrf.mxu0
        %v4881 = vadd.f32 %v4780, %v4880
        %v4882 = vpop.f32.mrf.mxu0
        %v4883 = vpop.f32.mrf.mxu0
        %v4884 = vadd.f32 %v4780, %v4883
        %v4885 = vpop.f32.mrf.mxu0
        %4886 = vmatprep.mubr.bf16.mxu0 0
        %4887 = vmatmul.mubr.bf16.gmra.mxu0 %v4730
        %v4888 = vpop.f32.mrf.mxu0
        %v4889 = vadd.f32 %v4780, %v4888
        %v4890 = vpop.f32.mrf.mxu0
        %v4891 = vpop.f32.mrf.mxu0
        %v4892 = vadd.f32 %v4780, %v4891
        %v4893 = vpop.f32.mrf.mxu0
        %4894 = vmatprep.mubr.bf16.mxu0 0
        %4895 = vmatmul.mubr.bf16.gmra.mxu0 %v4731
        %v4896 = vpop.f32.mrf.mxu0
        %v4897 = vadd.f32 %v4780, %v4896
        %v4898 = vpop.f32.mrf.mxu0
        %v4899 = vpop.f32.mrf.mxu0
        %v4900 = vadd.f32 %v4780, %v4899
        %v4901 = vpop.f32.mrf.mxu0
        %4902 = vmatprep.mubr.bf16.mxu0 0
        %4903 = vmatmul.mubr.bf16.gmra.mxu0 %v4732
        %v4904 = vpop.f32.mrf.mxu0
        %v4905 = vadd.f32 %v4780, %v4904
        %v4906 = vpop.f32.mrf.mxu0
        %v4907 = vpop.f32.mrf.mxu0
        %v4908 = vadd.f32 %v4780, %v4907
        %v4909 = vpop.f32.mrf.mxu0
        %4910 = vmatprep.mubr.bf16.mxu0 0
        %4911 = vmatmul.mubr.bf16.gmra.mxu0 %v4733
        %v4912 = vpop.f32.mrf.mxu0
        %v4913 = vadd.f32 %v4780, %v4912
        %v4914 = vpop.f32.mrf.mxu0
        %v4915 = vpop.f32.mrf.mxu0
        %v4916 = vadd.f32 %v4780, %v4915
        %v4917 = vpop.f32.mrf.mxu0
        %4918 = vmatprep.mubr.bf16.mxu0 0
        %4919 = vmatmul.mubr.bf16.gmra.mxu0 %v4734
        %v4920 = vpop.f32.mrf.mxu0
        %v4921 = vadd.f32 %v4780, %v4920
        %v4922 = vpop.f32.mrf.mxu0
        %v4923 = vpop.f32.mrf.mxu0
        %v4924 = vadd.f32 %v4780, %v4923
        %v4925 = vpop.f32.mrf.mxu0
        %4926 = vmatprep.mubr.bf16.mxu0 0
        %4927 = vmatmul.mubr.bf16.gmra.mxu0 %v4735
        %v4928 = vpop.f32.mrf.mxu0
        %v4929 = vadd.f32 %v4780, %v4928
        %v4930 = vpop.f32.mrf.mxu0
        %v4931 = vpop.f32.mrf.mxu0
        %v4932 = vadd.f32 %v4780, %v4931
        %v4933 = vpop.f32.mrf.mxu0
        %4934 = vmatprep.mubr.bf16.mxu0 0
        %4935 = vmatmul.mubr.bf16.gmra.mxu0 %v4736
        %v4936 = vpop.f32.mrf.mxu0
        %v4937 = vadd.f32 %v4780, %v4936
        %v4938 = vpop.f32.mrf.mxu0
        %v4939 = vpop.f32.mrf.mxu0
        %v4940 = vadd.f32 %v4780, %v4939
        %v4941 = vpop.f32.mrf.mxu0
        %4942 = vmatprep.mubr.bf16.mxu0 0
        %4943 = vmatmul.mubr.bf16.gmra.mxu0 %v4737
        %v4944 = vpop.f32.mrf.mxu0
        %v4945 = vadd.f32 %v4780, %v4944
        %v4946 = vpop.f32.mrf.mxu0
        %v4947 = vpop.f32.mrf.mxu0
        %v4948 = vadd.f32 %v4780, %v4947
        %v4949 = vpop.f32.mrf.mxu0
        %4950 = vmatprep.mubr.bf16.mxu0 0
        %4951 = vmatmul.mubr.bf16.gmra.mxu0 %v4738
        %v4952 = vpop.f32.mrf.mxu0
        %v4953 = vadd.f32 %v4780, %v4952
        %v4954 = vpop.f32.mrf.mxu0
        %v4955 = vpop.f32.mrf.mxu0
        %v4956 = vadd.f32 %v4780, %v4955
        %v4957 = vpop.f32.mrf.mxu0
        %4958 = vmatprep.mubr.bf16.mxu0 0
        %4959 = vmatmul.mubr.bf16.gmra.mxu0 %v4739
        %v4960 = vpop.f32.mrf.mxu0
        %v4961 = vadd.f32 %v4780, %v4960
        %v4962 = vpop.f32.mrf.mxu0
        %v4963 = vpop.f32.mrf.mxu0
        %v4964 = vadd.f32 %v4780, %v4963
        %v4965 = vpop.f32.mrf.mxu0
        %4966 = vmatprep.mubr.bf16.mxu0 0
        %4967 = vmatmul.mubr.bf16.gmra.mxu0 %v4740
        %v4968 = vpop.f32.mrf.mxu0
        %v4969 = vadd.f32 %v4780, %v4968
        %v4970 = vpop.f32.mrf.mxu0
        %v4971 = vpop.f32.mrf.mxu0
        %v4972 = vadd.f32 %v4780, %v4971
        %v4973 = vpop.f32.mrf.mxu0
        %4974 = vmatprep.mubr.bf16.mxu0 0
        %4975 = vmatmul.mubr.bf16.gmra.mxu0 %v4741
        %v4976 = vpop.f32.mrf.mxu0
        %v4977 = vadd.f32 %v4780, %v4976
        %v4978 = vpop.f32.mrf.mxu0
        %v4979 = vpop.f32.mrf.mxu0
        %v4980 = vadd.f32 %v4780, %v4979
        %v4981 = vpop.f32.mrf.mxu0
        %4982 = vmatprep.mubr.bf16.mxu0 0
        %4983 = vmatmul.mubr.bf16.gmra.mxu0 %v4742
        %v4984 = vpop.f32.mrf.mxu0
        %v4985 = vadd.f32 %v4780, %v4984
        %v4986 = vpop.f32.mrf.mxu0
        %v4987 = vpop.f32.mrf.mxu0
        %v4988 = vadd.f32 %v4780, %v4987
        %v4989 = vpop.f32.mrf.mxu0
        %4990 = vmatprep.mubr.bf16.mxu0 0
        %4991 = vmatmul.mubr.bf16.gmra.mxu0 %v4743
        %v4992 = vpop.f32.mrf.mxu0
        %v4993 = vadd.f32 %v4780, %v4992
        %v4994 = vpop.f32.mrf.mxu0
        %v4995 = vpop.f32.mrf.mxu0
        %v4996 = vadd.f32 %v4780, %v4995
        %v4997 = vpop.f32.mrf.mxu0
        %4998 = vmatprep.mubr.bf16.mxu0 0
        %4999 = vmatmul.mubr.bf16.gmra.mxu0 %v4744
        %v5000 = vpop.f32.mrf.mxu0
        %v5001 = vadd.f32 %v4780, %v5000
        %v5002 = vpop.f32.mrf.mxu0
        %v5003 = vpop.f32.mrf.mxu0
        %v5004 = vadd.f32 %v4780, %v5003
        %v5005 = vpop.f32.mrf.mxu0
        %5006 = vmatprep.mubr.bf16.mxu0 0
        %5007 = vmatmul.mubr.bf16.gmra.mxu0 %v4745
        %v5008 = vpop.f32.mrf.mxu0
        %v5009 = vadd.f32 %v4780, %v5008
        %v5010 = vpop.f32.mrf.mxu0
        %v5011 = vpop.f32.mrf.mxu0
        %v5012 = vadd.f32 %v4780, %v5011
        %v5013 = vpop.f32.mrf.mxu0
        %5014 = vmatprep.mubr.bf16.mxu0 0
        %5015 = vmatmul.mubr.bf16.gmra.mxu0 %v4746
        %v5016 = vpop.f32.mrf.mxu0
        %v5017 = vadd.f32 %v4780, %v5016
        %v5018 = vpop.f32.mrf.mxu0
        %v5019 = vpop.f32.mrf.mxu0
        %v5020 = vadd.f32 %v4780, %v5019
        %v5021 = vpop.f32.mrf.mxu0
        %5022 = vmatprep.mubr.bf16.mxu0 0
        %5023 = vmatmul.mubr.bf16.gmra.mxu0 %v4747
        %v5024 = vpop.f32.mrf.mxu0
        %v5025 = vadd.f32 %v4780, %v5024
        %v5026 = vpop.f32.mrf.mxu0
        %v5027 = vpop.f32.mrf.mxu0
        %v5028 = vadd.f32 %v4780, %v5027
        %v5029 = vpop.f32.mrf.mxu0
        %5030 = vmatprep.mubr.bf16.mxu0 0
        %5031 = vmatmul.mubr.bf16.gmra.mxu0 %v4748
        %v5032 = vpop.f32.mrf.mxu0
        %v5033 = vadd.f32 %v4780, %v5032
        %v5034 = vpop.f32.mrf.mxu0
        %v5035 = vpop.f32.mrf.mxu0
        %v5036 = vadd.f32 %v4780, %v5035
        %v5037 = vpop.f32.mrf.mxu0
        %5038 = vmatprep.mubr.bf16.mxu0 0
        %5039 = vmatmul.mubr.bf16.gmra.mxu0 %v4749
        %v5040 = vpop.f32.mrf.mxu0
        %v5041 = vadd.f32 %v4780, %v5040
        %v5042 = vpop.f32.mrf.mxu0
        %v5043 = vpop.f32.mrf.mxu0
        %v5044 = vadd.f32 %v4780, %v5043
        %v5045 = vpop.f32.mrf.mxu0
        %5046 = vmatprep.mubr.bf16.mxu0 0
        %5047 = vmatmul.mubr.bf16.gmra.mxu0 %v4750
        %v5048 = vpop.f32.mrf.mxu0
        %v5049 = vadd.f32 %v4780, %v5048
        %v5050 = vpop.f32.mrf.mxu0
        %v5051 = vpop.f32.mrf.mxu0
        %v5052 = vadd.f32 %v4780, %v5051
        %v5053 = vpop.f32.mrf.mxu0
        %5054 = vmatprep.mubr.bf16.mxu0 0
        %5055 = vmatmul.mubr.bf16.gmra.mxu0 %v4751
        %v5056 = vpop.f32.mrf.mxu0
        %v5057 = vadd.f32 %v4780, %v5056
        %v5058 = vpop.f32.mrf.mxu0
        %v5059 = vpop.f32.mrf.mxu0
        %v5060 = vadd.f32 %v4780, %v5059
        %v5061 = vpop.f32.mrf.mxu0
        %5062 = vmatprep.mubr.bf16.mxu0 0
        %5063 = vmatmul.mubr.bf16.gmra.mxu0 %v4752
        %v5064 = vpop.f32.mrf.mxu0
        %v5065 = vadd.f32 %v4780, %v5064
        %v5066 = vpop.f32.mrf.mxu0
        %v5067 = vpop.f32.mrf.mxu0
        %v5068 = vadd.f32 %v4780, %v5067
        %v5069 = vpop.f32.mrf.mxu0
        %5070 = vmatprep.mubr.bf16.mxu0 0
        %5071 = vmatmul.mubr.bf16.gmra.mxu0 %v4753
        %v5072 = vpop.f32.mrf.mxu0
        %v5073 = vadd.f32 %v4780, %v5072
        %v5074 = vpop.f32.mrf.mxu0
        %v5075 = vpop.f32.mrf.mxu0
        %v5076 = vadd.f32 %v4780, %v5075
        %v5077 = vpop.f32.mrf.mxu0
        %5078 = vmatprep.mubr.bf16.mxu0 0
        %5079 = vmatmul.mubr.bf16.gmra.mxu0 %v4754
        %v5080 = vpop.f32.mrf.mxu0
        %v5081 = vadd.f32 %v4780, %v5080
        %v5082 = vpop.f32.mrf.mxu0
        %v5083 = vpop.f32.mrf.mxu0
        %v5084 = vadd.f32 %v4780, %v5083
        %v5085 = vpop.f32.mrf.mxu0
        %5086 = vmatprep.mubr.bf16.mxu0 0
        %5087 = vmatmul.mubr.bf16.gmra.mxu0 %v4755
        %v5088 = vpop.f32.mrf.mxu0
        %v5089 = vadd.f32 %v4780, %v5088
        %v5090 = vpop.f32.mrf.mxu0
        %v5091 = vpop.f32.mrf.mxu0
        %v5092 = vadd.f32 %v4780, %v5091
        %v5093 = vpop.f32.mrf.mxu0
        %5094 = vmatprep.mubr.bf16.mxu0 0
        %5095 = vmatmul.mubr.bf16.gmra.mxu0 %v4756
        %v5096 = vpop.f32.mrf.mxu0
        %v5097 = vadd.f32 %v4780, %v5096
        %v5098 = vpop.f32.mrf.mxu0
        %v5099 = vpop.f32.mrf.mxu0
        %v5100 = vadd.f32 %v4780, %v5099
        %v5101 = vpop.f32.mrf.mxu0
        %5102 = vmatprep.mubr.bf16.mxu0 0
        %5103 = vmatmul.mubr.bf16.gmra.mxu0 %v4757
        %v5104 = vpop.f32.mrf.mxu0
        %v5105 = vadd.f32 %v4780, %v5104
        %v5106 = vpop.f32.mrf.mxu0
        %v5107 = vpop.f32.mrf.mxu0
        %v5108 = vadd.f32 %v4780, %v5107
        %v5109 = vpop.f32.mrf.mxu0
        %5110 = vmatprep.mubr.bf16.mxu0 0
        %5111 = vmatmul.mubr.bf16.gmra.mxu0 %v4758
        %v5112 = vpop.f32.mrf.mxu0
        %v5113 = vadd.f32 %v4780, %v5112
        %v5114 = vpop.f32.mrf.mxu0
        %v5115 = vpop.f32.mrf.mxu0
        %v5116 = vadd.f32 %v4780, %v5115
        %v5117 = vpop.f32.mrf.mxu0
        %5118 = vdwg.mxu0
        %v5119 = vxor.u32 %v4865, 2147483648
        %v5120 = vxor.u32 %v4868, 2147483648
        %v5121 = vxor.u32 %v4873, 2147483648
        %v5122 = vxor.u32 %v4876, 2147483648
        %v5123 = vxor.u32 %v4881, 2147483648
        %v5124 = vxor.u32 %v4884, 2147483648
        %v5125 = vxor.u32 %v4889, 2147483648
        %v5126 = vxor.u32 %v4892, 2147483648
        %v5127 = vxor.u32 %v4897, 2147483648
        %v5128 = vxor.u32 %v4900, 2147483648
        %v5129 = vxor.u32 %v4905, 2147483648
        %v5130 = vxor.u32 %v4908, 2147483648
        %v5131 = vxor.u32 %v4913, 2147483648
        %v5132 = vxor.u32 %v4916, 2147483648
        %v5133 = vxor.u32 %v4921, 2147483648
        %v5134 = vxor.u32 %v4924, 2147483648
        %v5135 = vxor.u32 %v4929, 2147483648
        %v5136 = vxor.u32 %v4932, 2147483648
        %v5137 = vxor.u32 %v4937, 2147483648
        %v5138 = vxor.u32 %v4940, 2147483648
        %v5139 = vxor.u32 %v4945, 2147483648
        %v5140 = vxor.u32 %v4948, 2147483648
        %v5141 = vxor.u32 %v4953, 2147483648
        %v5142 = vxor.u32 %v4956, 2147483648
        %v5143 = vxor.u32 %v4961, 2147483648
        %v5144 = vxor.u32 %v4964, 2147483648
        %v5145 = vxor.u32 %v4969, 2147483648
        %v5146 = vxor.u32 %v4972, 2147483648
        %v5147 = vxor.u32 %v4977, 2147483648
        %v5148 = vxor.u32 %v4980, 2147483648
        %v5149 = vxor.u32 %v4985, 2147483648
        %v5150 = vxor.u32 %v4988, 2147483648
        %v5151 = vxor.u32 %v4993, 2147483648
        %v5152 = vxor.u32 %v4996, 2147483648
        %v5153 = vxor.u32 %v5001, 2147483648
        %v5154 = vxor.u32 %v5004, 2147483648
        %v5155 = vxor.u32 %v5009, 2147483648
        %v5156 = vxor.u32 %v5012, 2147483648
        %v5157 = vxor.u32 %v5017, 2147483648
        %v5158 = vxor.u32 %v5020, 2147483648
        %v5159 = vxor.u32 %v5025, 2147483648
        %v5160 = vxor.u32 %v5028, 2147483648
        %v5161 = vxor.u32 %v5033, 2147483648
        %v5162 = vxor.u32 %v5036, 2147483648
        %v5163 = vxor.u32 %v5041, 2147483648
        %v5164 = vxor.u32 %v5044, 2147483648
        %v5165 = vxor.u32 %v5049, 2147483648
        %v5166 = vxor.u32 %v5052, 2147483648
        %v5167 = vxor.u32 %v5057, 2147483648
        %v5168 = vxor.u32 %v5060, 2147483648
        %v5169 = vxor.u32 %v5065, 2147483648
        %v5170 = vxor.u32 %v5068, 2147483648
        %v5171 = vxor.u32 %v5073, 2147483648
        %v5172 = vxor.u32 %v5076, 2147483648
        %v5173 = vxor.u32 %v5081, 2147483648
        %v5174 = vxor.u32 %v5084, 2147483648
        %v5175 = vxor.u32 %v5089, 2147483648
        %v5176 = vxor.u32 %v5092, 2147483648
        %v5177 = vxor.u32 %v5097, 2147483648
        %v5178 = vxor.u32 %v5100, 2147483648
        %v5179 = vxor.u32 %v5105, 2147483648
        %v5180 = vxor.u32 %v5108, 2147483648
        %v5181 = vxor.u32 %v5113, 2147483648
        %v5182 = vxor.u32 %v5116, 2147483648
        %v5183 = vmul.f32 %v5119, 1.442695
        %v5184 = vpow.pop %v5183
        %v5185 = vmul.f32 %v5120, 1.442695
        %v5186 = vpow.pop %v5185
        %v5187 = vmul.f32 %v5121, 1.442695
        %v5188 = vpow.pop %v5187
        %v5189 = vmul.f32 %v5122, 1.442695
        %v5190 = vpow.pop %v5189
        %v5191 = vmul.f32 %v5123, 1.442695
        %v5192 = vpow.pop %v5191
        %v5193 = vmul.f32 %v5124, 1.442695
        %v5194 = vpow.pop %v5193
        %v5195 = vmul.f32 %v5125, 1.442695
        %v5196 = vpow.pop %v5195
        %v5197 = vmul.f32 %v5126, 1.442695
        %v5198 = vpow.pop %v5197
        %v5199 = vmul.f32 %v5127, 1.442695
        %v5200 = vpow.pop %v5199
        %v5201 = vmul.f32 %v5128, 1.442695
        %v5202 = vpow.pop %v5201
        %v5203 = vmul.f32 %v5129, 1.442695
        %v5204 = vpow.pop %v5203
        %v5205 = vmul.f32 %v5130, 1.442695
        %v5206 = vpow.pop %v5205
        %v5207 = vmul.f32 %v5131, 1.442695
        %v5208 = vpow.pop %v5207
        %v5209 = vmul.f32 %v5132, 1.442695
        %v5210 = vpow.pop %v5209
        %v5211 = vmul.f32 %v5133, 1.442695
        %v5212 = vpow.pop %v5211
        %v5213 = vmul.f32 %v5134, 1.442695
        %v5214 = vpow.pop %v5213
        %v5215 = vmul.f32 %v5135, 1.442695
        %v5216 = vpow.pop %v5215
        %v5217 = vmul.f32 %v5136, 1.442695
        %v5218 = vpow.pop %v5217
        %v5219 = vmul.f32 %v5137, 1.442695
        %v5220 = vpow.pop %v5219
        %v5221 = vmul.f32 %v5138, 1.442695
        %v5222 = vpow.pop %v5221
        %v5223 = vmul.f32 %v5139, 1.442695
        %v5224 = vpow.pop %v5223
        %v5225 = vmul.f32 %v5140, 1.442695
        %v5226 = vpow.pop %v5225
        %v5227 = vmul.f32 %v5141, 1.442695
        %v5228 = vpow.pop %v5227
        %v5229 = vmul.f32 %v5142, 1.442695
        %v5230 = vpow.pop %v5229
        %v5231 = vmul.f32 %v5143, 1.442695
        %v5232 = vpow.pop %v5231
        %v5233 = vmul.f32 %v5144, 1.442695
        %v5234 = vpow.pop %v5233
        %v5235 = vmul.f32 %v5145, 1.442695
        %v5236 = vpow.pop %v5235
        %v5237 = vmul.f32 %v5146, 1.442695
        %v5238 = vpow.pop %v5237
        %v5239 = vmul.f32 %v5147, 1.442695
        %v5240 = vpow.pop %v5239
        %v5241 = vmul.f32 %v5148, 1.442695
        %v5242 = vpow.pop %v5241
        %v5243 = vmul.f32 %v5149, 1.442695
        %v5244 = vpow.pop %v5243
        %v5245 = vmul.f32 %v5150, 1.442695
        %v5246 = vpow.pop %v5245
        %v5247 = vmul.f32 %v5151, 1.442695
        %v5248 = vpow.pop %v5247
        %v5249 = vmul.f32 %v5152, 1.442695
        %v5250 = vpow.pop %v5249
        %v5251 = vmul.f32 %v5153, 1.442695
        %v5252 = vpow.pop %v5251
        %v5253 = vmul.f32 %v5154, 1.442695
        %v5254 = vpow.pop %v5253
        %v5255 = vmul.f32 %v5155, 1.442695
        %v5256 = vpow.pop %v5255
        %v5257 = vmul.f32 %v5156, 1.442695
        %v5258 = vpow.pop %v5257
        %v5259 = vmul.f32 %v5157, 1.442695
        %v5260 = vpow.pop %v5259
        %v5261 = vmul.f32 %v5158, 1.442695
        %v5262 = vpow.pop %v5261
        %v5263 = vmul.f32 %v5159, 1.442695
        %v5264 = vpow.pop %v5263
        %v5265 = vmul.f32 %v5160, 1.442695
        %v5266 = vpow.pop %v5265
        %v5267 = vmul.f32 %v5161, 1.442695
        %v5268 = vpow.pop %v5267
        %v5269 = vmul.f32 %v5162, 1.442695
        %v5270 = vpow.pop %v5269
        %v5271 = vmul.f32 %v5163, 1.442695
        %v5272 = vpow.pop %v5271
        %v5273 = vmul.f32 %v5164, 1.442695
        %v5274 = vpow.pop %v5273
        %v5275 = vmul.f32 %v5165, 1.442695
        %v5276 = vpow.pop %v5275
        %v5277 = vmul.f32 %v5166, 1.442695
        %v5278 = vpow.pop %v5277
        %v5279 = vmul.f32 %v5167, 1.442695
        %v5280 = vpow.pop %v5279
        %v5281 = vmul.f32 %v5168, 1.442695
        %v5282 = vpow.pop %v5281
        %v5283 = vmul.f32 %v5169, 1.442695
        %v5284 = vpow.pop %v5283
        %v5285 = vmul.f32 %v5170, 1.442695
        %v5286 = vpow.pop %v5285
        %v5287 = vmul.f32 %v5171, 1.442695
        %v5288 = vpow.pop %v5287
        %v5289 = vmul.f32 %v5172, 1.442695
        %v5290 = vpow.pop %v5289
        %v5291 = vmul.f32 %v5173, 1.442695
        %v5292 = vpow.pop %v5291
        %v5293 = vmul.f32 %v5174, 1.442695
        %v5294 = vpow.pop %v5293
        %v5295 = vmul.f32 %v5175, 1.442695
        %v5296 = vpow.pop %v5295
        %v5297 = vmul.f32 %v5176, 1.442695
        %v5298 = vpow.pop %v5297
        %v5299 = vmul.f32 %v5177, 1.442695
        %v5300 = vpow.pop %v5299
        %v5301 = vmul.f32 %v5178, 1.442695
        %v5302 = vpow.pop %v5301
        %v5303 = vmul.f32 %v5179, 1.442695
        %v5304 = vpow.pop %v5303
        %v5305 = vmul.f32 %v5180, 1.442695
        %v5306 = vpow.pop %v5305
        %v5307 = vmul.f32 %v5181, 1.442695
        %v5308 = vpow.pop %v5307
        %v5309 = vmul.f32 %v5182, 1.442695
        %v5310 = vpow.pop %v5309
        %v5311 = vadd.f32 %v5184, 1.0
        %v5312 = vadd.f32 %v5186, 1.0
        %v5313 = vadd.f32 %v5188, 1.0
        %v5314 = vadd.f32 %v5190, 1.0
        %v5315 = vadd.f32 %v5192, 1.0
        %v5316 = vadd.f32 %v5194, 1.0
        %v5317 = vadd.f32 %v5196, 1.0
        %v5318 = vadd.f32 %v5198, 1.0
        %v5319 = vadd.f32 %v5200, 1.0
        %v5320 = vadd.f32 %v5202, 1.0
        %v5321 = vadd.f32 %v5204, 1.0
        %v5322 = vadd.f32 %v5206, 1.0
        %v5323 = vadd.f32 %v5208, 1.0
        %v5324 = vadd.f32 %v5210, 1.0
        %v5325 = vadd.f32 %v5212, 1.0
        %v5326 = vadd.f32 %v5214, 1.0
        %v5327 = vadd.f32 %v5216, 1.0
        %v5328 = vadd.f32 %v5218, 1.0
        %v5329 = vadd.f32 %v5220, 1.0
        %v5330 = vadd.f32 %v5222, 1.0
        %v5331 = vadd.f32 %v5224, 1.0
        %v5332 = vadd.f32 %v5226, 1.0
        %v5333 = vadd.f32 %v5228, 1.0
        %v5334 = vadd.f32 %v5230, 1.0
        %v5335 = vadd.f32 %v5232, 1.0
        %v5336 = vadd.f32 %v5234, 1.0
        %v5337 = vadd.f32 %v5236, 1.0
        %v5338 = vadd.f32 %v5238, 1.0
        %v5339 = vadd.f32 %v5240, 1.0
        %v5340 = vadd.f32 %v5242, 1.0
        %v5341 = vadd.f32 %v5244, 1.0
        %v5342 = vadd.f32 %v5246, 1.0
        %v5343 = vadd.f32 %v5248, 1.0
        %v5344 = vadd.f32 %v5250, 1.0
        %v5345 = vadd.f32 %v5252, 1.0
        %v5346 = vadd.f32 %v5254, 1.0
        %v5347 = vadd.f32 %v5256, 1.0
        %v5348 = vadd.f32 %v5258, 1.0
        %v5349 = vadd.f32 %v5260, 1.0
        %v5350 = vadd.f32 %v5262, 1.0
        %v5351 = vadd.f32 %v5264, 1.0
        %v5352 = vadd.f32 %v5266, 1.0
        %v5353 = vadd.f32 %v5268, 1.0
        %v5354 = vadd.f32 %v5270, 1.0
        %v5355 = vadd.f32 %v5272, 1.0
        %v5356 = vadd.f32 %v5274, 1.0
        %v5357 = vadd.f32 %v5276, 1.0
        %v5358 = vadd.f32 %v5278, 1.0
        %v5359 = vadd.f32 %v5280, 1.0
        %v5360 = vadd.f32 %v5282, 1.0
        %v5361 = vadd.f32 %v5284, 1.0
        %v5362 = vadd.f32 %v5286, 1.0
        %v5363 = vadd.f32 %v5288, 1.0
        %v5364 = vadd.f32 %v5290, 1.0
        %v5365 = vadd.f32 %v5292, 1.0
        %v5366 = vadd.f32 %v5294, 1.0
        %v5367 = vadd.f32 %v5296, 1.0
        %v5368 = vadd.f32 %v5298, 1.0
        %v5369 = vadd.f32 %v5300, 1.0
        %v5370 = vadd.f32 %v5302, 1.0
        %v5371 = vadd.f32 %v5304, 1.0
        %v5372 = vadd.f32 %v5306, 1.0
        %v5373 = vadd.f32 %v5308, 1.0
        %v5374 = vadd.f32 %v5310, 1.0
        %v5375 = vrcp.pop %v5311
        %v5376 = vmul.f32 1.0, %v5375
        %v5377 = vrcp.pop %v5312
        %v5378 = vmul.f32 1.0, %v5377
        %v5379 = vrcp.pop %v5313
        %v5380 = vmul.f32 1.0, %v5379
        %v5381 = vrcp.pop %v5314
        %v5382 = vmul.f32 1.0, %v5381
        %v5383 = vrcp.pop %v5315
        %v5384 = vmul.f32 1.0, %v5383
        %v5385 = vrcp.pop %v5316
        %v5386 = vmul.f32 1.0, %v5385
        %v5387 = vrcp.pop %v5317
        %v5388 = vmul.f32 1.0, %v5387
        %v5389 = vrcp.pop %v5318
        %v5390 = vmul.f32 1.0, %v5389
        %v5391 = vrcp.pop %v5319
        %v5392 = vmul.f32 1.0, %v5391
        %v5393 = vrcp.pop %v5320
        %v5394 = vmul.f32 1.0, %v5393
        %v5395 = vrcp.pop %v5321
        %v5396 = vmul.f32 1.0, %v5395
        %v5397 = vrcp.pop %v5322
        %v5398 = vmul.f32 1.0, %v5397
        %v5399 = vrcp.pop %v5323
        %v5400 = vmul.f32 1.0, %v5399
        %v5401 = vrcp.pop %v5324
        %v5402 = vmul.f32 1.0, %v5401
        %v5403 = vrcp.pop %v5325
        %v5404 = vmul.f32 1.0, %v5403
        %v5405 = vrcp.pop %v5326
        %v5406 = vmul.f32 1.0, %v5405
        %v5407 = vrcp.pop %v5327
        %v5408 = vmul.f32 1.0, %v5407
        %v5409 = vrcp.pop %v5328
        %v5410 = vmul.f32 1.0, %v5409
        %v5411 = vrcp.pop %v5329
        %v5412 = vmul.f32 1.0, %v5411
        %v5413 = vrcp.pop %v5330
        %v5414 = vmul.f32 1.0, %v5413
        %v5415 = vrcp.pop %v5331
        %v5416 = vmul.f32 1.0, %v5415
        %v5417 = vrcp.pop %v5332
        %v5418 = vmul.f32 1.0, %v5417
        %v5419 = vrcp.pop %v5333
        %v5420 = vmul.f32 1.0, %v5419
        %v5421 = vrcp.pop %v5334
        %v5422 = vmul.f32 1.0, %v5421
        %v5423 = vrcp.pop %v5335
        %v5424 = vmul.f32 1.0, %v5423
        %v5425 = vrcp.pop %v5336
        %v5426 = vmul.f32 1.0, %v5425
        %v5427 = vrcp.pop %v5337
        %v5428 = vmul.f32 1.0, %v5427
        %v5429 = vrcp.pop %v5338
        %v5430 = vmul.f32 1.0, %v5429
        %v5431 = vrcp.pop %v5339
        %v5432 = vmul.f32 1.0, %v5431
        %v5433 = vrcp.pop %v5340
        %v5434 = vmul.f32 1.0, %v5433
        %v5435 = vrcp.pop %v5341
        %v5436 = vmul.f32 1.0, %v5435
        %v5437 = vrcp.pop %v5342
        %v5438 = vmul.f32 1.0, %v5437
        %v5439 = vrcp.pop %v5343
        %v5440 = vmul.f32 1.0, %v5439
        %v5441 = vrcp.pop %v5344
        %v5442 = vmul.f32 1.0, %v5441
        %v5443 = vrcp.pop %v5345
        %v5444 = vmul.f32 1.0, %v5443
        %v5445 = vrcp.pop %v5346
        %v5446 = vmul.f32 1.0, %v5445
        %v5447 = vrcp.pop %v5347
        %v5448 = vmul.f32 1.0, %v5447
        %v5449 = vrcp.pop %v5348
        %v5450 = vmul.f32 1.0, %v5449
        %v5451 = vrcp.pop %v5349
        %v5452 = vmul.f32 1.0, %v5451
        %v5453 = vrcp.pop %v5350
        %v5454 = vmul.f32 1.0, %v5453
        %v5455 = vrcp.pop %v5351
        %v5456 = vmul.f32 1.0, %v5455
        %v5457 = vrcp.pop %v5352
        %v5458 = vmul.f32 1.0, %v5457
        %v5459 = vrcp.pop %v5353
        %v5460 = vmul.f32 1.0, %v5459
        %v5461 = vrcp.pop %v5354
        %v5462 = vmul.f32 1.0, %v5461
        %v5463 = vrcp.pop %v5355
        %v5464 = vmul.f32 1.0, %v5463
        %v5465 = vrcp.pop %v5356
        %v5466 = vmul.f32 1.0, %v5465
        %v5467 = vrcp.pop %v5357
        %v5468 = vmul.f32 1.0, %v5467
        %v5469 = vrcp.pop %v5358
        %v5470 = vmul.f32 1.0, %v5469
        %v5471 = vrcp.pop %v5359
        %v5472 = vmul.f32 1.0, %v5471
        %v5473 = vrcp.pop %v5360
        %v5474 = vmul.f32 1.0, %v5473
        %v5475 = vrcp.pop %v5361
        %v5476 = vmul.f32 1.0, %v5475
        %v5477 = vrcp.pop %v5362
        %v5478 = vmul.f32 1.0, %v5477
        %v5479 = vrcp.pop %v5363
        %v5480 = vmul.f32 1.0, %v5479
        %v5481 = vrcp.pop %v5364
        %v5482 = vmul.f32 1.0, %v5481
        %v5483 = vrcp.pop %v5365
        %v5484 = vmul.f32 1.0, %v5483
        %v5485 = vrcp.pop %v5366
        %v5486 = vmul.f32 1.0, %v5485
        %v5487 = vrcp.pop %v5367
        %v5488 = vmul.f32 1.0, %v5487
        %v5489 = vrcp.pop %v5368
        %v5490 = vmul.f32 1.0, %v5489
        %v5491 = vrcp.pop %v5369
        %v5492 = vmul.f32 1.0, %v5491
        %v5493 = vrcp.pop %v5370
        %v5494 = vmul.f32 1.0, %v5493
        %v5495 = vrcp.pop %v5371
        %v5496 = vmul.f32 1.0, %v5495
        %v5497 = vrcp.pop %v5372
        %v5498 = vmul.f32 1.0, %v5497
        %v5499 = vrcp.pop %v5373
        %v5500 = vmul.f32 1.0, %v5499
        %v5501 = vrcp.pop %v5374
        %v5502 = vmul.f32 1.0, %v5501
        %5567 = vrot.lane.b32.xlu0 %v3302, 3
        %v5568 = vpop.permute.xlu0 %5567
        %5569 = vrot.lane.b32.xlu0 %v3303, 3
        %v5570 = vpop.permute.xlu0 %5569
        %5571 = vrot.lane.b32.xlu0 %v3304, 3
        %v5572 = vpop.permute.xlu0 %5571
        %5573 = vrot.lane.b32.xlu0 %v3305, 3
        %v5574 = vpop.permute.xlu0 %5573
        %5575 = vrot.lane.b32.xlu0 %v3306, 3
        %v5576 = vpop.permute.xlu0 %5575
        %5577 = vrot.lane.b32.xlu0 %v3307, 3
        %v5578 = vpop.permute.xlu0 %5577
        %5579 = vrot.lane.b32.xlu0 %v3308, 3
        %v5580 = vpop.permute.xlu0 %5579
        %5581 = vrot.lane.b32.xlu0 %v3309, 3
        %v5582 = vpop.permute.xlu0 %5581
        %5583 = vrot.lane.b32.xlu0 %v3310, 3
        %v5584 = vpop.permute.xlu0 %5583
        %5585 = vrot.lane.b32.xlu0 %v3311, 3
        %v5586 = vpop.permute.xlu0 %5585
        %5587 = vrot.lane.b32.xlu0 %v3312, 3
        %v5588 = vpop.permute.xlu0 %5587
        %5589 = vrot.lane.b32.xlu0 %v3313, 3
        %v5590 = vpop.permute.xlu0 %5589
        %5591 = vrot.lane.b32.xlu0 %v3314, 3
        %v5592 = vpop.permute.xlu0 %5591
        %5593 = vrot.lane.b32.xlu0 %v3315, 3
        %v5594 = vpop.permute.xlu0 %5593
        %5595 = vrot.lane.b32.xlu0 %v3316, 3
        %v5596 = vpop.permute.xlu0 %5595
        %5597 = vrot.lane.b32.xlu0 %v3317, 3
        %v5598 = vpop.permute.xlu0 %5597
        %5599 = vrot.lane.b32.xlu0 %v3318, 3
        %v5600 = vpop.permute.xlu0 %5599
        %5601 = vrot.lane.b32.xlu0 %v3319, 3
        %v5602 = vpop.permute.xlu0 %5601
        %5603 = vrot.lane.b32.xlu0 %v3320, 3
        %v5604 = vpop.permute.xlu0 %5603
        %5605 = vrot.lane.b32.xlu0 %v3321, 3
        %v5606 = vpop.permute.xlu0 %5605
        %5607 = vrot.lane.b32.xlu0 %v3322, 3
        %v5608 = vpop.permute.xlu0 %5607
        %5609 = vrot.lane.b32.xlu0 %v3323, 3
        %v5610 = vpop.permute.xlu0 %5609
        %5611 = vrot.lane.b32.xlu0 %v3324, 3
        %v5612 = vpop.permute.xlu0 %5611
        %5613 = vrot.lane.b32.xlu0 %v3325, 3
        %v5614 = vpop.permute.xlu0 %5613
        %5615 = vrot.lane.b32.xlu0 %v3326, 3
        %v5616 = vpop.permute.xlu0 %5615
        %5617 = vrot.lane.b32.xlu0 %v3327, 3
        %v5618 = vpop.permute.xlu0 %5617
        %5619 = vrot.lane.b32.xlu0 %v3328, 3
        %v5620 = vpop.permute.xlu0 %5619
        %5621 = vrot.lane.b32.xlu0 %v3329, 3
        %v5622 = vpop.permute.xlu0 %5621
        %5623 = vrot.lane.b32.xlu0 %v3330, 3
        %v5624 = vpop.permute.xlu0 %5623
        %5625 = vrot.lane.b32.xlu0 %v3331, 3
        %v5626 = vpop.permute.xlu0 %5625
        %5627 = vrot.lane.b32.xlu0 %v3332, 3
        %v5628 = vpop.permute.xlu0 %5627
        %5629 = vrot.lane.b32.xlu0 %v3333, 3
        %v5630 = vpop.permute.xlu0 %5629
        %5631 = vrot.lane.b32.xlu0 %v3334, 3
        %v5632 = vpop.permute.xlu0 %5631
        %5633 = vrot.lane.b32.xlu0 %v3335, 3
        %v5634 = vpop.permute.xlu0 %5633
        %5635 = vrot.lane.b32.xlu0 %v3336, 3
        %v5636 = vpop.permute.xlu0 %5635
        %5637 = vrot.lane.b32.xlu0 %v3337, 3
        %v5638 = vpop.permute.xlu0 %5637
        %5639 = vrot.lane.b32.xlu0 %v3338, 3
        %v5640 = vpop.permute.xlu0 %5639
        %5641 = vrot.lane.b32.xlu0 %v3339, 3
        %v5642 = vpop.permute.xlu0 %5641
        %5643 = vrot.lane.b32.xlu0 %v3340, 3
        %v5644 = vpop.permute.xlu0 %5643
        %5645 = vrot.lane.b32.xlu0 %v3341, 3
        %v5646 = vpop.permute.xlu0 %5645
        %5647 = vrot.lane.b32.xlu0 %v3342, 3
        %v5648 = vpop.permute.xlu0 %5647
        %5649 = vrot.lane.b32.xlu0 %v3343, 3
        %v5650 = vpop.permute.xlu0 %5649
        %5651 = vrot.lane.b32.xlu0 %v3344, 3
        %v5652 = vpop.permute.xlu0 %5651
        %5653 = vrot.lane.b32.xlu0 %v3345, 3
        %v5654 = vpop.permute.xlu0 %5653
        %5655 = vrot.lane.b32.xlu0 %v3346, 3
        %v5656 = vpop.permute.xlu0 %5655
        %5657 = vrot.lane.b32.xlu0 %v3347, 3
        %v5658 = vpop.permute.xlu0 %5657
        %5659 = vrot.lane.b32.xlu0 %v3348, 3
        %v5660 = vpop.permute.xlu0 %5659
        %5661 = vrot.lane.b32.xlu0 %v3349, 3
        %v5662 = vpop.permute.xlu0 %5661
        %5663 = vrot.lane.b32.xlu0 %v3350, 3
        %v5664 = vpop.permute.xlu0 %5663
        %5665 = vrot.lane.b32.xlu0 %v3351, 3
        %v5666 = vpop.permute.xlu0 %5665
        %5667 = vrot.lane.b32.xlu0 %v3352, 3
        %v5668 = vpop.permute.xlu0 %5667
        %5669 = vrot.lane.b32.xlu0 %v3353, 3
        %v5670 = vpop.permute.xlu0 %5669
        %5671 = vrot.lane.b32.xlu0 %v3354, 3
        %v5672 = vpop.permute.xlu0 %5671
        %5673 = vrot.lane.b32.xlu0 %v3355, 3
        %v5674 = vpop.permute.xlu0 %5673
        %5675 = vrot.lane.b32.xlu0 %v3356, 3
        %v5676 = vpop.permute.xlu0 %5675
        %5677 = vrot.lane.b32.xlu0 %v3357, 3
        %v5678 = vpop.permute.xlu0 %5677
        %5679 = vrot.lane.b32.xlu0 %v3358, 3
        %v5680 = vpop.permute.xlu0 %5679
        %5681 = vrot.lane.b32.xlu0 %v3359, 3
        %v5682 = vpop.permute.xlu0 %5681
        %5683 = vrot.lane.b32.xlu0 %v3360, 3
        %v5684 = vpop.permute.xlu0 %5683
        %5685 = vrot.lane.b32.xlu0 %v3361, 3
        %v5686 = vpop.permute.xlu0 %5685
        %5687 = vrot.lane.b32.xlu0 %v3362, 3
        %v5688 = vpop.permute.xlu0 %5687
        %5689 = vrot.lane.b32.xlu0 %v3363, 3
        %v5690 = vpop.permute.xlu0 %5689
        %5691 = vrot.lane.b32.xlu0 %v3364, 3
        %v5692 = vpop.permute.xlu0 %5691
        %5693 = vrot.lane.b32.xlu0 %v3365, 3
        %v5694 = vpop.permute.xlu0 %5693
        %vm5759 = vcmask 23552
        %v5760 = vsel %vm5759, %v5376, %v5568
        %v5761 = vsel %vm5759, %v5378, %v5570
        %v5762 = vsel %vm5759, %v5380, %v5572
        %v5763 = vsel %vm5759, %v5382, %v5574
        %v5764 = vsel %vm5759, %v5384, %v5576
        %v5765 = vsel %vm5759, %v5386, %v5578
        %v5766 = vsel %vm5759, %v5388, %v5580
        %v5767 = vsel %vm5759, %v5390, %v5582
        %v5768 = vsel %vm5759, %v5392, %v5584
        %v5769 = vsel %vm5759, %v5394, %v5586
        %v5770 = vsel %vm5759, %v5396, %v5588
        %v5771 = vsel %vm5759, %v5398, %v5590
        %v5772 = vsel %vm5759, %v5400, %v5592
        %v5773 = vsel %vm5759, %v5402, %v5594
        %v5774 = vsel %vm5759, %v5404, %v5596
        %v5775 = vsel %vm5759, %v5406, %v5598
        %v5776 = vsel %vm5759, %v5408, %v5600
        %v5777 = vsel %vm5759, %v5410, %v5602
        %v5778 = vsel %vm5759, %v5412, %v5604
        %v5779 = vsel %vm5759, %v5414, %v5606
        %v5780 = vsel %vm5759, %v5416, %v5608
        %v5781 = vsel %vm5759, %v5418, %v5610
        %v5782 = vsel %vm5759, %v5420, %v5612
        %v5783 = vsel %vm5759, %v5422, %v5614
        %v5784 = vsel %vm5759, %v5424, %v5616
        %v5785 = vsel %vm5759, %v5426, %v5618
        %v5786 = vsel %vm5759, %v5428, %v5620
        %v5787 = vsel %vm5759, %v5430, %v5622
        %v5788 = vsel %vm5759, %v5432, %v5624
        %v5789 = vsel %vm5759, %v5434, %v5626
        %v5790 = vsel %vm5759, %v5436, %v5628
        %v5791 = vsel %vm5759, %v5438, %v5630
        %v5792 = vsel %vm5759, %v5440, %v5632
        %v5793 = vsel %vm5759, %v5442, %v5634
        %v5794 = vsel %vm5759, %v5444, %v5636
        %v5795 = vsel %vm5759, %v5446, %v5638
        %v5796 = vsel %vm5759, %v5448, %v5640
        %v5797 = vsel %vm5759, %v5450, %v5642
        %v5798 = vsel %vm5759, %v5452, %v5644
        %v5799 = vsel %vm5759, %v5454, %v5646
        %v5800 = vsel %vm5759, %v5456, %v5648
        %v5801 = vsel %vm5759, %v5458, %v5650
        %v5802 = vsel %vm5759, %v5460, %v5652
        %v5803 = vsel %vm5759, %v5462, %v5654
        %v5804 = vsel %vm5759, %v5464, %v5656
        %v5805 = vsel %vm5759, %v5466, %v5658
        %v5806 = vsel %vm5759, %v5468, %v5660
        %v5807 = vsel %vm5759, %v5470, %v5662
        %v5808 = vsel %vm5759, %v5472, %v5664
        %v5809 = vsel %vm5759, %v5474, %v5666
        %v5810 = vsel %vm5759, %v5476, %v5668
        %v5811 = vsel %vm5759, %v5478, %v5670
        %v5812 = vsel %vm5759, %v5480, %v5672
        %v5813 = vsel %vm5759, %v5482, %v5674
        %v5814 = vsel %vm5759, %v5484, %v5676
        %v5815 = vsel %vm5759, %v5486, %v5678
        %v5816 = vsel %vm5759, %v5488, %v5680
        %v5817 = vsel %vm5759, %v5490, %v5682
        %v5818 = vsel %vm5759, %v5492, %v5684
        %v5819 = vsel %vm5759, %v5494, %v5686
        %v5820 = vsel %vm5759, %v5496, %v5688
        %v5821 = vsel %vm5759, %v5498, %v5690
        %v5822 = vsel %vm5759, %v5500, %v5692
        %v5823 = vsel %vm5759, %v5502, %v5694
        %vm5824 = vcmask 31744
        %5825 = vst.msk [vmem:[%s617] sm:$0xff] %vm5824, %v5760
        %5826 = vst.msk [vmem:[%s617 + $0x8] sm:$0xff] %vm5824, %v5761
        %5827 = vst.msk [vmem:[%s617 + $0x10] sm:$0xff] %vm5824, %v5762
        %5828 = vst.msk [vmem:[%s617 + $0x18] sm:$0xff] %vm5824, %v5763
        %5829 = vst.msk [vmem:[%s617 + $0x20] sm:$0xff] %vm5824, %v5764
        %5830 = vst.msk [vmem:[%s617 + $0x28] sm:$0xff] %vm5824, %v5765
        %5831 = vst.msk [vmem:[%s617 + $0x30] sm:$0xff] %vm5824, %v5766
        %5832 = vst.msk [vmem:[%s617 + $0x38] sm:$0xff] %vm5824, %v5767
        %5833 = vst.msk [vmem:[%s617 + $0x40] sm:$0xff] %vm5824, %v5768
        %5834 = vst.msk [vmem:[%s617 + $0x48] sm:$0xff] %vm5824, %v5769
        %5835 = vst.msk [vmem:[%s617 + $0x50] sm:$0xff] %vm5824, %v5770
        %5836 = vst.msk [vmem:[%s617 + $0x58] sm:$0xff] %vm5824, %v5771
        %5837 = vst.msk [vmem:[%s617 + $0x60] sm:$0xff] %vm5824, %v5772
        %5838 = vst.msk [vmem:[%s617 + $0x68] sm:$0xff] %vm5824, %v5773
        %5839 = vst.msk [vmem:[%s617 + $0x70] sm:$0xff] %vm5824, %v5774
        %5840 = vst.msk [vmem:[%s617 + $0x78] sm:$0xff] %vm5824, %v5775
        %5841 = vst.msk [vmem:[%s617 + $0x80] sm:$0xff] %vm5824, %v5776
        %5842 = vst.msk [vmem:[%s617 + $0x88] sm:$0xff] %vm5824, %v5777
        %5843 = vst.msk [vmem:[%s617 + $0x90] sm:$0xff] %vm5824, %v5778
        %5844 = vst.msk [vmem:[%s617 + $0x98] sm:$0xff] %vm5824, %v5779
        %5845 = vst.msk [vmem:[%s617 + $0xa0] sm:$0xff] %vm5824, %v5780
        %5846 = vst.msk [vmem:[%s617 + $0xa8] sm:$0xff] %vm5824, %v5781
        %5847 = vst.msk [vmem:[%s617 + $0xb0] sm:$0xff] %vm5824, %v5782
        %5848 = vst.msk [vmem:[%s617 + $0xb8] sm:$0xff] %vm5824, %v5783
        %5849 = vst.msk [vmem:[%s617 + $0xc0] sm:$0xff] %vm5824, %v5784
        %5850 = vst.msk [vmem:[%s617 + $0xc8] sm:$0xff] %vm5824, %v5785
        %5851 = vst.msk [vmem:[%s617 + $0xd0] sm:$0xff] %vm5824, %v5786
        %5852 = vst.msk [vmem:[%s617 + $0xd8] sm:$0xff] %vm5824, %v5787
        %5853 = vst.msk [vmem:[%s617 + $0xe0] sm:$0xff] %vm5824, %v5788
        %5854 = vst.msk [vmem:[%s617 + $0xe8] sm:$0xff] %vm5824, %v5789
        %5855 = vst.msk [vmem:[%s617 + $0xf0] sm:$0xff] %vm5824, %v5790
        %5856 = vst.msk [vmem:[%s617 + $0xf8] sm:$0xff] %vm5824, %v5791
        %5857 = vst.msk [vmem:[%s617 + $0x100] sm:$0xff] %vm5824, %v5792
        %5858 = vst.msk [vmem:[%s617 + $0x108] sm:$0xff] %vm5824, %v5793
        %5859 = vst.msk [vmem:[%s617 + $0x110] sm:$0xff] %vm5824, %v5794
        %5860 = vst.msk [vmem:[%s617 + $0x118] sm:$0xff] %vm5824, %v5795
        %5861 = vst.msk [vmem:[%s617 + $0x120] sm:$0xff] %vm5824, %v5796
        %5862 = vst.msk [vmem:[%s617 + $0x128] sm:$0xff] %vm5824, %v5797
        %5863 = vst.msk [vmem:[%s617 + $0x130] sm:$0xff] %vm5824, %v5798
        %5864 = vst.msk [vmem:[%s617 + $0x138] sm:$0xff] %vm5824, %v5799
        %5865 = vst.msk [vmem:[%s617 + $0x140] sm:$0xff] %vm5824, %v5800
        %5866 = vst.msk [vmem:[%s617 + $0x148] sm:$0xff] %vm5824, %v5801
        %5867 = vst.msk [vmem:[%s617 + $0x150] sm:$0xff] %vm5824, %v5802
        %5868 = vst.msk [vmem:[%s617 + $0x158] sm:$0xff] %vm5824, %v5803
        %5869 = vst.msk [vmem:[%s617 + $0x160] sm:$0xff] %vm5824, %v5804
        %5870 = vst.msk [vmem:[%s617 + $0x168] sm:$0xff] %vm5824, %v5805
        %5871 = vst.msk [vmem:[%s617 + $0x170] sm:$0xff] %vm5824, %v5806
        %5872 = vst.msk [vmem:[%s617 + $0x178] sm:$0xff] %vm5824, %v5807
        %5873 = vst.msk [vmem:[%s617 + $0x180] sm:$0xff] %vm5824, %v5808
        %5874 = vst.msk [vmem:[%s617 + $0x188] sm:$0xff] %vm5824, %v5809
        %5875 = vst.msk [vmem:[%s617 + $0x190] sm:$0xff] %vm5824, %v5810
        %5876 = vst.msk [vmem:[%s617 + $0x198] sm:$0xff] %vm5824, %v5811
        %5877 = vst.msk [vmem:[%s617 + $0x1a0] sm:$0xff] %vm5824, %v5812
        %5878 = vst.msk [vmem:[%s617 + $0x1a8] sm:$0xff] %vm5824, %v5813
        %5879 = vst.msk [vmem:[%s617 + $0x1b0] sm:$0xff] %vm5824, %v5814
        %5880 = vst.msk [vmem:[%s617 + $0x1b8] sm:$0xff] %vm5824, %v5815
        %5881 = vst.msk [vmem:[%s617 + $0x1c0] sm:$0xff] %vm5824, %v5816
        %5882 = vst.msk [vmem:[%s617 + $0x1c8] sm:$0xff] %vm5824, %v5817
        %5883 = vst.msk [vmem:[%s617 + $0x1d0] sm:$0xff] %vm5824, %v5818
        %5884 = vst.msk [vmem:[%s617 + $0x1d8] sm:$0xff] %vm5824, %v5819
        %5885 = vst.msk [vmem:[%s617 + $0x1e0] sm:$0xff] %vm5824, %v5820
        %5886 = vst.msk [vmem:[%s617 + $0x1e8] sm:$0xff] %vm5824, %v5821
        %5887 = vst.msk [vmem:[%s617 + $0x1f0] sm:$0xff] %vm5824, %v5822
        %5888 = vst.msk [vmem:[%s617 + $0x1f8] sm:$0xff] %vm5824, %v5823
        %s5889 = smul.u32 64, %s35
        %p5890 = scmp.lt.s32.totalorder %s5889, 127
        %s5891 = scalar_select %p5890, %s5889, 127
        %s5892 = smul.addr %s5891, 8
        %s5893 = scalar_lea.vmem %s16, %s5892
        // Predicated region
        $region109: #{tpu_custom_call.1} parent=83 // pred_check
          %p5894 = pneg %p394
        $region110: #{tpu_custom_call.1} parent=83 // pred_check_branch
          %5896 = sbr.rel (%p5894) target = $region112
        $region111: #{tpu_custom_call.1} parent=83 // pred_region
          %s5897 = smul.u32 64, %s35
        $region112: #{tpu_custom_call.1} parent=83 // pred_fallthru
          _
      $region84: #{tpu_custom_call.1} parent=5 // pred_fallthru
        _
      %p5898 = scmp.le.s32.totalorder 2, %s30
      // Predicated region
      $region113: #{tpu_custom_call.1} parent=5 // pred_check
        %p5899 = pneg %p5898
      $region114: #{tpu_custom_call.1} parent=5 // pred_check_branch
        %5901 = sbr.rel (%p5899) target = $region116
      $region115: #{tpu_custom_call.1} parent=5 // pred_region
        %s5902 = ssub.s32 %s30, 2
        // Predicated region
        $region117: #{tpu_custom_call.1} parent=115 // pred_check
          %p5903 = pneg %p400
        $region118: #{tpu_custom_call.1} parent=115 // pred_check_branch
          %5905 = sbr.rel (%p5903) target = $region120
        $region119: #{tpu_custom_call.1} parent=115 // pred_region
          %s5906 = smul.u32 64, %s36
          %p5907 = scmp.lt.s32.totalorder %s5906, 127
          %s5908 = scalar_select %p5907, %s5906, 127
          %s5909 = smul.addr %s5908, 8
          %s5910 = scalar_lea.vmem %s16, %s5909
        $region120: #{tpu_custom_call.1} parent=115 // pred_fallthru
          _
      $region116: #{tpu_custom_call.1} parent=5 // pred_fallthru
        _
    $region6: #{tpu_custom_call.1} parent=1 // loop_footer
      %s34 = sadd.s32 1, %s30
    $region7: #{tpu_custom_call.1} parent=1 // loop_footer_branch
      %29 = sbr.rel target = $region3
    $region8: #{tpu_custom_call.1} parent=1 // loop_exit
      _
    %5911 = vsyncpa [#allocation4], 1
    %s5912 = scalar_lea.sflag [#allocation4], 1
    %5913 = vsyncpa %s5912, 1
    %5914 = vsyncpa [#allocation6], 1
    %5915 = vsyncpa [#allocation9], 1
    %5916 = vsyncpa [#allocation12], 1

</llo_original>
